<compile_context>
chip_gen: v5e
topology: v5e:2x2
jax: 0.10.0
libtpu: 0.0.40
codegen_flags: <defaults>
</compile_context>

<pallas_src>
import functools

import jax
import jax.numpy as jnp
from jax import lax
from jax.experimental import pallas as pl
from jax.experimental.pallas import tpu as pltpu

BN_EPS = 1e-5
# Safe on v5e (128 MiB phys, 16 MiB default scoped), v6e (128 MiB) and
# v7x (64 MiB phys): raise v5e's default, stay well under v7x physical.
VMEM_LIMIT_BYTES = 32 * 1024 * 1024


# ----------------------------------------------------------------------------
# Helpers
# ----------------------------------------------------------------------------
def fold_bn(conv_bias, bn):
    """Fold inference-mode BN into per-output-channel (scale, bias) in f32."""
    gamma, beta, mean, var = bn
    scale = gamma / jnp.sqrt(var + BN_EPS)
    bias = (conv_bias - mean) * scale + beta
    return scale, bias


def _pick_row_tile(m, target=1024):
    """Largest row tile <= target that divides M (multiple of 8), else M."""
    if m <= target:
        return m
    for tm in (2048, 1024, 512, 256, 128, 64, 32, 16, 8):
        if tm <= target and m % tm == 0:
            return tm
    return m


def _pick_h_tile(h, w, target_rows=512):
    """H row tile: divides H, ~target output rows per step, >=2 pipeline steps."""
    th = h
    for cand in range(h, 0, -1):
        if h % cand == 0 and cand * w <= target_rows:
            th = cand
            break
    if th == h and h % 2 == 0 and (h // 2) * w >= 64:
        th = h // 2
    return th


# ----------------------------------------------------------------------------
# Pallas kernels
# ----------------------------------------------------------------------------
def _fused_conv1x1_kernel(n_branches, *refs):
    """One row tile of x (bf16), N branches of 1x1 conv (BN folded) + bias + ReLU."""
    x_ref = refs[0]
    w_refs = refs[1:1 + n_branches]
    b_refs = refs[1 + n_branches:1 + 2 * n_branches]
    o_refs = refs[1 + 2 * n_branches:]
    x = x_ref[...]                                        # single read of x tile
    for w_ref, b_ref, o_ref in zip(w_refs, b_refs, o_refs):
        y = jnp.dot(x, w_ref[...], preferred_element_type=jnp.float32)
        o_ref[...] = jnp.maximum(y + b_ref[...], 0.0).astype(o_ref.dtype)


def _conv3x3_kernel(xp_ref, w_ref, b_ref, o_ref):
    """3x3/s1/p1 conv for one H row tile as ONE wide-K matmul.

    xp_ref: (1, H+2, W+2, Cin) zero-padded image (bf16), resident per batch
    w_ref : (9*Cin, Cout)      BN-scale-folded bf16 weights, rows (dy, dx, ci)
    b_ref : (1, Cout)          f32 bias
    o_ref : (1, TH, W, Cout)
    """
    th, w, cout = o_ref.shape[1], o_ref.shape[2], o_ref.shape[3]
    cin = xp_ref.shape[3]
    r0 = pl.multiple_of(pl.program_id(1) * th, th)
    # Halo row window for this tile; upcast once so tap slices/concat stay f32.
    xw = xp_ref[0, pl.ds(r0, th + 2), :, :].astype(jnp.float32)   # (TH+2, W+2, Cin)
    taps = []
    for dy in range(3):
        for dx in range(3):
            taps.append(xw[dy:dy + th, dx:dx + w, :].reshape(th * w, cin))
    tap = jnp.concatenate(taps, axis=1).astype(jnp.bfloat16)      # (TH*W, 9*Cin)
    y = jnp.dot(tap, w_ref[...], preferred_element_type=jnp.float32)
    y = jnp.maximum(y + b_ref[...], 0.0)
    o_ref[0] = y.reshape(th, w, cout).astype(o_ref.dtype)


def _pool3x3_conv1x1_kernel(xp_ref, w_ref, b_ref, o_ref):
    """Fused maxpool3x3/s1/p1 + 1x1 conv (BN folded) + bias + ReLU, one H row tile.

    xp_ref: (1, H+2, W+2, Cin) image padded with -inf (bf16)
    w_ref : (Cin, Cout) bf16
    b_ref : (1, Cout)   f32
    o_ref : (1, TH, W, Cout)
    """
    th, w, cout = o_ref.shape[1], o_ref.shape[2], o_ref.shape[3]
    cin = xp_ref.shape[3]
    r0 = pl.multiple_of(pl.program_id(1) * th, th)
    xw = xp_ref[0, pl.ds(r0, th + 2), :, :].astype(jnp.float32)   # (TH+2, W+2, Cin)
    # Separable 3x3 max: along W, then along H (pool stays on-chip).
    mw = jnp.maximum(jnp.maximum(xw[:, 0:w, :], xw[:, 1:w + 1, :]),
                     xw[:, 2:w + 2, :])                           # (TH+2, W, Cin)
    pooled = jnp.maximum(jnp.maximum(mw[0:th], mw[1:th + 1]), mw[2:th + 2])
    y = jnp.dot(pooled.reshape(th * w, cin).astype(jnp.bfloat16), w_ref[...],
                preferred_element_type=jnp.float32)
    o_ref[0] = jnp.maximum(y + b_ref[...], 0.0).reshape(th, w, cout).astype(o_ref.dtype)


# ----------------------------------------------------------------------------
# Pallas wrappers
# ----------------------------------------------------------------------------
def fused_conv1x1_bn_relu(x_nhwc, branches, out_dtypes):
    """Several 1x1 conv+BN+ReLU branches sharing one read of x, one launch.

    x_nhwc: (N,H,W,Cin) bf16.  Returns one (N,H,W,Cout_i) array per branch,
    each emitted as its own pallas_call output (no post-hoc channel slicing).
    """
    n, h, w, cin = x_nhwc.shape
    m = n * h * w
    x2d = x_nhwc.reshape(m, cin)
    wmats, biases, couts = [], [], []
    for conv, bn in branches:
        w_oihw, b = conv
        scale, bias = fold_bn(b, bn)                               # fold in f32
        wmats.append((w_oihw[:, :, 0, 0].T * scale[None, :]).astype(jnp.bfloat16))
        biases.append(bias.reshape(1, -1).astype(jnp.float32))
        couts.append(int(w_oihw.shape[0]))
    nb = len(branches)
    tm = _pick_row_tile(m)
    grid = (m // tm,)

    in_specs = ([pl.BlockSpec((tm, cin), lambda i: (i, 0))]
                + [pl.BlockSpec((cin, c), lambda i: (0, 0)) for c in couts]   # resident
                + [pl.BlockSpec((1, c), lambda i: (0, 0)) for c in couts])    # resident
    out_specs = [pl.BlockSpec((tm, c), lambda i: (i, 0)) for c in couts]
    out_shape = [jax.ShapeDtypeStruct((m, c), dt) for c, dt in zip(couts, out_dtypes)]

    flops = 2 * m * cin * sum(couts)
    bytes_accessed = (2 * (m * cin + cin * sum(couts)) + 4 * sum(couts)
                      + sum(m * c * jnp.dtype(dt).itemsize
                            for c, dt in zip(couts, out_dtypes)))
    outs = pl.pallas_call(
        functools.partial(_fused_conv1x1_kernel, nb),
        out_shape=out_shape,
        grid=grid,
        in_specs=in_specs,
        out_specs=out_specs,
        compiler_params=pltpu.CompilerParams(
            dimension_semantics=("parallel",),
            vmem_limit_bytes=VMEM_LIMIT_BYTES),
        cost_estimate=pl.CostEstimate(flops=int(flops), transcendentals=0,
                                      bytes_accessed=int(bytes_accessed)),
    )(x2d, *wmats, *biases)
    return [o.reshape(n, h, w, c) for o, c in zip(outs, couts)]


def conv3x3_bn_relu(x_nhwc, conv, bn, out_dtype=jnp.float32):
    """3x3/s1/p1 conv + BN + ReLU; grid over (N, H row tiles)."""
    w_oihw, b = conv
    n, h, w, cin = x_nhwc.shape
    cout = int(w_oihw.shape[0])
    scale, bias = fold_bn(b, bn)
    # (O,I,3,3) -> (3,3,I,O) -> (9*I, O); BN scale folded into weight columns.
    wmat = (jnp.transpose(w_oihw, (2, 3, 1, 0)).reshape(9 * cin, cout)
            * scale[None, :]).astype(jnp.bfloat16)
    xp = jnp.pad(x_nhwc, ((0, 0), (1, 1), (1, 1), (0, 0)))
    th = _pick_h_tile(h, w)
    grid = (n, h // th)

    flops = 2 * n * h * w * 9 * cin * cout
    bytes_accessed = (2 * (xp.size + wmat.size) + 4 * cout
                      + n * h * w * cout * jnp.dtype(out_dtype).itemsize)
    return pl.pallas_call(
        _conv3x3_kernel,
        out_shape=jax.ShapeDtypeStruct((n, h, w, cout), out_dtype),
        grid=grid,
        in_specs=[
            # Padded image resident across the inner H-tile axis (fetched once per i).
            pl.BlockSpec((1, h + 2, w + 2, cin), lambda i, j: (i, 0, 0, 0)),
            pl.BlockSpec((9 * cin, cout), lambda i, j: (0, 0)),
            pl.BlockSpec((1, cout), lambda i, j: (0, 0)),
        ],
        out_specs=pl.BlockSpec((1, th, w, cout), lambda i, j: (i, j, 0, 0)),
        compiler_params=pltpu.CompilerParams(
            dimension_semantics=("parallel", "arbitrary"),
            vmem_limit_bytes=VMEM_LIMIT_BYTES),
        cost_estimate=pl.CostEstimate(flops=int(flops), transcendentals=0,
                                      bytes_accessed=int(bytes_accessed)),
    )(xp, wmat, bias.reshape(1, cout).astype(jnp.float32))


def maxpool3x3_conv1x1_bn_relu(x_nhwc, conv, bn, out_dtype=jnp.float32):
    """Branch 4: maxpool3x3(s1,p1) fused with 1x1 conv + BN + ReLU."""
    w_oihw, b = conv
    n, h, w, cin = x_nhwc.shape
    cout = int(w_oihw.shape[0])
    scale, bias = fold_bn(b, bn)
    wmat = (w_oihw[:, :, 0, 0].T * scale[None, :]).astype(jnp.bfloat16)
    xp = jnp.pad(x_nhwc, ((0, 0), (1, 1), (1, 1), (0, 0)),
                 constant_values=-jnp.inf)
    th = _pick_h_tile(h, w)
    grid = (n, h // th)

    flops = n * h * w * (8 * cin + 2 * cin * cout)
    bytes_accessed = (2 * (xp.size + wmat.size) + 4 * cout
                      + n * h * w * cout * jnp.dtype(out_dtype).itemsize)
    return pl.pallas_call(
        _pool3x3_conv1x1_kernel,
        out_shape=jax.ShapeDtypeStruct((n, h, w, cout), out_dtype),
        grid=grid,
        in_specs=[
            pl.BlockSpec((1, h + 2, w + 2, cin), lambda i, j: (i, 0, 0, 0)),
            pl.BlockSpec((cin, cout), lambda i, j: (0, 0)),
            pl.BlockSpec((1, cout), lambda i, j: (0, 0)),
        ],
        out_specs=pl.BlockSpec((1, th, w, cout), lambda i, j: (i, j, 0, 0)),
        compiler_params=pltpu.CompilerParams(
            dimension_semantics=("parallel", "arbitrary"),
            vmem_limit_bytes=VMEM_LIMIT_BYTES),
        cost_estimate=pl.CostEstimate(flops=int(flops), transcendentals=0,
                                      bytes_accessed=int(bytes_accessed)),
    )(xp, wmat, bias.reshape(1, cout).astype(jnp.float32))


# ----------------------------------------------------------------------------
# Inception_2 forward
# ----------------------------------------------------------------------------
def inception_2_forward(x_nchw, p):
    x = jnp.transpose(x_nchw, (0, 2, 3, 1)).astype(jnp.bfloat16)   # NCHW -> NHWC, bf16

    # Fused 1x1 stage over x: branch1 (final, f32), branch2/3 reduces (bf16 feed
    # the downstream 3x3 kernels directly — no extra cast pass).
    y1, t2, t3 = fused_conv1x1_bn_relu(
        x,
        [(p["b1_c1"], p["b1_n1"]),
         (p["b2_c1"], p["b2_n1"]),
         (p["b3_c1"], p["b3_n1"])],
        out_dtypes=(jnp.float32, jnp.bfloat16, jnp.bfloat16))

    # branch 2: -> 3x3
    y2 = conv3x3_bn_relu(t2, p["b2_c2"], p["b2_n2"], out_dtype=jnp.float32)
    # branch 3: -> 3x3 -> 3x3
    t3 = conv3x3_bn_relu(t3, p["b3_c2"], p["b3_n2"], out_dtype=jnp.bfloat16)
    y3 = conv3x3_bn_relu(t3, p["b3_c3"], p["b3_n3"], out_dtype=jnp.float32)
    # branch 4: maxpool3x3 + 1x1 fused in one kernel
    y4 = maxpool3x3_conv1x1_bn_relu(x, p["b4_c1"], p["b4_n1"], out_dtype=jnp.float32)

    # TODO(synk): write the four branches into channel-offset blocks of one
    # preallocated NHWC buffer (input_output_aliases) to avoid this concat pass.
    y = jnp.concatenate([y1, y2, y3, y4], axis=-1)                  # channel concat
    return jnp.transpose(y, (0, 3, 1, 2))                           # NHWC -> NCHW


# ----------------------------------------------------------------------------
# Pure-JAX f32 reference (for correctness check)
# ----------------------------------------------------------------------------
def _ref_conv_bn_relu(x, conv, bn, pad):
    w_oihw, b = conv
    w_hwio = jnp.transpose(w_oihw, (2, 3, 1, 0))
    y = lax.conv_general_dilated(x, w_hwio, (1, 1), [(pad, pad), (pad, pad)],
                                 dimension_numbers=("NHWC", "HWIO", "NHWC"),
                                 precision=lax.Precision.HIGHEST)
    y = y + b
    gamma, beta, mean, var = bn
    y = (y - mean) / jnp.sqrt(var + BN_EPS) * gamma + beta
    return jnp.maximum(y, 0.0)


def _ref_maxpool(x):
    return lax.reduce_window(x, -jnp.inf, lax.max, (1, 3, 3, 1), (1, 1, 1, 1),
                             [(0, 0), (1, 1), (1, 1), (0, 0)])


def inception_2_reference(x_nchw, p):
    x = jnp.transpose(x_nchw, (0, 2, 3, 1))
    y1 = _ref_conv_bn_relu(x, p["b1_c1"], p["b1_n1"], 0)
    t = _ref_conv_bn_relu(x, p["b2_c1"], p["b2_n1"], 0)
    y2 = _ref_conv_bn_relu(t, p["b2_c2"], p["b2_n2"], 1)
    t = _ref_conv_bn_relu(x, p["b3_c1"], p["b3_n1"], 0)
    t = _ref_conv_bn_relu(t, p["b3_c2"], p["b3_n2"], 1)
    y3 = _ref_conv_bn_relu(t, p["b3_c3"], p["b3_n3"], 1)
    y4 = _ref_conv_bn_relu(_ref_maxpool(x), p["b4_c1"], p["b4_n1"], 0)
    y = jnp.concatenate([y1, y2, y3, y4], axis=-1)
    return jnp.transpose(y, (0, 3, 1, 2))


# ----------------------------------------------------------------------------
# Deterministic parameter construction
# ----------------------------------------------------------------------------
def _init_conv(key, cin, cout, k):
    kw, kb = jax.random.split(key)
    fan_in = cin * k * k
    w = jax.random.normal(kw, (cout, cin, k, k), jnp.float32) / jnp.sqrt(fan_in)
    b = 0.1 * jax.random.normal(kb, (cout,), jnp.float32)
    return (w, b)


def _init_bn(key, c):
    k1, k2, k3, k4 = jax.random.split(key, 4)
    gamma = 1.0 + 0.1 * jax.random.normal(k1, (c,), jnp.float32)
    beta = 0.1 * jax.random.normal(k2, (c,), jnp.float32)
    mean = 0.1 * jax.random.normal(k3, (c,), jnp.float32)
    var = 1.0 + 0.1 * jnp.abs(jax.random.normal(k4, (c,), jnp.float32))
    return (gamma, beta, mean, var)


def make_params(key, in_planes, n1x1, n3x3red, n3x3, n5x5red, n5x5, pool_planes):
    keys = jax.random.split(key, 14)
    return {
        "b1_c1": _init_conv(keys[0], in_planes, n1x1, 1), "b1_n1": _init_bn(keys[1], n1x1),
        "b2_c1": _init_conv(keys[2], in_planes, n3x3red, 1), "b2_n1": _init_bn(keys[3], n3x3red),
        "b2_c2": _init_conv(keys[4], n3x3red, n3x3, 3), "b2_n2": _init_bn(keys[5], n3x3),
        "b3_c1": _init_conv(keys[6], in_planes, n5x5red, 1), "b3_n1": _init_bn(keys[7], n5x5red),
        "b3_c2": _init_conv(keys[8], n5x5red, n5x5, 3), "b3_n2": _init_bn(keys[9], n5x5),
        "b3_c3": _init_conv(keys[10], n5x5, n5x5, 3), "b3_n3": _init_bn(keys[11], n5x5),
        "b4_c1": _init_conv(keys[12], in_planes, pool_planes, 1), "b4_n1": _init_bn(keys[13], pool_planes),
    }


if __name__ == "__main__":
    in_planes, n1x1, n3x3red, n3x3, n5x5red, n5x5, pool_planes = 8, 8, 8, 16, 4, 8, 8
    N, H, W = 2, 16, 16

    root = jax.random.PRNGKey(0)
    kx, kp = jax.random.split(root)
    x = jax.random.normal(kx, (N, in_planes, H, W), jnp.float32)
    params = make_params(kp, in_planes, n1x1, n3x3red, n3x3, n5x5red, n5x5, pool_planes)

    fwd = jax.jit(inception_2_forward)
    out = jax.block_until_ready(fwd(x, params))

    expected_c = n1x1 + n3x3 + n5x5 + pool_planes
    assert out.shape == (N, expected_c, H, W), out.shape
    assert out.dtype == jnp.float32, out.dtype

    # f32 reference; tolerance sized for bf16 operands / f32 accumulation.
    ref = jax.block_until_ready(inception_2_reference(x, params))
    assert jnp.allclose(out, ref, rtol=5e-2, atol=5e-2), \
        float(jnp.max(jnp.abs(out - ref)))

    print("KERNEL_OK")
</pallas_src>

<mosaic_0001>
module attributes {stable_mosaic.version = 11 : i64} {
  func.func @_pool3x3_conv1x1_kernel(%arg0: i32, %arg1: i32, %arg2: memref<1x18x18x8xbf16, #tpu.memory_space<vmem>>, %arg3: memref<8x8xbf16, #tpu.memory_space<vmem>>, %arg4: memref<1x8xf32, #tpu.memory_space<vmem>>, %arg5: memref<1x8x16x8xf32, #tpu.memory_space<vmem>>) attributes {dimension_semantics = [#tpu.dimension_semantics<parallel>, #tpu.dimension_semantics<arbitrary>], iteration_bounds = array<i64: 2, 2>, scalar_prefetch = 0 : i64, scratch_operands = 0 : i64, tpu.core_type = #tpu.core_type<tc>, window_params = [{transform_indices = @transform_0, window_bounds = array<i64: 1, 18, 18, 8>}, {pipeline_mode = #tpu.pipeline_mode<synchronous>, transform_indices = @transform_1, window_bounds = array<i64: 8, 8>}, {pipeline_mode = #tpu.pipeline_mode<synchronous>, transform_indices = @transform_2, window_bounds = array<i64: 1, 8>}, {transform_indices = @transform_3, window_bounds = array<i64: 1, 8, 16, 8>}]} {
    %c8_i32 = arith.constant 8 : i32
    %0 = arith.muli %arg1, %c8_i32 : i32
    %1 = tpu.assume_multiple %0, 8 : i32
    %c0 = arith.constant 0 : index
    %2 = arith.index_cast %1 : i32 to index
    %c0_0 = arith.constant 0 : index
    %c0_1 = arith.constant 0 : index
    %3 = vector.load %arg2[%c0, %2, %c0_0, %c0_1] : memref<1x18x18x8xbf16, #tpu.memory_space<vmem>>, vector<1x10x18x8xbf16>
    %4 = vector.shape_cast %3 : vector<1x10x18x8xbf16> to vector<10x18x8xbf16>
    %5 = arith.extf %4 : vector<10x18x8xbf16> to vector<10x18x8xf32>
    %6 = vector.extract_strided_slice %5 {offsets = [0, 0, 0], sizes = [10, 16, 8], strides = [1, 1, 1]} : vector<10x18x8xf32> to vector<10x16x8xf32>
    %7 = vector.extract_strided_slice %5 {offsets = [0, 1, 0], sizes = [10, 16, 8], strides = [1, 1, 1]} : vector<10x18x8xf32> to vector<10x16x8xf32>
    %8 = arith.maximumf %6, %7 : vector<10x16x8xf32>
    %9 = vector.extract_strided_slice %5 {offsets = [0, 2, 0], sizes = [10, 16, 8], strides = [1, 1, 1]} : vector<10x18x8xf32> to vector<10x16x8xf32>
    %10 = arith.maximumf %8, %9 : vector<10x16x8xf32>
    %11 = vector.extract_strided_slice %10 {offsets = [0, 0, 0], sizes = [8, 16, 8], strides = [1, 1, 1]} : vector<10x16x8xf32> to vector<8x16x8xf32>
    %12 = vector.extract_strided_slice %10 {offsets = [1, 0, 0], sizes = [8, 16, 8], strides = [1, 1, 1]} : vector<10x16x8xf32> to vector<8x16x8xf32>
    %13 = arith.maximumf %11, %12 : vector<8x16x8xf32>
    %14 = vector.extract_strided_slice %10 {offsets = [2, 0, 0], sizes = [8, 16, 8], strides = [1, 1, 1]} : vector<10x16x8xf32> to vector<8x16x8xf32>
    %15 = arith.maximumf %13, %14 : vector<8x16x8xf32>
    %16 = vector.shape_cast %15 : vector<8x16x8xf32> to vector<128x8xf32>
    %17 = arith.truncf %16 : vector<128x8xf32> to vector<128x8xbf16>
    %c0_2 = arith.constant 0 : index
    %c0_3 = arith.constant 0 : index
    %18 = vector.load %arg3[%c0_2, %c0_3] : memref<8x8xbf16, #tpu.memory_space<vmem>>, vector<8x8xbf16>
    %cst = arith.constant dense<0.000000e+00> : vector<128x8xf32>
    %19 = tpu.matmul %17, %18, %cst {dimension_numbers = #tpu.dot_dimension_numbers<[1], [0], [0], [1], [0, 0, 1, 1], [], []>} : vector<128x8xbf16>, vector<8x8xbf16>, vector<128x8xf32> -> vector<128x8xf32>
    %c0_4 = arith.constant 0 : index
    %c0_5 = arith.constant 0 : index
    %20 = vector.load %arg4[%c0_4, %c0_5] : memref<1x8xf32, #tpu.memory_space<vmem>>, vector<1x8xf32>
    %21 = vector.broadcast %20 : vector<1x8xf32> to vector<128x8xf32>
    %22 = arith.addf %19, %21 : vector<128x8xf32>
    %cst_6 = arith.constant 0.000000e+00 : f32
    %23 = vector.broadcast %cst_6 : f32 to vector<128x8xf32>
    %24 = arith.maximumf %22, %23 : vector<128x8xf32>
    %25 = vector.shape_cast %24 : vector<128x8xf32> to vector<8x16x8xf32>
    %c0_7 = arith.constant 0 : index
    %c0_8 = arith.constant 0 : index
    %c0_9 = arith.constant 0 : index
    %c0_10 = arith.constant 0 : index
    %26 = vector.load %arg5[%c0_7, %c0_8, %c0_9, %c0_10] : memref<1x8x16x8xf32, #tpu.memory_space<vmem>>, vector<1x8x16x8xf32>
    %27 = vector.shape_cast %26 : vector<1x8x16x8xf32> to vector<8x16x8xf32>
    %28 = vector.shape_cast %25 : vector<8x16x8xf32> to vector<1x8x16x8xf32>
    tpu.vector_store %arg5[%c0_7, %c0_8, %c0_9, %c0_10], %28 {strides = array<i32>} : memref<1x8x16x8xf32, #tpu.memory_space<vmem>>, vector<1x8x16x8xf32>,
    return
  }
  func.func @transform_0(%arg0: i32, %arg1: i32) -> (i32, i32, i32, i32) {
    %c0_i32 = arith.constant 0 : i32
    %c0_i32_0 = arith.constant 0 : i32
    %c0_i32_1 = arith.constant 0 : i32
    %c0_i32_2 = arith.constant 0 : i32
    return %arg0, %c0_i32, %c0_i32_0, %c0_i32_1 : i32, i32, i32, i32
  }
  func.func @transform_1(%arg0: i32, %arg1: i32) -> (i32, i32) {
    %c0_i32 = arith.constant 0 : i32
    %c0_i32_0 = arith.constant 0 : i32
    %c0_i32_1 = arith.constant 0 : i32
    return %c0_i32, %c0_i32_0 : i32, i32
  }
  func.func @transform_2(%arg0: i32, %arg1: i32) -> (i32, i32) {
    %c0_i32 = arith.constant 0 : i32
    %c0_i32_0 = arith.constant 0 : i32
    %c0_i32_1 = arith.constant 0 : i32
    return %c0_i32, %c0_i32_0 : i32, i32
  }
  func.func @transform_3(%arg0: i32, %arg1: i32) -> (i32, i32, i32, i32) {
    %c0_i32 = arith.constant 0 : i32
    %c0_i32_0 = arith.constant 0 : i32
    %c0_i32_1 = arith.constant 0 : i32
    return %arg0, %arg1, %c0_i32, %c0_i32_0 : i32, i32, i32, i32
  }
}

module attributes {stable_mosaic.version = 11 : i64} {
  func.func @_fused_conv1x1_kernel(%arg0: i32, %arg1: memref<512x8xbf16, #tpu.memory_space<vmem>>, %arg2: memref<8x8xbf16, #tpu.memory_space<vmem>>, %arg3: memref<8x8xbf16, #tpu.memory_space<vmem>>, %arg4: memref<8x4xbf16, #tpu.memory_space<vmem>>, %arg5: memref<1x8xf32, #tpu.memory_space<vmem>>, %arg6: memref<1x8xf32, #tpu.memory_space<vmem>>, %arg7: memref<1x4xf32, #tpu.memory_space<vmem>>, %arg8: memref<512x8xf32, #tpu.memory_space<vmem>>, %arg9: memref<512x8xbf16, #tpu.memory_space<vmem>>, %arg10: memref<512x4xbf16, #tpu.memory_space<vmem>>) attributes {dimension_semantics = [#tpu.dimension_semantics<parallel>], iteration_bounds = array<i64: 1>, scalar_prefetch = 0 : i64, scratch_operands = 0 : i64, tpu.core_type = #tpu.core_type<tc>, window_params = [{transform_indices = @transform_0, window_bounds = array<i64: 512, 8>}, {pipeline_mode = #tpu.pipeline_mode<synchronous>, transform_indices = @transform_1, window_bounds = array<i64: 8, 8>}, {pipeline_mode = #tpu.pipeline_mode<synchronous>, transform_indices = @transform_2, window_bounds = array<i64: 8, 8>}, {pipeline_mode = #tpu.pipeline_mode<synchronous>, transform_indices = @transform_3, window_bounds = array<i64: 8, 4>}, {pipeline_mode = #tpu.pipeline_mode<synchronous>, transform_indices = @transform_4, window_bounds = array<i64: 1, 8>}, {pipeline_mode = #tpu.pipeline_mode<synchronous>, transform_indices = @transform_5, window_bounds = array<i64: 1, 8>}, {pipeline_mode = #tpu.pipeline_mode<synchronous>, transform_indices = @transform_6, window_bounds = array<i64: 1, 4>}, {transform_indices = @transform_7, window_bounds = array<i64: 512, 8>}, {transform_indices = @transform_8, window_bounds = array<i64: 512, 8>}, {transform_indices = @transform_9, window_bounds = array<i64: 512, 4>}]} {
    %c0 = arith.constant 0 : index
    %c0_0 = arith.constant 0 : index
    %0 = vector.load %arg1[%c0, %c0_0] : memref<512x8xbf16, #tpu.memory_space<vmem>>, vector<512x8xbf16>
    %c0_1 = arith.constant 0 : index
    %c0_2 = arith.constant 0 : index
    %1 = vector.load %arg2[%c0_1, %c0_2] : memref<8x8xbf16, #tpu.memory_space<vmem>>, vector<8x8xbf16>
    %cst = arith.constant dense<0.000000e+00> : vector<512x8xf32>
    %2 = tpu.matmul %0, %1, %cst {dimension_numbers = #tpu.dot_dimension_numbers<[1], [0], [0], [1], [0, 0, 1, 1], [], []>} : vector<512x8xbf16>, vector<8x8xbf16>, vector<512x8xf32> -> vector<512x8xf32>
    %c0_3 = arith.constant 0 : index
    %c0_4 = arith.constant 0 : index
    %3 = vector.load %arg5[%c0_3, %c0_4] : memref<1x8xf32, #tpu.memory_space<vmem>>, vector<1x8xf32>
    %4 = vector.broadcast %3 : vector<1x8xf32> to vector<512x8xf32>
    %5 = arith.addf %2, %4 : vector<512x8xf32>
    %cst_5 = arith.constant 0.000000e+00 : f32
    %6 = vector.broadcast %cst_5 : f32 to vector<512x8xf32>
    %7 = arith.maximumf %5, %6 : vector<512x8xf32>
    %c0_6 = arith.constant 0 : index
    %c0_7 = arith.constant 0 : index
    %8 = vector.load %arg8[%c0_6, %c0_7] : memref<512x8xf32, #tpu.memory_space<vmem>>, vector<512x8xf32>
    tpu.vector_store %arg8[%c0_6, %c0_7], %7 {strides = array<i32>} : memref<512x8xf32, #tpu.memory_space<vmem>>, vector<512x8xf32>,
    %c0_8 = arith.constant 0 : index
    %c0_9 = arith.constant 0 : index
    %9 = vector.load %arg3[%c0_8, %c0_9] : memref<8x8xbf16, #tpu.memory_space<vmem>>, vector<8x8xbf16>
    %cst_10 = arith.constant dense<0.000000e+00> : vector<512x8xf32>
    %10 = tpu.matmul %0, %9, %cst_10 {dimension_numbers = #tpu.dot_dimension_numbers<[1], [0], [0], [1], [0, 0, 1, 1], [], []>} : vector<512x8xbf16>, vector<8x8xbf16>, vector<512x8xf32> -> vector<512x8xf32>
    %c0_11 = arith.constant 0 : index
    %c0_12 = arith.constant 0 : index
    %11 = vector.load %arg6[%c0_11, %c0_12] : memref<1x8xf32, #tpu.memory_space<vmem>>, vector<1x8xf32>
    %12 = vector.broadcast %11 : vector<1x8xf32> to vector<512x8xf32>
    %13 = arith.addf %10, %12 : vector<512x8xf32>
    %cst_13 = arith.constant 0.000000e+00 : f32
    %14 = vector.broadcast %cst_13 : f32 to vector<512x8xf32>
    %15 = arith.maximumf %13, %14 : vector<512x8xf32>
    %16 = arith.truncf %15 : vector<512x8xf32> to vector<512x8xbf16>
    %c0_14 = arith.constant 0 : index
    %c0_15 = arith.constant 0 : index
    %17 = vector.load %arg9[%c0_14, %c0_15] : memref<512x8xbf16, #tpu.memory_space<vmem>>, vector<512x8xbf16>
    tpu.vector_store %arg9[%c0_14, %c0_15], %16 {strides = array<i32>} : memref<512x8xbf16, #tpu.memory_space<vmem>>, vector<512x8xbf16>,
    %c0_16 = arith.constant 0 : index
    %c0_17 = arith.constant 0 : index
    %18 = vector.load %arg4[%c0_16, %c0_17] : memref<8x4xbf16, #tpu.memory_space<vmem>>, vector<8x4xbf16>
    %cst_18 = arith.constant dense<0.000000e+00> : vector<512x4xf32>
    %19 = tpu.matmul %0, %18, %cst_18 {dimension_numbers = #tpu.dot_dimension_numbers<[1], [0], [0], [1], [0, 0, 1, 1], [], []>} : vector<512x8xbf16>, vector<8x4xbf16>, vector<512x4xf32> -> vector<512x4xf32>
    %c0_19 = arith.constant 0 : index
    %c0_20 = arith.constant 0 : index
    %20 = vector.load %arg7[%c0_19, %c0_20] : memref<1x4xf32, #tpu.memory_space<vmem>>, vector<1x4xf32>
    %21 = vector.broadcast %20 : vector<1x4xf32> to vector<512x4xf32>
    %22 = arith.addf %19, %21 : vector<512x4xf32>
    %cst_21 = arith.constant 0.000000e+00 : f32
    %23 = vector.broadcast %cst_21 : f32 to vector<512x4xf32>
    %24 = arith.maximumf %22, %23 : vector<512x4xf32>
    %25 = arith.truncf %24 : vector<512x4xf32> to vector<512x4xbf16>
    %c0_22 = arith.constant 0 : index
    %c0_23 = arith.constant 0 : index
    %26 = vector.load %arg10[%c0_22, %c0_23] : memref<512x4xbf16, #tpu.memory_space<vmem>>, vector<512x4xbf16>
    tpu.vector_store %arg10[%c0_22, %c0_23], %25 {strides = array<i32>} : memref<512x4xbf16, #tpu.memory_space<vmem>>, vector<512x4xbf16>,
    return
  }
  func.func @transform_0(%arg0: i32) -> (i32, i32) {
    %c0_i32 = arith.constant 0 : i32
    %c0_i32_0 = arith.constant 0 : i32
    return %arg0, %c0_i32 : i32, i32
  }
  func.func @transform_1(%arg0: i32) -> (i32, i32) {
    %c0_i32 = arith.constant 0 : i32
    %c0_i32_0 = arith.constant 0 : i32
    %c0_i32_1 = arith.constant 0 : i32
    return %c0_i32, %c0_i32_0 : i32, i32
  }
  func.func @transform_2(%arg0: i32) -> (i32, i32) {
    %c0_i32 = arith.constant 0 : i32
    %c0_i32_0 = arith.constant 0 : i32
    %c0_i32_1 = arith.constant 0 : i32
    return %c0_i32, %c0_i32_0 : i32, i32
  }
  func.func @transform_3(%arg0: i32) -> (i32, i32) {
    %c0_i32 = arith.constant 0 : i32
    %c0_i32_0 = arith.constant 0 : i32
    %c0_i32_1 = arith.constant 0 : i32
    return %c0_i32, %c0_i32_0 : i32, i32
  }
  func.func @transform_4(%arg0: i32) -> (i32, i32) {
    %c0_i32 = arith.constant 0 : i32
    %c0_i32_0 = arith.constant 0 : i32
    %c0_i32_1 = arith.constant 0 : i32
    return %c0_i32, %c0_i32_0 : i32, i32
  }
  func.func @transform_5(%arg0: i32) -> (i32, i32) {
    %c0_i32 = arith.constant 0 : i32
    %c0_i32_0 = arith.constant 0 : i32
    %c0_i32_1 = arith.constant 0 : i32
    return %c0_i32, %c0_i32_0 : i32, i32
  }
  func.func @transform_6(%arg0: i32) -> (i32, i32) {
    %c0_i32 = arith.constant 0 : i32
    %c0_i32_0 = arith.constant 0 : i32
    %c0_i32_1 = arith.constant 0 : i32
    return %c0_i32, %c0_i32_0 : i32, i32
  }
  func.func @transform_7(%arg0: i32) -> (i32, i32) {
    %c0_i32 = arith.constant 0 : i32
    %c0_i32_0 = arith.constant 0 : i32
    return %arg0, %c0_i32 : i32, i32
  }
  func.func @transform_8(%arg0: i32) -> (i32, i32) {
    %c0_i32 = arith.constant 0 : i32
    %c0_i32_0 = arith.constant 0 : i32
    return %arg0, %c0_i32 : i32, i32
  }
  func.func @transform_9(%arg0: i32) -> (i32, i32) {
    %c0_i32 = arith.constant 0 : i32
    %c0_i32_0 = arith.constant 0 : i32
    return %arg0, %c0_i32 : i32, i32
  }
}

module attributes {stable_mosaic.version = 11 : i64} {
  func.func @_conv3x3_kernel(%arg0: i32, %arg1: i32, %arg2: memref<1x18x18x8xbf16, #tpu.memory_space<vmem>>, %arg3: memref<72x16xbf16, #tpu.memory_space<vmem>>, %arg4: memref<1x16xf32, #tpu.memory_space<vmem>>, %arg5: memref<1x8x16x16xf32, #tpu.memory_space<vmem>>) attributes {dimension_semantics = [#tpu.dimension_semantics<parallel>, #tpu.dimension_semantics<arbitrary>], iteration_bounds = array<i64: 2, 2>, scalar_prefetch = 0 : i64, scratch_operands = 0 : i64, tpu.core_type = #tpu.core_type<tc>, window_params = [{transform_indices = @transform_0, window_bounds = array<i64: 1, 18, 18, 8>}, {pipeline_mode = #tpu.pipeline_mode<synchronous>, transform_indices = @transform_1, window_bounds = array<i64: 72, 16>}, {pipeline_mode = #tpu.pipeline_mode<synchronous>, transform_indices = @transform_2, window_bounds = array<i64: 1, 16>}, {transform_indices = @transform_3, window_bounds = array<i64: 1, 8, 16, 16>}]} {
    %c8_i32 = arith.constant 8 : i32
    %0 = arith.muli %arg1, %c8_i32 : i32
    %1 = tpu.assume_multiple %0, 8 : i32
    %c0 = arith.constant 0 : index
    %2 = arith.index_cast %1 : i32 to index
    %c0_0 = arith.constant 0 : index
    %c0_1 = arith.constant 0 : index
    %3 = vector.load %arg2[%c0, %2, %c0_0, %c0_1] : memref<1x18x18x8xbf16, #tpu.memory_space<vmem>>, vector<1x10x18x8xbf16>
    %4 = vector.shape_cast %3 : vector<1x10x18x8xbf16> to vector<10x18x8xbf16>
    %5 = arith.extf %4 : vector<10x18x8xbf16> to vector<10x18x8xf32>
    %6 = vector.extract_strided_slice %5 {offsets = [0, 0, 0], sizes = [8, 16, 8], strides = [1, 1, 1]} : vector<10x18x8xf32> to vector<8x16x8xf32>
    %7 = vector.shape_cast %6 : vector<8x16x8xf32> to vector<128x8xf32>
    %8 = vector.extract_strided_slice %5 {offsets = [0, 1, 0], sizes = [8, 16, 8], strides = [1, 1, 1]} : vector<10x18x8xf32> to vector<8x16x8xf32>
    %9 = vector.shape_cast %8 : vector<8x16x8xf32> to vector<128x8xf32>
    %10 = vector.extract_strided_slice %5 {offsets = [0, 2, 0], sizes = [8, 16, 8], strides = [1, 1, 1]} : vector<10x18x8xf32> to vector<8x16x8xf32>
    %11 = vector.shape_cast %10 : vector<8x16x8xf32> to vector<128x8xf32>
    %12 = vector.extract_strided_slice %5 {offsets = [1, 0, 0], sizes = [8, 16, 8], strides = [1, 1, 1]} : vector<10x18x8xf32> to vector<8x16x8xf32>
    %13 = vector.shape_cast %12 : vector<8x16x8xf32> to vector<128x8xf32>
    %14 = vector.extract_strided_slice %5 {offsets = [1, 1, 0], sizes = [8, 16, 8], strides = [1, 1, 1]} : vector<10x18x8xf32> to vector<8x16x8xf32>
    %15 = vector.shape_cast %14 : vector<8x16x8xf32> to vector<128x8xf32>
    %16 = vector.extract_strided_slice %5 {offsets = [1, 2, 0], sizes = [8, 16, 8], strides = [1, 1, 1]} : vector<10x18x8xf32> to vector<8x16x8xf32>
    %17 = vector.shape_cast %16 : vector<8x16x8xf32> to vector<128x8xf32>
    %18 = vector.extract_strided_slice %5 {offsets = [2, 0, 0], sizes = [8, 16, 8], strides = [1, 1, 1]} : vector<10x18x8xf32> to vector<8x16x8xf32>
    %19 = vector.shape_cast %18 : vector<8x16x8xf32> to vector<128x8xf32>
    %20 = vector.extract_strided_slice %5 {offsets = [2, 1, 0], sizes = [8, 16, 8], strides = [1, 1, 1]} : vector<10x18x8xf32> to vector<8x16x8xf32>
    %21 = vector.shape_cast %20 : vector<8x16x8xf32> to vector<128x8xf32>
    %22 = vector.extract_strided_slice %5 {offsets = [2, 2, 0], sizes = [8, 16, 8], strides = [1, 1, 1]} : vector<10x18x8xf32> to vector<8x16x8xf32>
    %23 = vector.shape_cast %22 : vector<8x16x8xf32> to vector<128x8xf32>
    %24 = tpu.concatenate %7, %9, %11, %13, %15, %17, %19, %21, %23 in 1 : vector<128x8xf32>, vector<128x8xf32>, vector<128x8xf32>, vector<128x8xf32>, vector<128x8xf32>, vector<128x8xf32>, vector<128x8xf32>, vector<128x8xf32>, vector<128x8xf32> -> vector<128x72xf32>
    %25 = arith.truncf %24 : vector<128x72xf32> to vector<128x72xbf16>
    %c0_2 = arith.constant 0 : index
    %c0_3 = arith.constant 0 : index
    %26 = vector.load %arg3[%c0_2, %c0_3] : memref<72x16xbf16, #tpu.memory_space<vmem>>, vector<72x16xbf16>
    %cst = arith.constant dense<0.000000e+00> : vector<128x16xf32>
    %27 = tpu.matmul %25, %26, %cst {dimension_numbers = #tpu.dot_dimension_numbers<[1], [0], [0], [1], [0, 0, 1, 1], [], []>} : vector<128x72xbf16>, vector<72x16xbf16>, vector<128x16xf32> -> vector<128x16xf32>
    %c0_4 = arith.constant 0 : index
    %c0_5 = arith.constant 0 : index
    %28 = vector.load %arg4[%c0_4, %c0_5] : memref<1x16xf32, #tpu.memory_space<vmem>>, vector<1x16xf32>
    %29 = vector.broadcast %28 : vector<1x16xf32> to vector<128x16xf32>
    %30 = arith.addf %27, %29 : vector<128x16xf32>
    %cst_6 = arith.constant 0.000000e+00 : f32
    %31 = vector.broadcast %cst_6 : f32 to vector<128x16xf32>
    %32 = arith.maximumf %30, %31 : vector<128x16xf32>
    %33 = vector.shape_cast %32 : vector<128x16xf32> to vector<8x16x16xf32>
    %c0_7 = arith.constant 0 : index
    %c0_8 = arith.constant 0 : index
    %c0_9 = arith.constant 0 : index
    %c0_10 = arith.constant 0 : index
    %34 = vector.load %arg5[%c0_7, %c0_8, %c0_9, %c0_10] : memref<1x8x16x16xf32, #tpu.memory_space<vmem>>, vector<1x8x16x16xf32>
    %35 = vector.shape_cast %34 : vector<1x8x16x16xf32> to vector<8x16x16xf32>
    %36 = vector.shape_cast %33 : vector<8x16x16xf32> to vector<1x8x16x16xf32>
    tpu.vector_store %arg5[%c0_7, %c0_8, %c0_9, %c0_10], %36 {strides = array<i32>} : memref<1x8x16x16xf32, #tpu.memory_space<vmem>>, vector<1x8x16x16xf32>,
    return
  }
  func.func @transform_0(%arg0: i32, %arg1: i32) -> (i32, i32, i32, i32) {
    %c0_i32 = arith.constant 0 : i32
    %c0_i32_0 = arith.constant 0 : i32
    %c0_i32_1 = arith.constant 0 : i32
    %c0_i32_2 = arith.constant 0 : i32
    return %arg0, %c0_i32, %c0_i32_0, %c0_i32_1 : i32, i32, i32, i32
  }
  func.func @transform_1(%arg0: i32, %arg1: i32) -> (i32, i32) {
    %c0_i32 = arith.constant 0 : i32
    %c0_i32_0 = arith.constant 0 : i32
    %c0_i32_1 = arith.constant 0 : i32
    return %c0_i32, %c0_i32_0 : i32, i32
  }
  func.func @transform_2(%arg0: i32, %arg1: i32) -> (i32, i32) {
    %c0_i32 = arith.constant 0 : i32
    %c0_i32_0 = arith.constant 0 : i32
    %c0_i32_1 = arith.constant 0 : i32
    return %c0_i32, %c0_i32_0 : i32, i32
  }
  func.func @transform_3(%arg0: i32, %arg1: i32) -> (i32, i32, i32, i32) {
    %c0_i32 = arith.constant 0 : i32
    %c0_i32_0 = arith.constant 0 : i32
    %c0_i32_1 = arith.constant 0 : i32
    return %arg0, %arg1, %c0_i32, %c0_i32_0 : i32, i32, i32, i32
  }
}

module attributes {stable_mosaic.version = 11 : i64} {
  func.func @_conv3x3_kernel(%arg0: i32, %arg1: i32, %arg2: memref<1x18x18x4xbf16, #tpu.memory_space<vmem>>, %arg3: memref<36x8xbf16, #tpu.memory_space<vmem>>, %arg4: memref<1x8xf32, #tpu.memory_space<vmem>>, %arg5: memref<1x8x16x8xbf16, #tpu.memory_space<vmem>>) attributes {dimension_semantics = [#tpu.dimension_semantics<parallel>, #tpu.dimension_semantics<arbitrary>], iteration_bounds = array<i64: 2, 2>, scalar_prefetch = 0 : i64, scratch_operands = 0 : i64, tpu.core_type = #tpu.core_type<tc>, window_params = [{transform_indices = @transform_0, window_bounds = array<i64: 1, 18, 18, 4>}, {pipeline_mode = #tpu.pipeline_mode<synchronous>, transform_indices = @transform_1, window_bounds = array<i64: 36, 8>}, {pipeline_mode = #tpu.pipeline_mode<synchronous>, transform_indices = @transform_2, window_bounds = array<i64: 1, 8>}, {transform_indices = @transform_3, window_bounds = array<i64: 1, 8, 16, 8>}]} {
    %c8_i32 = arith.constant 8 : i32
    %0 = arith.muli %arg1, %c8_i32 : i32
    %1 = tpu.assume_multiple %0, 8 : i32
    %c0 = arith.constant 0 : index
    %2 = arith.index_cast %1 : i32 to index
    %c0_0 = arith.constant 0 : index
    %c0_1 = arith.constant 0 : index
    %3 = vector.load %arg2[%c0, %2, %c0_0, %c0_1] : memref<1x18x18x4xbf16, #tpu.memory_space<vmem>>, vector<1x10x18x4xbf16>
    %4 = vector.shape_cast %3 : vector<1x10x18x4xbf16> to vector<10x18x4xbf16>
    %5 = arith.extf %4 : vector<10x18x4xbf16> to vector<10x18x4xf32>
    %6 = vector.extract_strided_slice %5 {offsets = [0, 0, 0], sizes = [8, 16, 4], strides = [1, 1, 1]} : vector<10x18x4xf32> to vector<8x16x4xf32>
    %7 = vector.shape_cast %6 : vector<8x16x4xf32> to vector<128x4xf32>
    %8 = vector.extract_strided_slice %5 {offsets = [0, 1, 0], sizes = [8, 16, 4], strides = [1, 1, 1]} : vector<10x18x4xf32> to vector<8x16x4xf32>
    %9 = vector.shape_cast %8 : vector<8x16x4xf32> to vector<128x4xf32>
    %10 = vector.extract_strided_slice %5 {offsets = [0, 2, 0], sizes = [8, 16, 4], strides = [1, 1, 1]} : vector<10x18x4xf32> to vector<8x16x4xf32>
    %11 = vector.shape_cast %10 : vector<8x16x4xf32> to vector<128x4xf32>
    %12 = vector.extract_strided_slice %5 {offsets = [1, 0, 0], sizes = [8, 16, 4], strides = [1, 1, 1]} : vector<10x18x4xf32> to vector<8x16x4xf32>
    %13 = vector.shape_cast %12 : vector<8x16x4xf32> to vector<128x4xf32>
    %14 = vector.extract_strided_slice %5 {offsets = [1, 1, 0], sizes = [8, 16, 4], strides = [1, 1, 1]} : vector<10x18x4xf32> to vector<8x16x4xf32>
    %15 = vector.shape_cast %14 : vector<8x16x4xf32> to vector<128x4xf32>
    %16 = vector.extract_strided_slice %5 {offsets = [1, 2, 0], sizes = [8, 16, 4], strides = [1, 1, 1]} : vector<10x18x4xf32> to vector<8x16x4xf32>
    %17 = vector.shape_cast %16 : vector<8x16x4xf32> to vector<128x4xf32>
    %18 = vector.extract_strided_slice %5 {offsets = [2, 0, 0], sizes = [8, 16, 4], strides = [1, 1, 1]} : vector<10x18x4xf32> to vector<8x16x4xf32>
    %19 = vector.shape_cast %18 : vector<8x16x4xf32> to vector<128x4xf32>
    %20 = vector.extract_strided_slice %5 {offsets = [2, 1, 0], sizes = [8, 16, 4], strides = [1, 1, 1]} : vector<10x18x4xf32> to vector<8x16x4xf32>
    %21 = vector.shape_cast %20 : vector<8x16x4xf32> to vector<128x4xf32>
    %22 = vector.extract_strided_slice %5 {offsets = [2, 2, 0], sizes = [8, 16, 4], strides = [1, 1, 1]} : vector<10x18x4xf32> to vector<8x16x4xf32>
    %23 = vector.shape_cast %22 : vector<8x16x4xf32> to vector<128x4xf32>
    %24 = tpu.concatenate %7, %9, %11, %13, %15, %17, %19, %21, %23 in 1 : vector<128x4xf32>, vector<128x4xf32>, vector<128x4xf32>, vector<128x4xf32>, vector<128x4xf32>, vector<128x4xf32>, vector<128x4xf32>, vector<128x4xf32>, vector<128x4xf32> -> vector<128x36xf32>
    %25 = arith.truncf %24 : vector<128x36xf32> to vector<128x36xbf16>
    %c0_2 = arith.constant 0 : index
    %c0_3 = arith.constant 0 : index
    %26 = vector.load %arg3[%c0_2, %c0_3] : memref<36x8xbf16, #tpu.memory_space<vmem>>, vector<36x8xbf16>
    %cst = arith.constant dense<0.000000e+00> : vector<128x8xf32>
    %27 = tpu.matmul %25, %26, %cst {dimension_numbers = #tpu.dot_dimension_numbers<[1], [0], [0], [1], [0, 0, 1, 1], [], []>} : vector<128x36xbf16>, vector<36x8xbf16>, vector<128x8xf32> -> vector<128x8xf32>
    %c0_4 = arith.constant 0 : index
    %c0_5 = arith.constant 0 : index
    %28 = vector.load %arg4[%c0_4, %c0_5] : memref<1x8xf32, #tpu.memory_space<vmem>>, vector<1x8xf32>
    %29 = vector.broadcast %28 : vector<1x8xf32> to vector<128x8xf32>
    %30 = arith.addf %27, %29 : vector<128x8xf32>
    %cst_6 = arith.constant 0.000000e+00 : f32
    %31 = vector.broadcast %cst_6 : f32 to vector<128x8xf32>
    %32 = arith.maximumf %30, %31 : vector<128x8xf32>
    %33 = vector.shape_cast %32 : vector<128x8xf32> to vector<8x16x8xf32>
    %34 = arith.truncf %33 : vector<8x16x8xf32> to vector<8x16x8xbf16>
    %c0_7 = arith.constant 0 : index
    %c0_8 = arith.constant 0 : index
    %c0_9 = arith.constant 0 : index
    %c0_10 = arith.constant 0 : index
    %35 = vector.load %arg5[%c0_7, %c0_8, %c0_9, %c0_10] : memref<1x8x16x8xbf16, #tpu.memory_space<vmem>>, vector<1x8x16x8xbf16>
    %36 = vector.shape_cast %35 : vector<1x8x16x8xbf16> to vector<8x16x8xbf16>
    %37 = vector.shape_cast %34 : vector<8x16x8xbf16> to vector<1x8x16x8xbf16>
    tpu.vector_store %arg5[%c0_7, %c0_8, %c0_9, %c0_10], %37 {strides = array<i32>} : memref<1x8x16x8xbf16, #tpu.memory_space<vmem>>, vector<1x8x16x8xbf16>,
    return
  }
  func.func @transform_0(%arg0: i32, %arg1: i32) -> (i32, i32, i32, i32) {
    %c0_i32 = arith.constant 0 : i32
    %c0_i32_0 = arith.constant 0 : i32
    %c0_i32_1 = arith.constant 0 : i32
    %c0_i32_2 = arith.constant 0 : i32
    return %arg0, %c0_i32, %c0_i32_0, %c0_i32_1 : i32, i32, i32, i32
  }
  func.func @transform_1(%arg0: i32, %arg1: i32) -> (i32, i32) {
    %c0_i32 = arith.constant 0 : i32
    %c0_i32_0 = arith.constant 0 : i32
    %c0_i32_1 = arith.constant 0 : i32
    return %c0_i32, %c0_i32_0 : i32, i32
  }
  func.func @transform_2(%arg0: i32, %arg1: i32) -> (i32, i32) {
    %c0_i32 = arith.constant 0 : i32
    %c0_i32_0 = arith.constant 0 : i32
    %c0_i32_1 = arith.constant 0 : i32
    return %c0_i32, %c0_i32_0 : i32, i32
  }
  func.func @transform_3(%arg0: i32, %arg1: i32) -> (i32, i32, i32, i32) {
    %c0_i32 = arith.constant 0 : i32
    %c0_i32_0 = arith.constant 0 : i32
    %c0_i32_1 = arith.constant 0 : i32
    return %arg0, %arg1, %c0_i32, %c0_i32_0 : i32, i32, i32, i32
  }
}

module attributes {stable_mosaic.version = 11 : i64} {
  func.func @_conv3x3_kernel(%arg0: i32, %arg1: i32, %arg2: memref<1x18x18x8xbf16, #tpu.memory_space<vmem>>, %arg3: memref<72x8xbf16, #tpu.memory_space<vmem>>, %arg4: memref<1x8xf32, #tpu.memory_space<vmem>>, %arg5: memref<1x8x16x8xf32, #tpu.memory_space<vmem>>) attributes {dimension_semantics = [#tpu.dimension_semantics<parallel>, #tpu.dimension_semantics<arbitrary>], iteration_bounds = array<i64: 2, 2>, scalar_prefetch = 0 : i64, scratch_operands = 0 : i64, tpu.core_type = #tpu.core_type<tc>, window_params = [{transform_indices = @transform_0, window_bounds = array<i64: 1, 18, 18, 8>}, {pipeline_mode = #tpu.pipeline_mode<synchronous>, transform_indices = @transform_1, window_bounds = array<i64: 72, 8>}, {pipeline_mode = #tpu.pipeline_mode<synchronous>, transform_indices = @transform_2, window_bounds = array<i64: 1, 8>}, {transform_indices = @transform_3, window_bounds = array<i64: 1, 8, 16, 8>}]} {
    %c8_i32 = arith.constant 8 : i32
    %0 = arith.muli %arg1, %c8_i32 : i32
    %1 = tpu.assume_multiple %0, 8 : i32
    %c0 = arith.constant 0 : index
    %2 = arith.index_cast %1 : i32 to index
    %c0_0 = arith.constant 0 : index
    %c0_1 = arith.constant 0 : index
    %3 = vector.load %arg2[%c0, %2, %c0_0, %c0_1] : memref<1x18x18x8xbf16, #tpu.memory_space<vmem>>, vector<1x10x18x8xbf16>
    %4 = vector.shape_cast %3 : vector<1x10x18x8xbf16> to vector<10x18x8xbf16>
    %5 = arith.extf %4 : vector<10x18x8xbf16> to vector<10x18x8xf32>
    %6 = vector.extract_strided_slice %5 {offsets = [0, 0, 0], sizes = [8, 16, 8], strides = [1, 1, 1]} : vector<10x18x8xf32> to vector<8x16x8xf32>
    %7 = vector.shape_cast %6 : vector<8x16x8xf32> to vector<128x8xf32>
    %8 = vector.extract_strided_slice %5 {offsets = [0, 1, 0], sizes = [8, 16, 8], strides = [1, 1, 1]} : vector<10x18x8xf32> to vector<8x16x8xf32>
    %9 = vector.shape_cast %8 : vector<8x16x8xf32> to vector<128x8xf32>
    %10 = vector.extract_strided_slice %5 {offsets = [0, 2, 0], sizes = [8, 16, 8], strides = [1, 1, 1]} : vector<10x18x8xf32> to vector<8x16x8xf32>
    %11 = vector.shape_cast %10 : vector<8x16x8xf32> to vector<128x8xf32>
    %12 = vector.extract_strided_slice %5 {offsets = [1, 0, 0], sizes = [8, 16, 8], strides = [1, 1, 1]} : vector<10x18x8xf32> to vector<8x16x8xf32>
    %13 = vector.shape_cast %12 : vector<8x16x8xf32> to vector<128x8xf32>
    %14 = vector.extract_strided_slice %5 {offsets = [1, 1, 0], sizes = [8, 16, 8], strides = [1, 1, 1]} : vector<10x18x8xf32> to vector<8x16x8xf32>
    %15 = vector.shape_cast %14 : vector<8x16x8xf32> to vector<128x8xf32>
    %16 = vector.extract_strided_slice %5 {offsets = [1, 2, 0], sizes = [8, 16, 8], strides = [1, 1, 1]} : vector<10x18x8xf32> to vector<8x16x8xf32>
    %17 = vector.shape_cast %16 : vector<8x16x8xf32> to vector<128x8xf32>
    %18 = vector.extract_strided_slice %5 {offsets = [2, 0, 0], sizes = [8, 16, 8], strides = [1, 1, 1]} : vector<10x18x8xf32> to vector<8x16x8xf32>
    %19 = vector.shape_cast %18 : vector<8x16x8xf32> to vector<128x8xf32>
    %20 = vector.extract_strided_slice %5 {offsets = [2, 1, 0], sizes = [8, 16, 8], strides = [1, 1, 1]} : vector<10x18x8xf32> to vector<8x16x8xf32>
    %21 = vector.shape_cast %20 : vector<8x16x8xf32> to vector<128x8xf32>
    %22 = vector.extract_strided_slice %5 {offsets = [2, 2, 0], sizes = [8, 16, 8], strides = [1, 1, 1]} : vector<10x18x8xf32> to vector<8x16x8xf32>
    %23 = vector.shape_cast %22 : vector<8x16x8xf32> to vector<128x8xf32>
    %24 = tpu.concatenate %7, %9, %11, %13, %15, %17, %19, %21, %23 in 1 : vector<128x8xf32>, vector<128x8xf32>, vector<128x8xf32>, vector<128x8xf32>, vector<128x8xf32>, vector<128x8xf32>, vector<128x8xf32>, vector<128x8xf32>, vector<128x8xf32> -> vector<128x72xf32>
    %25 = arith.truncf %24 : vector<128x72xf32> to vector<128x72xbf16>
    %c0_2 = arith.constant 0 : index
    %c0_3 = arith.constant 0 : index
    %26 = vector.load %arg3[%c0_2, %c0_3] : memref<72x8xbf16, #tpu.memory_space<vmem>>, vector<72x8xbf16>
    %cst = arith.constant dense<0.000000e+00> : vector<128x8xf32>
    %27 = tpu.matmul %25, %26, %cst {dimension_numbers = #tpu.dot_dimension_numbers<[1], [0], [0], [1], [0, 0, 1, 1], [], []>} : vector<128x72xbf16>, vector<72x8xbf16>, vector<128x8xf32> -> vector<128x8xf32>
    %c0_4 = arith.constant 0 : index
    %c0_5 = arith.constant 0 : index
    %28 = vector.load %arg4[%c0_4, %c0_5] : memref<1x8xf32, #tpu.memory_space<vmem>>, vector<1x8xf32>
    %29 = vector.broadcast %28 : vector<1x8xf32> to vector<128x8xf32>
    %30 = arith.addf %27, %29 : vector<128x8xf32>
    %cst_6 = arith.constant 0.000000e+00 : f32
    %31 = vector.broadcast %cst_6 : f32 to vector<128x8xf32>
    %32 = arith.maximumf %30, %31 : vector<128x8xf32>
    %33 = vector.shape_cast %32 : vector<128x8xf32> to vector<8x16x8xf32>
    %c0_7 = arith.constant 0 : index
    %c0_8 = arith.constant 0 : index
    %c0_9 = arith.constant 0 : index
    %c0_10 = arith.constant 0 : index
    %34 = vector.load %arg5[%c0_7, %c0_8, %c0_9, %c0_10] : memref<1x8x16x8xf32, #tpu.memory_space<vmem>>, vector<1x8x16x8xf32>
    %35 = vector.shape_cast %34 : vector<1x8x16x8xf32> to vector<8x16x8xf32>
    %36 = vector.shape_cast %33 : vector<8x16x8xf32> to vector<1x8x16x8xf32>
    tpu.vector_store %arg5[%c0_7, %c0_8, %c0_9, %c0_10], %36 {strides = array<i32>} : memref<1x8x16x8xf32, #tpu.memory_space<vmem>>, vector<1x8x16x8xf32>,
    return
  }
  func.func @transform_0(%arg0: i32, %arg1: i32) -> (i32, i32, i32, i32) {
    %c0_i32 = arith.constant 0 : i32
    %c0_i32_0 = arith.constant 0 : i32
    %c0_i32_1 = arith.constant 0 : i32
    %c0_i32_2 = arith.constant 0 : i32
    return %arg0, %c0_i32, %c0_i32_0, %c0_i32_1 : i32, i32, i32, i32
  }
  func.func @transform_1(%arg0: i32, %arg1: i32) -> (i32, i32) {
    %c0_i32 = arith.constant 0 : i32
    %c0_i32_0 = arith.constant 0 : i32
    %c0_i32_1 = arith.constant 0 : i32
    return %c0_i32, %c0_i32_0 : i32, i32
  }
  func.func @transform_2(%arg0: i32, %arg1: i32) -> (i32, i32) {
    %c0_i32 = arith.constant 0 : i32
    %c0_i32_0 = arith.constant 0 : i32
    %c0_i32_1 = arith.constant 0 : i32
    return %c0_i32, %c0_i32_0 : i32, i32
  }
  func.func @transform_3(%arg0: i32, %arg1: i32) -> (i32, i32, i32, i32) {
    %c0_i32 = arith.constant 0 : i32
    %c0_i32_0 = arith.constant 0 : i32
    %c0_i32_1 = arith.constant 0 : i32
    return %arg0, %arg1, %c0_i32, %c0_i32_0 : i32, i32, i32, i32
  }
}

</mosaic_0001>

<llo_original>
// kernel: inception_2_forward.9
$region0: #{inception_2_forward.9}
  #allocation0 [shape = 'u32[]', space=smem, size = 0x4, offset = 0x4, fixed_abs, tag = 'smem constant byte address 0x4 - core index']
  #allocation1 [shape = 'u32[72,128]{1,0:T(1,128)}', space=vmem, size = 0x9000, scoped, tag = 'internal scratch']
  %s0 = inlined_call_operand.vmem [shape: bf16[2,18,18,8], index: 0, kind: input, shape index: {}]
  %s1 = inlined_call_operand.vmem [shape: bf16[8,8], index: 1, kind: input, shape index: {}]
  %s2 = inlined_call_operand.vmem [shape: f32[1,8], index: 2, kind: input, shape index: {}]
  %s3 = inlined_call_operand.vmem [shape: f32[2,16,16,8], index: 3, kind: output, shape index: {}]
  %s4 = sld [smem:[#allocation0]]
  $region45: #{inception_2_forward.9} parent=0
    _
  %s6 = ssub.s32 1, %s4
  %s7 = scalar_select 0, %s6, %s4
  loop: start=0, step=1, limit=6
  $region2: #{inception_2_forward.9} parent=0 // loop_pre_header
    _
  $region3: #{inception_2_forward.9} parent=0 // loop_header
    %s9 = sphi 0, %s13
    %p10 = scmp.ge.s32.totalorder %s9, 6
    %s16 = sphi 0, %s28
    %s17 = sphi 0, %s24
    %s18 = sphi 0, %s16
    %s19 = sphi 0, %s17
    %s20 = sphi 0, %s18
    %s21 = sphi 0, %s19
    %s31 = sphi 0, %s33
    %s34 = sphi 0, %s31
    %s35 = sphi 0, %s34
    %s51 = sphi 0, %s35
    %s55 = sphi 0, %s55
    %s57 = sphi 0, %s55
    %s58 = sphi 0, %s57
    %s72 = sphi 0, %s58
    %s76 = sphi 0, %s76
    %s78 = sphi 0, %s76
    %s79 = sphi 0, %s78
    %s93 = sphi 0, %s79
    %s101 = sphi 0, %s103
    %s104 = sphi 0, %s101
    %s105 = sphi 0, %s104
    %s121 = sphi 0, %s105
  $region4: #{inception_2_forward.9} parent=0 // loop_header_branch
    %12 = sbr.rel (%p10) target = $region8
  $region5: #{inception_2_forward.9} parent=0 // loop_body
    %s14 = ssub.s32 %s9, 1
    %s15 = ssub.s32 %s9, 2
    %s22 = sadd.s32 1, %s17
    %p23 = scmp.ge.s32.totalorder %s22, 2
    %s24 = scalar_select %p23, 0, %s22
    %s25 = sadd.s32 1, %s16
    %s26 = scalar_select %p23, %s25, %s16
    %p27 = scmp.ge.s32.totalorder %s26, 2
    %s28 = scalar_select %p27, 0, %s26
    %s29 = ssub.s32 %s16, %s28
    %p30 = scmp.eq.s32.totalorder %s29, 0
    %s32 = sadd.s32 %s31, 1
    %s33 = scalar_select %p30, %s31, %s32
    %p36 = pneg %p30
    %p37 = scmp.eq.s32.totalorder %s9, 3
    %p38 = por %p36, %p37
    %p39 = scmp.ne.s32.totalorder %s31, %s34
    %p40 = scmp.eq.s32.totalorder %s9, 0
    %p41 = por %p39, %p40
    %p42 = scmp.ne.s32.totalorder %s31, %s34
    %p43 = scmp.eq.s32.totalorder %s14, 3
    %p44 = por %p42, %p43
    %p45 = scmp.ne.s32.totalorder %s34, %s35
    %p46 = scmp.eq.s32.totalorder %s14, 0
    %p47 = por %p45, %p46
    %p48 = scmp.ne.s32.totalorder %s34, %s35
    %p49 = scmp.eq.s32.totalorder %s15, 3
    %p50 = por %p48, %p49
    %p52 = scmp.ne.s32.totalorder %s35, %s51
    %p53 = scmp.eq.s32.totalorder %s15, 0
    %p54 = por %p52, %p53
    %s56 = sadd.s32 %s55, 1
    %p59 = scmp.eq.s32.totalorder %s9, 3
    %p60 = scmp.ne.s32.totalorder %s55, %s57
    %p61 = scmp.eq.s32.totalorder %s9, 0
    %p62 = por %p60, %p61
    %p63 = scmp.ne.s32.totalorder %s55, %s57
    %p64 = scmp.eq.s32.totalorder %s14, 3
    %p65 = por %p63, %p64
    %p66 = scmp.ne.s32.totalorder %s57, %s58
    %p67 = scmp.eq.s32.totalorder %s14, 0
    %p68 = por %p66, %p67
    %p69 = scmp.ne.s32.totalorder %s57, %s58
    %p70 = scmp.eq.s32.totalorder %s15, 3
    %p71 = por %p69, %p70
    %p73 = scmp.ne.s32.totalorder %s58, %s72
    %p74 = scmp.eq.s32.totalorder %s15, 0
    %p75 = por %p73, %p74
    %s77 = sadd.s32 %s76, 1
    %p80 = scmp.eq.s32.totalorder %s9, 3
    %p81 = scmp.ne.s32.totalorder %s76, %s78
    %p82 = scmp.eq.s32.totalorder %s9, 0
    %p83 = por %p81, %p82
    %p84 = scmp.ne.s32.totalorder %s76, %s78
    %p85 = scmp.eq.s32.totalorder %s14, 3
    %p86 = por %p84, %p85
    %p87 = scmp.ne.s32.totalorder %s78, %s79
    %p88 = scmp.eq.s32.totalorder %s14, 0
    %p89 = por %p87, %p88
    %p90 = scmp.ne.s32.totalorder %s78, %s79
    %p91 = scmp.eq.s32.totalorder %s15, 3
    %p92 = por %p90, %p91
    %p94 = scmp.ne.s32.totalorder %s79, %s93
    %p95 = scmp.eq.s32.totalorder %s15, 0
    %p96 = por %p94, %p95
    %s97 = ssub.s32 %s16, %s28
    %s98 = ssub.s32 %s17, %s24
    %s99 = sor.u32 %s97, %s98
    %p100 = scmp.eq.s32.totalorder %s99, 0
    %s102 = sadd.s32 %s101, 1
    %s103 = scalar_select %p100, %s101, %s102
    %p106 = pneg %p100
    %p107 = scmp.eq.s32.totalorder %s9, 3
    %p108 = por %p106, %p107
    %p109 = scmp.ne.s32.totalorder %s101, %s104
    %p110 = scmp.eq.s32.totalorder %s9, 0
    %p111 = por %p109, %p110
    %p112 = scmp.ne.s32.totalorder %s101, %s104
    %p113 = scmp.eq.s32.totalorder %s14, 3
    %p114 = por %p112, %p113
    %p115 = scmp.ne.s32.totalorder %s104, %s105
    %p116 = scmp.eq.s32.totalorder %s14, 0
    %p117 = por %p115, %p116
    %p118 = scmp.ne.s32.totalorder %s104, %s105
    %p119 = scmp.eq.s32.totalorder %s15, 3
    %p120 = por %p118, %p119
    %p122 = scmp.ne.s32.totalorder %s105, %s121
    %p123 = scmp.eq.s32.totalorder %s15, 0
    %p124 = por %p122, %p123
    %p125 = scmp.le.s32.totalorder 1, %s9
    %p126 = scmp.lt.s32.totalorder %s9, 5
    %p127 = pnand %p125, %p126
    %p128 = pneg %p127
    // Predicated region
    $region9: #{inception_2_forward.9} parent=5 // pred_check
      _
    $region10: #{inception_2_forward.9} parent=5 // pred_check_branch
      %130 = sbr.rel (%p127) target = $region12
    $region11: #{inception_2_forward.9} parent=5 // pred_region
      %s131 = ssub.s32 %s9, 1
      // Predicated region
      $region13: #{inception_2_forward.9} parent=11 // pred_check
        %p132 = pneg %p68
      $region14: #{inception_2_forward.9} parent=11 // pred_check_branch
        %134 = sbr.rel (%p132) target = $region16
      $region15: #{inception_2_forward.9} parent=11 // pred_region
        _
      $region16: #{inception_2_forward.9} parent=11 // pred_fallthru
        _
      // Predicated region
      $region17: #{inception_2_forward.9} parent=11 // pred_check
        %p135 = pneg %p89
      $region18: #{inception_2_forward.9} parent=11 // pred_check_branch
        %137 = sbr.rel (%p135) target = $region20
      $region19: #{inception_2_forward.9} parent=11 // pred_region
        _
      $region20: #{inception_2_forward.9} parent=11 // pred_fallthru
        _
    $region12: #{inception_2_forward.9} parent=5 // pred_fallthru
      _
    %p138 = scmp.lt.s32.totalorder %s9, 4
    // Predicated region
    $region21: #{inception_2_forward.9} parent=5 // pred_check
      %p139 = pneg %p138
    $region22: #{inception_2_forward.9} parent=5 // pred_check_branch
      %141 = sbr.rel (%p139) target = $region24
    $region23: #{inception_2_forward.9} parent=5 // pred_region
      // Predicated region
      $region25: #{inception_2_forward.9} parent=23 // pred_check
        %p142 = pneg %p41
      $region26: #{inception_2_forward.9} parent=23 // pred_check_branch
        %144 = sbr.rel (%p142) target = $region28
      $region27: #{inception_2_forward.9} parent=23 // pred_region
        %p145 = scmp.lt.s32.totalorder %s16, 1
        %s146 = scalar_select %p145, %s16, 1
        %s147 = smul.addr %s146, 54
        %s148 = smul.addr %s147, 4
        %s149 = scalar_lea.vmem %s0, %s148
      $region28: #{inception_2_forward.9} parent=23 // pred_fallthru
        _
    $region24: #{inception_2_forward.9} parent=5 // pred_fallthru
      _
    %p150 = scmp.le.s32.totalorder 1, %s9
    %p151 = scmp.lt.s32.totalorder %s9, 5
    %p152 = pnand %p150, %p151
    %p153 = pneg %p152
    // Predicated region
    $region29: #{inception_2_forward.9} parent=5 // pred_check
      _
    $region30: #{inception_2_forward.9} parent=5 // pred_check_branch
      %155 = sbr.rel (%p152) target = $region32
    $region31: #{inception_2_forward.9} parent=5 // pred_region
      %s156 = ssub.s32 %s9, 1
      %p157 = scmp.lt.s32.totalorder %s18, 1
      %s158 = scalar_select %p157, %s18, 1
      %s159 = smul.addr %s158, 54
      %s160 = smul.addr %s159, 4
      %s161 = scalar_lea.vmem %s0, %s160
      %p162 = pneg %p47
      %p163 = pneg %p44
      %p164 = pneg %p68
      %p165 = pneg %p65
      %p166 = pneg %p89
      %p167 = pneg %p86
      %p168 = pneg %p117
      %p169 = pneg %p114
      %s170 = smul.u32 8, %s19
      %p171 = scmp.lt.s32.totalorder %s18, 1
      %s172 = scalar_select %p171, %s18, 1
      %p173 = scmp.lt.s32.totalorder %s170, 15
      %s174 = scalar_select %p173, %s170, 15
      %s175 = smul.addr %s174, 2
      %s176 = smul.addr %s172, 32
      %s177 = sadd.s32 %s175, %s176
      %s178 = smul.addr %s177, 8
      %s179 = scalar_lea.vmem %s3, %s178
      %p180 = scmp.lt.s32.totalorder %s18, 1
      %s181 = scalar_select %p180, %s18, 1
      %s182 = smul.addr %s181, 54
      %s183 = smul.addr %s182, 4
      %s184 = scalar_lea.vmem %s0, %s183
      %s185 = smul.u32 8, %s19
      %p186 = scmp.lt.s32.totalorder %s18, 1
      %s187 = scalar_select %p186, %s18, 1
      %p188 = scmp.lt.s32.totalorder %s185, 15
      %s189 = scalar_select %p188, %s185, 15
      %s190 = smul.addr %s189, 2
      %s191 = smul.addr %s187, 32
      %s192 = sadd.s32 %s190, %s191
      %s193 = smul.addr %s192, 8
      %s194 = scalar_lea.vmem %s3, %s193
      %s195 = smul.u32 8, %s19
      %s197 = smul.u32 %s19, 8
      %s198 = smul.u32 %s197, 3
      %s199 = smul.addr %s198, 4
      %s200 = scalar_lea.vmem %s184, %s199
      %v201 = vld [vmem:[%s200] sm:$0xf]
      %v202 = vld [vmem:[%s200 + $0x4] sm:$0xf]
      %v203 = vld [vmem:[%s200 + $0x8] sm:$0x1]
      %v204 = vld [vmem:[%s200 + $0xc] sm:$0xf]
      %v205 = vld [vmem:[%s200 + $0x10] sm:$0xf]
      %v206 = vld [vmem:[%s200 + $0x14] sm:$0x1]
      %v207 = vld [vmem:[%s200 + $0x18] sm:$0xf]
      %v208 = vld [vmem:[%s200 + $0x1c] sm:$0xf]
      %v209 = vld [vmem:[%s200 + $0x20] sm:$0x1]
      %v210 = vld [vmem:[%s200 + $0x24] sm:$0xf]
      %v211 = vld [vmem:[%s200 + $0x28] sm:$0xf]
      %v212 = vld [vmem:[%s200 + $0x2c] sm:$0x1]
      %v213 = vld [vmem:[%s200 + $0x30] sm:$0xf]
      %v214 = vld [vmem:[%s200 + $0x34] sm:$0xf]
      %v215 = vld [vmem:[%s200 + $0x38] sm:$0x1]
      %v216 = vld [vmem:[%s200 + $0x3c] sm:$0xf]
      %v217 = vld [vmem:[%s200 + $0x40] sm:$0xf]
      %v218 = vld [vmem:[%s200 + $0x44] sm:$0x1]
      %v219 = vld [vmem:[%s200 + $0x48] sm:$0xf]
      %v220 = vld [vmem:[%s200 + $0x4c] sm:$0xf]
      %v221 = vld [vmem:[%s200 + $0x50] sm:$0x1]
      %v222 = vld [vmem:[%s200 + $0x54] sm:$0xf]
      %v223 = vld [vmem:[%s200 + $0x58] sm:$0xf]
      %v224 = vld [vmem:[%s200 + $0x5c] sm:$0x1]
      %v225 = vld [vmem:[%s200 + $0x60] sm:$0xf]
      %v226 = vld [vmem:[%s200 + $0x64] sm:$0xf]
      %v227 = vld [vmem:[%s200 + $0x68] sm:$0x1]
      %v228 = vld [vmem:[%s200 + $0x6c] sm:$0xf]
      %v229 = vld [vmem:[%s200 + $0x70] sm:$0xf]
      %v230 = vld [vmem:[%s200 + $0x74] sm:$0x1]
      %v231 = vunpack.c.l.bf16 %v201
      %v232 = vunpack.c.l.bf16 %v202
      %v233 = vunpack.c.l.bf16 %v203
      %v234 = vunpack.c.l.bf16 %v204
      %v235 = vunpack.c.l.bf16 %v205
      %v236 = vunpack.c.l.bf16 %v206
      %v237 = vunpack.c.l.bf16 %v207
      %v238 = vunpack.c.l.bf16 %v208
      %v239 = vunpack.c.l.bf16 %v209
      %v240 = vunpack.c.l.bf16 %v210
      %v241 = vunpack.c.l.bf16 %v211
      %v242 = vunpack.c.l.bf16 %v212
      %v243 = vunpack.c.l.bf16 %v213
      %v244 = vunpack.c.l.bf16 %v214
      %v245 = vunpack.c.l.bf16 %v215
      %v246 = vunpack.c.l.bf16 %v216
      %v247 = vunpack.c.l.bf16 %v217
      %v248 = vunpack.c.l.bf16 %v218
      %v249 = vunpack.c.l.bf16 %v219
      %v250 = vunpack.c.l.bf16 %v220
      %v251 = vunpack.c.l.bf16 %v221
      %v252 = vunpack.c.l.bf16 %v222
      %v253 = vunpack.c.l.bf16 %v223
      %v254 = vunpack.c.l.bf16 %v224
      %v255 = vunpack.c.l.bf16 %v225
      %v256 = vunpack.c.l.bf16 %v226
      %v257 = vunpack.c.l.bf16 %v227
      %v258 = vunpack.c.l.bf16 %v228
      %v259 = vunpack.c.l.bf16 %v229
      %v260 = vunpack.c.l.bf16 %v230
      %vm291 = vcmask 1046528
      %v292 = vrot.slane %v231, 1
      %v293 = vrot.slane %v232, 1
      %v294 = vsel %vm291, %v292, %v293
      %v295 = vrot.slane %v233, 1
      %v296 = vsel %vm291, %v293, %v295
      %v297 = vrot.slane %v234, 1
      %v298 = vrot.slane %v235, 1
      %v299 = vsel %vm291, %v297, %v298
      %v300 = vrot.slane %v236, 1
      %v301 = vsel %vm291, %v298, %v300
      %v302 = vrot.slane %v237, 1
      %v303 = vrot.slane %v238, 1
      %v304 = vsel %vm291, %v302, %v303
      %v305 = vrot.slane %v239, 1
      %v306 = vsel %vm291, %v303, %v305
      %v307 = vrot.slane %v240, 1
      %v308 = vrot.slane %v241, 1
      %v309 = vsel %vm291, %v307, %v308
      %v310 = vrot.slane %v242, 1
      %v311 = vsel %vm291, %v308, %v310
      %v312 = vrot.slane %v243, 1
      %v313 = vrot.slane %v244, 1
      %v314 = vsel %vm291, %v312, %v313
      %v315 = vrot.slane %v245, 1
      %v316 = vsel %vm291, %v313, %v315
      %v317 = vrot.slane %v246, 1
      %v318 = vrot.slane %v247, 1
      %v319 = vsel %vm291, %v317, %v318
      %v320 = vrot.slane %v248, 1
      %v321 = vsel %vm291, %v318, %v320
      %v322 = vrot.slane %v249, 1
      %v323 = vrot.slane %v250, 1
      %v324 = vsel %vm291, %v322, %v323
      %v325 = vrot.slane %v251, 1
      %v326 = vsel %vm291, %v323, %v325
      %v327 = vrot.slane %v252, 1
      %v328 = vrot.slane %v253, 1
      %v329 = vsel %vm291, %v327, %v328
      %v330 = vrot.slane %v254, 1
      %v331 = vsel %vm291, %v328, %v330
      %v332 = vrot.slane %v255, 1
      %v333 = vrot.slane %v256, 1
      %v334 = vsel %vm291, %v332, %v333
      %v335 = vrot.slane %v257, 1
      %v336 = vsel %vm291, %v333, %v335
      %v337 = vrot.slane %v258, 1
      %v338 = vrot.slane %v259, 1
      %v339 = vsel %vm291, %v337, %v338
      %v340 = vrot.slane %v260, 1
      %v341 = vsel %vm291, %v338, %v340
      %v362 = vmax.f32 %v231, %v294
      %v363 = vmax.f32 %v232, %v296
      %v364 = vmax.f32 %v234, %v299
      %v365 = vmax.f32 %v235, %v301
      %v366 = vmax.f32 %v237, %v304
      %v367 = vmax.f32 %v238, %v306
      %v368 = vmax.f32 %v240, %v309
      %v369 = vmax.f32 %v241, %v311
      %v370 = vmax.f32 %v243, %v314
      %v371 = vmax.f32 %v244, %v316
      %v372 = vmax.f32 %v246, %v319
      %v373 = vmax.f32 %v247, %v321
      %v374 = vmax.f32 %v249, %v324
      %v375 = vmax.f32 %v250, %v326
      %v376 = vmax.f32 %v252, %v329
      %v377 = vmax.f32 %v253, %v331
      %v378 = vmax.f32 %v255, %v334
      %v379 = vmax.f32 %v256, %v336
      %v380 = vmax.f32 %v258, %v339
      %v381 = vmax.f32 %v259, %v341
      %vm382 = vcmask 1045504
      %v383 = vrot.slane %v231, 2
      %v384 = vrot.slane %v232, 2
      %v385 = vsel %vm382, %v383, %v384
      %v386 = vrot.slane %v233, 2
      %v387 = vsel %vm382, %v384, %v386
      %v388 = vrot.slane %v234, 2
      %v389 = vrot.slane %v235, 2
      %v390 = vsel %vm382, %v388, %v389
      %v391 = vrot.slane %v236, 2
      %v392 = vsel %vm382, %v389, %v391
      %v393 = vrot.slane %v237, 2
      %v394 = vrot.slane %v238, 2
      %v395 = vsel %vm382, %v393, %v394
      %v396 = vrot.slane %v239, 2
      %v397 = vsel %vm382, %v394, %v396
      %v398 = vrot.slane %v240, 2
      %v399 = vrot.slane %v241, 2
      %v400 = vsel %vm382, %v398, %v399
      %v401 = vrot.slane %v242, 2
      %v402 = vsel %vm382, %v399, %v401
      %v403 = vrot.slane %v243, 2
      %v404 = vrot.slane %v244, 2
      %v405 = vsel %vm382, %v403, %v404
      %v406 = vrot.slane %v245, 2
      %v407 = vsel %vm382, %v404, %v406
      %v408 = vrot.slane %v246, 2
      %v409 = vrot.slane %v247, 2
      %v410 = vsel %vm382, %v408, %v409
      %v411 = vrot.slane %v248, 2
      %v412 = vsel %vm382, %v409, %v411
      %v413 = vrot.slane %v249, 2
      %v414 = vrot.slane %v250, 2
      %v415 = vsel %vm382, %v413, %v414
      %v416 = vrot.slane %v251, 2
      %v417 = vsel %vm382, %v414, %v416
      %v418 = vrot.slane %v252, 2
      %v419 = vrot.slane %v253, 2
      %v420 = vsel %vm382, %v418, %v419
      %v421 = vrot.slane %v254, 2
      %v422 = vsel %vm382, %v419, %v421
      %v423 = vrot.slane %v255, 2
      %v424 = vrot.slane %v256, 2
      %v425 = vsel %vm382, %v423, %v424
      %v426 = vrot.slane %v257, 2
      %v427 = vsel %vm382, %v424, %v426
      %v428 = vrot.slane %v258, 2
      %v429 = vrot.slane %v259, 2
      %v430 = vsel %vm382, %v428, %v429
      %v431 = vrot.slane %v260, 2
      %v432 = vsel %vm382, %v429, %v431
      %v453 = vmax.f32 %v362, %v385
      %v454 = vmax.f32 %v363, %v387
      %v455 = vmax.f32 %v364, %v390
      %v456 = vmax.f32 %v365, %v392
      %v457 = vmax.f32 %v366, %v395
      %v458 = vmax.f32 %v367, %v397
      %v459 = vmax.f32 %v368, %v400
      %v460 = vmax.f32 %v369, %v402
      %v461 = vmax.f32 %v370, %v405
      %v462 = vmax.f32 %v371, %v407
      %v463 = vmax.f32 %v372, %v410
      %v464 = vmax.f32 %v373, %v412
      %v465 = vmax.f32 %v374, %v415
      %v466 = vmax.f32 %v375, %v417
      %v467 = vmax.f32 %v376, %v420
      %v468 = vmax.f32 %v377, %v422
      %v469 = vmax.f32 %v378, %v425
      %v470 = vmax.f32 %v379, %v427
      %v471 = vmax.f32 %v380, %v430
      %v472 = vmax.f32 %v381, %v432
      %v473 = vmax.f32 %v453, %v455
      %v474 = vmax.f32 %v454, %v456
      %v475 = vmax.f32 %v455, %v457
      %v476 = vmax.f32 %v456, %v458
      %v477 = vmax.f32 %v457, %v459
      %v478 = vmax.f32 %v458, %v460
      %v479 = vmax.f32 %v459, %v461
      %v480 = vmax.f32 %v460, %v462
      %v481 = vmax.f32 %v461, %v463
      %v482 = vmax.f32 %v462, %v464
      %v483 = vmax.f32 %v463, %v465
      %v484 = vmax.f32 %v464, %v466
      %v485 = vmax.f32 %v465, %v467
      %v486 = vmax.f32 %v466, %v468
      %v487 = vmax.f32 %v467, %v469
      %v488 = vmax.f32 %v468, %v470
      %v489 = vmax.f32 %v473, %v457
      %v490 = vmax.f32 %v474, %v458
      %v491 = vmax.f32 %v475, %v459
      %v492 = vmax.f32 %v476, %v460
      %v493 = vmax.f32 %v477, %v461
      %v494 = vmax.f32 %v478, %v462
      %v495 = vmax.f32 %v479, %v463
      %v496 = vmax.f32 %v480, %v464
      %v497 = vmax.f32 %v481, %v465
      %v498 = vmax.f32 %v482, %v466
      %v499 = vmax.f32 %v483, %v467
      %v500 = vmax.f32 %v484, %v468
      %v501 = vmax.f32 %v485, %v469
      %v502 = vmax.f32 %v486, %v470
      %v503 = vmax.f32 %v487, %v471
      %v504 = vmax.f32 %v488, %v472
      %v505 = vpack.c.bf16 %v490, %v489
      %v506 = vpack.c.bf16 %v492, %v491
      %v507 = vpack.c.bf16 %v494, %v493
      %v508 = vpack.c.bf16 %v496, %v495
      %v509 = vpack.c.bf16 %v498, %v497
      %v510 = vpack.c.bf16 %v500, %v499
      %v511 = vpack.c.bf16 %v502, %v501
      %v512 = vpack.c.bf16 %v504, %v503
      %v513 = vld [vmem:[%s1] sm:$0xf]
      %v514 = vld [vmem:[%s2] sm:$0x1]
      %v516 = vperm.slane %v514, 0
      %vm518 = vcmask 64512
      %v520 = vsel %vm518, %v505, 0
      %v523 = vsel %vm518, %v506, 0
      %v526 = vsel %vm518, %v507, 0
      %v529 = vsel %vm518, %v508, 0
      %v532 = vsel %vm518, %v509, 0
      %v535 = vsel %vm518, %v510, 0
      %v538 = vsel %vm518, %v511, 0
      %v541 = vsel %vm518, %v512, 0
      %vm543 = vcmask 1043456
      %v545 = vsel %vm543, %v513, 0
      %547 = vmatpush.bf16.msra.mxu0 0
      %548 = vmatpush.bf16.msra.mxu0 0
      %549 = vmatpush.bf16.msra.mxu0 0
      %550 = vmatpush.bf16.msra.mxu0 0
      %551 = vmatpush.bf16.msra.mxu0 0
      %552 = vmatpush.bf16.msra.mxu0 0
      %553 = vmatpush.bf16.msra.mxu0 0
      %554 = vmatpush.bf16.msra.mxu0 %v545
      %555 = vmatmul.bf16.gmra.mxu0 %v520
      %v556 = vpop.f32.mrf.mxu0
      %v557 = vadd.f32 %v516, %v556
      %v558 = vpop.f32.mrf.mxu0
      %v559 = vadd.f32 %v516, %v558
      %560 = vmatmul.bf16.gmra.mxu0 %v523
      %v561 = vpop.f32.mrf.mxu0
      %v562 = vadd.f32 %v516, %v561
      %v563 = vpop.f32.mrf.mxu0
      %v564 = vadd.f32 %v516, %v563
      %565 = vmatmul.bf16.gmra.mxu0 %v526
      %v566 = vpop.f32.mrf.mxu0
      %v567 = vadd.f32 %v516, %v566
      %v568 = vpop.f32.mrf.mxu0
      %v569 = vadd.f32 %v516, %v568
      %570 = vmatmul.bf16.gmra.mxu0 %v529
      %v571 = vpop.f32.mrf.mxu0
      %v572 = vadd.f32 %v516, %v571
      %v573 = vpop.f32.mrf.mxu0
      %v574 = vadd.f32 %v516, %v573
      %575 = vmatmul.bf16.gmra.mxu0 %v532
      %v576 = vpop.f32.mrf.mxu0
      %v577 = vadd.f32 %v516, %v576
      %v578 = vpop.f32.mrf.mxu0
      %v579 = vadd.f32 %v516, %v578
      %580 = vmatmul.bf16.gmra.mxu0 %v535
      %v581 = vpop.f32.mrf.mxu0
      %v582 = vadd.f32 %v516, %v581
      %v583 = vpop.f32.mrf.mxu0
      %v584 = vadd.f32 %v516, %v583
      %585 = vmatmul.bf16.gmra.mxu0 %v538
      %v586 = vpop.f32.mrf.mxu0
      %v587 = vadd.f32 %v516, %v586
      %v588 = vpop.f32.mrf.mxu0
      %v589 = vadd.f32 %v516, %v588
      %590 = vmatmul.bf16.gmra.mxu0 %v541
      %v591 = vpop.f32.mrf.mxu0
      %v592 = vadd.f32 %v516, %v591
      %v593 = vpop.f32.mrf.mxu0
      %v594 = vadd.f32 %v516, %v593
      %595 = vdwg.mxu0
      %v596 = vmax.f32 %v557, 0.0
      %v597 = vmax.f32 %v559, 0.0
      %v598 = vmax.f32 %v562, 0.0
      %v599 = vmax.f32 %v564, 0.0
      %v600 = vmax.f32 %v567, 0.0
      %v601 = vmax.f32 %v569, 0.0
      %v602 = vmax.f32 %v572, 0.0
      %v603 = vmax.f32 %v574, 0.0
      %v604 = vmax.f32 %v577, 0.0
      %v605 = vmax.f32 %v579, 0.0
      %v606 = vmax.f32 %v582, 0.0
      %v607 = vmax.f32 %v584, 0.0
      %v608 = vmax.f32 %v587, 0.0
      %v609 = vmax.f32 %v589, 0.0
      %v610 = vmax.f32 %v592, 0.0
      %v611 = vmax.f32 %v594, 0.0
      %612 = vst.msk [vmem:[%s194] sm:$0xff] %vm518, %v596
      %613 = vst.msk [vmem:[%s194 + $0x8] sm:$0xff] %vm518, %v597
      %614 = vst.msk [vmem:[%s194 + $0x10] sm:$0xff] %vm518, %v598
      %615 = vst.msk [vmem:[%s194 + $0x18] sm:$0xff] %vm518, %v599
      %616 = vst.msk [vmem:[%s194 + $0x20] sm:$0xff] %vm518, %v600
      %617 = vst.msk [vmem:[%s194 + $0x28] sm:$0xff] %vm518, %v601
      %618 = vst.msk [vmem:[%s194 + $0x30] sm:$0xff] %vm518, %v602
      %619 = vst.msk [vmem:[%s194 + $0x38] sm:$0xff] %vm518, %v603
      %620 = vst.msk [vmem:[%s194 + $0x40] sm:$0xff] %vm518, %v604
      %621 = vst.msk [vmem:[%s194 + $0x48] sm:$0xff] %vm518, %v605
      %622 = vst.msk [vmem:[%s194 + $0x50] sm:$0xff] %vm518, %v606
      %623 = vst.msk [vmem:[%s194 + $0x58] sm:$0xff] %vm518, %v607
      %624 = vst.msk [vmem:[%s194 + $0x60] sm:$0xff] %vm518, %v608
      %625 = vst.msk [vmem:[%s194 + $0x68] sm:$0xff] %vm518, %v609
      %626 = vst.msk [vmem:[%s194 + $0x70] sm:$0xff] %vm518, %v610
      %627 = vst.msk [vmem:[%s194 + $0x78] sm:$0xff] %vm518, %v611
      %s628 = smul.u32 8, %s19
      %p629 = scmp.lt.s32.totalorder %s18, 1
      %s630 = scalar_select %p629, %s18, 1
      %p631 = scmp.lt.s32.totalorder %s628, 15
      %s632 = scalar_select %p631, %s628, 15
      %s633 = smul.addr %s632, 2
      %s634 = smul.addr %s630, 32
      %s635 = sadd.s32 %s633, %s634
      %s636 = smul.addr %s635, 8
      %s637 = scalar_lea.vmem %s3, %s636
      // Predicated region
      $region33: #{inception_2_forward.9} parent=31 // pred_check
        %p638 = pneg %p114
      $region34: #{inception_2_forward.9} parent=31 // pred_check_branch
        %640 = sbr.rel (%p638) target = $region36
      $region35: #{inception_2_forward.9} parent=31 // pred_region
        %s641 = smul.u32 8, %s19
      $region36: #{inception_2_forward.9} parent=31 // pred_fallthru
        _
    $region32: #{inception_2_forward.9} parent=5 // pred_fallthru
      _
    %p642 = scmp.le.s32.totalorder 2, %s9
    // Predicated region
    $region37: #{inception_2_forward.9} parent=5 // pred_check
      %p643 = pneg %p642
    $region38: #{inception_2_forward.9} parent=5 // pred_check_branch
      %645 = sbr.rel (%p643) target = $region40
    $region39: #{inception_2_forward.9} parent=5 // pred_region
      %s646 = ssub.s32 %s9, 2
      // Predicated region
      $region41: #{inception_2_forward.9} parent=39 // pred_check
        %p647 = pneg %p120
      $region42: #{inception_2_forward.9} parent=39 // pred_check_branch
        %649 = sbr.rel (%p647) target = $region44
      $region43: #{inception_2_forward.9} parent=39 // pred_region
        %s650 = smul.u32 8, %s21
        %p651 = scmp.lt.s32.totalorder %s20, 1
        %s652 = scalar_select %p651, %s20, 1
        %p653 = scmp.lt.s32.totalorder %s650, 15
        %s654 = scalar_select %p653, %s650, 15
        %s655 = smul.addr %s654, 2
        %s656 = smul.addr %s652, 32
        %s657 = sadd.s32 %s655, %s656
        %s658 = smul.addr %s657, 8
        %s659 = scalar_lea.vmem %s3, %s658
      $region44: #{inception_2_forward.9} parent=39 // pred_fallthru
        _
    $region40: #{inception_2_forward.9} parent=5 // pred_fallthru
      _
  $region6: #{inception_2_forward.9} parent=0 // loop_footer
    %s13 = sadd.s32 1, %s9
  $region7: #{inception_2_forward.9} parent=0 // loop_footer_branch
    %8 = sbr.rel target = $region3
  $region8: #{inception_2_forward.9} parent=0 // loop_exit
    _

// kernel: inception_2_forward.6
$region0: #{inception_2_forward.6}
  #allocation0 [shape = 'u32[]', space=smem, size = 0x4, offset = 0x4, fixed_abs, tag = 'smem constant byte address 0x4 - core index']
  #allocation1 [shape = 'u32[72,128]{1,0:T(1,128)}', space=vmem, size = 0x9000, scoped, tag = 'internal scratch']
  %s0 = inlined_call_operand.vmem [shape: bf16[2,18,18,8], index: 0, kind: input, shape index: {}]
  %s1 = inlined_call_operand.vmem [shape: bf16[72,16], index: 1, kind: input, shape index: {}]
  %s2 = inlined_call_operand.vmem [shape: f32[1,16], index: 2, kind: input, shape index: {}]
  %s3 = inlined_call_operand.vmem [shape: f32[2,16,16,16], index: 3, kind: output, shape index: {}]
  %s4 = sld [smem:[#allocation0]]
  $region45: #{inception_2_forward.6} parent=0
    _
  %s6 = ssub.s32 1, %s4
  %s7 = scalar_select 0, %s6, %s4
  loop: start=0, step=1, limit=6
  $region2: #{inception_2_forward.6} parent=0 // loop_pre_header
    _
  $region3: #{inception_2_forward.6} parent=0 // loop_header
    %s9 = sphi 0, %s13
    %p10 = scmp.ge.s32.totalorder %s9, 6
    %s16 = sphi 0, %s28
    %s17 = sphi 0, %s24
    %s18 = sphi 0, %s16
    %s19 = sphi 0, %s17
    %s20 = sphi 0, %s18
    %s21 = sphi 0, %s19
    %s31 = sphi 0, %s33
    %s34 = sphi 0, %s31
    %s35 = sphi 0, %s34
    %s51 = sphi 0, %s35
    %s55 = sphi 0, %s55
    %s57 = sphi 0, %s55
    %s58 = sphi 0, %s57
    %s72 = sphi 0, %s58
    %s76 = sphi 0, %s76
    %s78 = sphi 0, %s76
    %s79 = sphi 0, %s78
    %s93 = sphi 0, %s79
    %s101 = sphi 0, %s103
    %s104 = sphi 0, %s101
    %s105 = sphi 0, %s104
    %s121 = sphi 0, %s105
  $region4: #{inception_2_forward.6} parent=0 // loop_header_branch
    %12 = sbr.rel (%p10) target = $region8
  $region5: #{inception_2_forward.6} parent=0 // loop_body
    %s14 = ssub.s32 %s9, 1
    %s15 = ssub.s32 %s9, 2
    %s22 = sadd.s32 1, %s17
    %p23 = scmp.ge.s32.totalorder %s22, 2
    %s24 = scalar_select %p23, 0, %s22
    %s25 = sadd.s32 1, %s16
    %s26 = scalar_select %p23, %s25, %s16
    %p27 = scmp.ge.s32.totalorder %s26, 2
    %s28 = scalar_select %p27, 0, %s26
    %s29 = ssub.s32 %s16, %s28
    %p30 = scmp.eq.s32.totalorder %s29, 0
    %s32 = sadd.s32 %s31, 1
    %s33 = scalar_select %p30, %s31, %s32
    %p36 = pneg %p30
    %p37 = scmp.eq.s32.totalorder %s9, 3
    %p38 = por %p36, %p37
    %p39 = scmp.ne.s32.totalorder %s31, %s34
    %p40 = scmp.eq.s32.totalorder %s9, 0
    %p41 = por %p39, %p40
    %p42 = scmp.ne.s32.totalorder %s31, %s34
    %p43 = scmp.eq.s32.totalorder %s14, 3
    %p44 = por %p42, %p43
    %p45 = scmp.ne.s32.totalorder %s34, %s35
    %p46 = scmp.eq.s32.totalorder %s14, 0
    %p47 = por %p45, %p46
    %p48 = scmp.ne.s32.totalorder %s34, %s35
    %p49 = scmp.eq.s32.totalorder %s15, 3
    %p50 = por %p48, %p49
    %p52 = scmp.ne.s32.totalorder %s35, %s51
    %p53 = scmp.eq.s32.totalorder %s15, 0
    %p54 = por %p52, %p53
    %s56 = sadd.s32 %s55, 1
    %p59 = scmp.eq.s32.totalorder %s9, 3
    %p60 = scmp.ne.s32.totalorder %s55, %s57
    %p61 = scmp.eq.s32.totalorder %s9, 0
    %p62 = por %p60, %p61
    %p63 = scmp.ne.s32.totalorder %s55, %s57
    %p64 = scmp.eq.s32.totalorder %s14, 3
    %p65 = por %p63, %p64
    %p66 = scmp.ne.s32.totalorder %s57, %s58
    %p67 = scmp.eq.s32.totalorder %s14, 0
    %p68 = por %p66, %p67
    %p69 = scmp.ne.s32.totalorder %s57, %s58
    %p70 = scmp.eq.s32.totalorder %s15, 3
    %p71 = por %p69, %p70
    %p73 = scmp.ne.s32.totalorder %s58, %s72
    %p74 = scmp.eq.s32.totalorder %s15, 0
    %p75 = por %p73, %p74
    %s77 = sadd.s32 %s76, 1
    %p80 = scmp.eq.s32.totalorder %s9, 3
    %p81 = scmp.ne.s32.totalorder %s76, %s78
    %p82 = scmp.eq.s32.totalorder %s9, 0
    %p83 = por %p81, %p82
    %p84 = scmp.ne.s32.totalorder %s76, %s78
    %p85 = scmp.eq.s32.totalorder %s14, 3
    %p86 = por %p84, %p85
    %p87 = scmp.ne.s32.totalorder %s78, %s79
    %p88 = scmp.eq.s32.totalorder %s14, 0
    %p89 = por %p87, %p88
    %p90 = scmp.ne.s32.totalorder %s78, %s79
    %p91 = scmp.eq.s32.totalorder %s15, 3
    %p92 = por %p90, %p91
    %p94 = scmp.ne.s32.totalorder %s79, %s93
    %p95 = scmp.eq.s32.totalorder %s15, 0
    %p96 = por %p94, %p95
    %s97 = ssub.s32 %s16, %s28
    %s98 = ssub.s32 %s17, %s24
    %s99 = sor.u32 %s97, %s98
    %p100 = scmp.eq.s32.totalorder %s99, 0
    %s102 = sadd.s32 %s101, 1
    %s103 = scalar_select %p100, %s101, %s102
    %p106 = pneg %p100
    %p107 = scmp.eq.s32.totalorder %s9, 3
    %p108 = por %p106, %p107
    %p109 = scmp.ne.s32.totalorder %s101, %s104
    %p110 = scmp.eq.s32.totalorder %s9, 0
    %p111 = por %p109, %p110
    %p112 = scmp.ne.s32.totalorder %s101, %s104
    %p113 = scmp.eq.s32.totalorder %s14, 3
    %p114 = por %p112, %p113
    %p115 = scmp.ne.s32.totalorder %s104, %s105
    %p116 = scmp.eq.s32.totalorder %s14, 0
    %p117 = por %p115, %p116
    %p118 = scmp.ne.s32.totalorder %s104, %s105
    %p119 = scmp.eq.s32.totalorder %s15, 3
    %p120 = por %p118, %p119
    %p122 = scmp.ne.s32.totalorder %s105, %s121
    %p123 = scmp.eq.s32.totalorder %s15, 0
    %p124 = por %p122, %p123
    %p125 = scmp.le.s32.totalorder 1, %s9
    %p126 = scmp.lt.s32.totalorder %s9, 5
    %p127 = pnand %p125, %p126
    %p128 = pneg %p127
    // Predicated region
    $region9: #{inception_2_forward.6} parent=5 // pred_check
      _
    $region10: #{inception_2_forward.6} parent=5 // pred_check_branch
      %130 = sbr.rel (%p127) target = $region12
    $region11: #{inception_2_forward.6} parent=5 // pred_region
      %s131 = ssub.s32 %s9, 1
      // Predicated region
      $region13: #{inception_2_forward.6} parent=11 // pred_check
        %p132 = pneg %p68
      $region14: #{inception_2_forward.6} parent=11 // pred_check_branch
        %134 = sbr.rel (%p132) target = $region16
      $region15: #{inception_2_forward.6} parent=11 // pred_region
        _
      $region16: #{inception_2_forward.6} parent=11 // pred_fallthru
        _
      // Predicated region
      $region17: #{inception_2_forward.6} parent=11 // pred_check
        %p135 = pneg %p89
      $region18: #{inception_2_forward.6} parent=11 // pred_check_branch
        %137 = sbr.rel (%p135) target = $region20
      $region19: #{inception_2_forward.6} parent=11 // pred_region
        _
      $region20: #{inception_2_forward.6} parent=11 // pred_fallthru
        _
    $region12: #{inception_2_forward.6} parent=5 // pred_fallthru
      _
    %p138 = scmp.lt.s32.totalorder %s9, 4
    // Predicated region
    $region21: #{inception_2_forward.6} parent=5 // pred_check
      %p139 = pneg %p138
    $region22: #{inception_2_forward.6} parent=5 // pred_check_branch
      %141 = sbr.rel (%p139) target = $region24
    $region23: #{inception_2_forward.6} parent=5 // pred_region
      // Predicated region
      $region25: #{inception_2_forward.6} parent=23 // pred_check
        %p142 = pneg %p41
      $region26: #{inception_2_forward.6} parent=23 // pred_check_branch
        %144 = sbr.rel (%p142) target = $region28
      $region27: #{inception_2_forward.6} parent=23 // pred_region
        %p145 = scmp.lt.s32.totalorder %s16, 1
        %s146 = scalar_select %p145, %s16, 1
        %s147 = smul.addr %s146, 54
        %s148 = smul.addr %s147, 4
        %s149 = scalar_lea.vmem %s0, %s148
      $region28: #{inception_2_forward.6} parent=23 // pred_fallthru
        _
    $region24: #{inception_2_forward.6} parent=5 // pred_fallthru
      _
    %p150 = scmp.le.s32.totalorder 1, %s9
    %p151 = scmp.lt.s32.totalorder %s9, 5
    %p152 = pnand %p150, %p151
    %p153 = pneg %p152
    // Predicated region
    $region29: #{inception_2_forward.6} parent=5 // pred_check
      _
    $region30: #{inception_2_forward.6} parent=5 // pred_check_branch
      %155 = sbr.rel (%p152) target = $region32
    $region31: #{inception_2_forward.6} parent=5 // pred_region
      %s156 = ssub.s32 %s9, 1
      %p157 = scmp.lt.s32.totalorder %s18, 1
      %s158 = scalar_select %p157, %s18, 1
      %s159 = smul.addr %s158, 54
      %s160 = smul.addr %s159, 4
      %s161 = scalar_lea.vmem %s0, %s160
      %p162 = pneg %p47
      %p163 = pneg %p44
      %p164 = pneg %p68
      %p165 = pneg %p65
      %p166 = pneg %p89
      %p167 = pneg %p86
      %p168 = pneg %p117
      %p169 = pneg %p114
      %s170 = smul.u32 8, %s19
      %p171 = scmp.lt.s32.totalorder %s18, 1
      %s172 = scalar_select %p171, %s18, 1
      %p173 = scmp.lt.s32.totalorder %s170, 15
      %s174 = scalar_select %p173, %s170, 15
      %s175 = smul.addr %s174, 2
      %s176 = smul.addr %s172, 32
      %s177 = sadd.s32 %s175, %s176
      %s178 = smul.addr %s177, 8
      %s179 = scalar_lea.vmem %s3, %s178
      %p180 = scmp.lt.s32.totalorder %s18, 1
      %s181 = scalar_select %p180, %s18, 1
      %s182 = smul.addr %s181, 54
      %s183 = smul.addr %s182, 4
      %s184 = scalar_lea.vmem %s0, %s183
      %s185 = smul.u32 8, %s19
      %p186 = scmp.lt.s32.totalorder %s18, 1
      %s187 = scalar_select %p186, %s18, 1
      %p188 = scmp.lt.s32.totalorder %s185, 15
      %s189 = scalar_select %p188, %s185, 15
      %s190 = smul.addr %s189, 2
      %s191 = smul.addr %s187, 32
      %s192 = sadd.s32 %s190, %s191
      %s193 = smul.addr %s192, 8
      %s194 = scalar_lea.vmem %s3, %s193
      %s195 = smul.u32 8, %s19
      %s197 = smul.u32 %s19, 8
      %s198 = smul.u32 %s197, 3
      %s199 = smul.addr %s198, 4
      %s200 = scalar_lea.vmem %s184, %s199
      %v201 = vld [vmem:[%s200] sm:$0xf]
      %v202 = vld [vmem:[%s200 + $0x4] sm:$0xf]
      %v203 = vld [vmem:[%s200 + $0x8] sm:$0x1]
      %v204 = vld [vmem:[%s200 + $0xc] sm:$0xf]
      %v205 = vld [vmem:[%s200 + $0x10] sm:$0xf]
      %v206 = vld [vmem:[%s200 + $0x14] sm:$0x1]
      %v207 = vld [vmem:[%s200 + $0x18] sm:$0xf]
      %v208 = vld [vmem:[%s200 + $0x1c] sm:$0xf]
      %v209 = vld [vmem:[%s200 + $0x20] sm:$0x1]
      %v210 = vld [vmem:[%s200 + $0x24] sm:$0xf]
      %v211 = vld [vmem:[%s200 + $0x28] sm:$0xf]
      %v212 = vld [vmem:[%s200 + $0x2c] sm:$0x1]
      %v213 = vld [vmem:[%s200 + $0x30] sm:$0xf]
      %v214 = vld [vmem:[%s200 + $0x34] sm:$0xf]
      %v215 = vld [vmem:[%s200 + $0x38] sm:$0x1]
      %v216 = vld [vmem:[%s200 + $0x3c] sm:$0xf]
      %v217 = vld [vmem:[%s200 + $0x40] sm:$0xf]
      %v218 = vld [vmem:[%s200 + $0x44] sm:$0x1]
      %v219 = vld [vmem:[%s200 + $0x48] sm:$0xf]
      %v220 = vld [vmem:[%s200 + $0x4c] sm:$0xf]
      %v221 = vld [vmem:[%s200 + $0x50] sm:$0x1]
      %v222 = vld [vmem:[%s200 + $0x54] sm:$0xf]
      %v223 = vld [vmem:[%s200 + $0x58] sm:$0xf]
      %v224 = vld [vmem:[%s200 + $0x5c] sm:$0x1]
      %v225 = vld [vmem:[%s200 + $0x60] sm:$0xf]
      %v226 = vld [vmem:[%s200 + $0x64] sm:$0xf]
      %v227 = vld [vmem:[%s200 + $0x68] sm:$0x1]
      %v228 = vld [vmem:[%s200 + $0x6c] sm:$0xf]
      %v229 = vld [vmem:[%s200 + $0x70] sm:$0xf]
      %v230 = vld [vmem:[%s200 + $0x74] sm:$0x1]
      %v231 = vunpack.c.l.bf16 %v201
      %v232 = vunpack.c.l.bf16 %v202
      %v233 = vunpack.c.l.bf16 %v203
      %v234 = vunpack.c.l.bf16 %v204
      %v235 = vunpack.c.l.bf16 %v205
      %v236 = vunpack.c.l.bf16 %v206
      %v237 = vunpack.c.l.bf16 %v207
      %v238 = vunpack.c.l.bf16 %v208
      %v239 = vunpack.c.l.bf16 %v209
      %v240 = vunpack.c.l.bf16 %v210
      %v241 = vunpack.c.l.bf16 %v211
      %v242 = vunpack.c.l.bf16 %v212
      %v243 = vunpack.c.l.bf16 %v213
      %v244 = vunpack.c.l.bf16 %v214
      %v245 = vunpack.c.l.bf16 %v215
      %v246 = vunpack.c.l.bf16 %v216
      %v247 = vunpack.c.l.bf16 %v217
      %v248 = vunpack.c.l.bf16 %v218
      %v249 = vunpack.c.l.bf16 %v219
      %v250 = vunpack.c.l.bf16 %v220
      %v251 = vunpack.c.l.bf16 %v221
      %v252 = vunpack.c.l.bf16 %v222
      %v253 = vunpack.c.l.bf16 %v223
      %v254 = vunpack.c.l.bf16 %v224
      %v255 = vunpack.c.l.bf16 %v225
      %v256 = vunpack.c.l.bf16 %v226
      %v257 = vunpack.c.l.bf16 %v227
      %v258 = vunpack.c.l.bf16 %v228
      %v259 = vunpack.c.l.bf16 %v229
      %v260 = vunpack.c.l.bf16 %v230
      %vm285 = vcmask 1046528
      %v286 = vrot.slane %v231, 1
      %v287 = vrot.slane %v232, 1
      %v288 = vsel %vm285, %v286, %v287
      %v289 = vrot.slane %v233, 1
      %v290 = vsel %vm285, %v287, %v289
      %v291 = vrot.slane %v234, 1
      %v292 = vrot.slane %v235, 1
      %v293 = vsel %vm285, %v291, %v292
      %v294 = vrot.slane %v236, 1
      %v295 = vsel %vm285, %v292, %v294
      %v296 = vrot.slane %v237, 1
      %v297 = vrot.slane %v238, 1
      %v298 = vsel %vm285, %v296, %v297
      %v299 = vrot.slane %v239, 1
      %v300 = vsel %vm285, %v297, %v299
      %v301 = vrot.slane %v240, 1
      %v302 = vrot.slane %v241, 1
      %v303 = vsel %vm285, %v301, %v302
      %v304 = vrot.slane %v242, 1
      %v305 = vsel %vm285, %v302, %v304
      %v306 = vrot.slane %v243, 1
      %v307 = vrot.slane %v244, 1
      %v308 = vsel %vm285, %v306, %v307
      %v309 = vrot.slane %v245, 1
      %v310 = vsel %vm285, %v307, %v309
      %v311 = vrot.slane %v246, 1
      %v312 = vrot.slane %v247, 1
      %v313 = vsel %vm285, %v311, %v312
      %v314 = vrot.slane %v248, 1
      %v315 = vsel %vm285, %v312, %v314
      %v316 = vrot.slane %v249, 1
      %v317 = vrot.slane %v250, 1
      %v318 = vsel %vm285, %v316, %v317
      %v319 = vrot.slane %v251, 1
      %v320 = vsel %vm285, %v317, %v319
      %v321 = vrot.slane %v252, 1
      %v322 = vrot.slane %v253, 1
      %v323 = vsel %vm285, %v321, %v322
      %v324 = vrot.slane %v254, 1
      %v325 = vsel %vm285, %v322, %v324
      %vm326 = vcmask 1045504
      %v327 = vrot.slane %v231, 2
      %v328 = vrot.slane %v232, 2
      %v329 = vsel %vm326, %v327, %v328
      %v330 = vrot.slane %v233, 2
      %v331 = vsel %vm326, %v328, %v330
      %v332 = vrot.slane %v234, 2
      %v333 = vrot.slane %v235, 2
      %v334 = vsel %vm326, %v332, %v333
      %v335 = vrot.slane %v236, 2
      %v336 = vsel %vm326, %v333, %v335
      %v337 = vrot.slane %v237, 2
      %v338 = vrot.slane %v238, 2
      %v339 = vsel %vm326, %v337, %v338
      %v340 = vrot.slane %v239, 2
      %v341 = vsel %vm326, %v338, %v340
      %v342 = vrot.slane %v240, 2
      %v343 = vrot.slane %v241, 2
      %v344 = vsel %vm326, %v342, %v343
      %v345 = vrot.slane %v242, 2
      %v346 = vsel %vm326, %v343, %v345
      %v347 = vrot.slane %v243, 2
      %v348 = vrot.slane %v244, 2
      %v349 = vsel %vm326, %v347, %v348
      %v350 = vrot.slane %v245, 2
      %v351 = vsel %vm326, %v348, %v350
      %v352 = vrot.slane %v246, 2
      %v353 = vrot.slane %v247, 2
      %v354 = vsel %vm326, %v352, %v353
      %v355 = vrot.slane %v248, 2
      %v356 = vsel %vm326, %v353, %v355
      %v357 = vrot.slane %v249, 2
      %v358 = vrot.slane %v250, 2
      %v359 = vsel %vm326, %v357, %v358
      %v360 = vrot.slane %v251, 2
      %v361 = vsel %vm326, %v358, %v360
      %v362 = vrot.slane %v252, 2
      %v363 = vrot.slane %v253, 2
      %v364 = vsel %vm326, %v362, %v363
      %v365 = vrot.slane %v254, 2
      %v366 = vsel %vm326, %v363, %v365
      %v370 = vrot.slane %v255, 1
      %v371 = vrot.slane %v256, 1
      %v372 = vsel %vm285, %v370, %v371
      %v373 = vrot.slane %v257, 1
      %v374 = vsel %vm285, %v371, %v373
      %v375 = vrot.slane %v255, 2
      %v376 = vrot.slane %v256, 2
      %v377 = vsel %vm326, %v375, %v376
      %v378 = vrot.slane %v257, 2
      %v379 = vsel %vm326, %v376, %v378
      %v383 = vrot.slane %v258, 1
      %v384 = vrot.slane %v259, 1
      %v385 = vsel %vm285, %v383, %v384
      %v386 = vrot.slane %v260, 1
      %v387 = vsel %vm285, %v384, %v386
      %v388 = vrot.slane %v258, 2
      %v389 = vrot.slane %v259, 2
      %v390 = vsel %vm326, %v388, %v389
      %v391 = vrot.slane %v260, 2
      %v392 = vsel %vm326, %v389, %v391
      %393 = vrot.lane.b32.xlu0 %v288, 8
      %v394 = vpop.permute.xlu0 %393
      %395 = vrot.lane.b32.xlu0 %v290, 8
      %v396 = vpop.permute.xlu0 %395
      %397 = vrot.lane.b32.xlu0 %v293, 8
      %v398 = vpop.permute.xlu0 %397
      %399 = vrot.lane.b32.xlu0 %v295, 8
      %v400 = vpop.permute.xlu0 %399
      %401 = vrot.lane.b32.xlu0 %v298, 8
      %v402 = vpop.permute.xlu0 %401
      %403 = vrot.lane.b32.xlu0 %v300, 8
      %v404 = vpop.permute.xlu0 %403
      %405 = vrot.lane.b32.xlu0 %v303, 8
      %v406 = vpop.permute.xlu0 %405
      %407 = vrot.lane.b32.xlu0 %v305, 8
      %v408 = vpop.permute.xlu0 %407
      %409 = vrot.lane.b32.xlu0 %v308, 8
      %v410 = vpop.permute.xlu0 %409
      %411 = vrot.lane.b32.xlu0 %v310, 8
      %v412 = vpop.permute.xlu0 %411
      %413 = vrot.lane.b32.xlu0 %v313, 8
      %v414 = vpop.permute.xlu0 %413
      %415 = vrot.lane.b32.xlu0 %v315, 8
      %v416 = vpop.permute.xlu0 %415
      %417 = vrot.lane.b32.xlu0 %v318, 8
      %v418 = vpop.permute.xlu0 %417
      %419 = vrot.lane.b32.xlu0 %v320, 8
      %v420 = vpop.permute.xlu0 %419
      %421 = vrot.lane.b32.xlu0 %v323, 8
      %v422 = vpop.permute.xlu0 %421
      %423 = vrot.lane.b32.xlu0 %v325, 8
      %v424 = vpop.permute.xlu0 %423
      %441 = vrot.lane.b32.xlu0 %v329, 16
      %v442 = vpop.permute.xlu0 %441
      %443 = vrot.lane.b32.xlu0 %v331, 16
      %v444 = vpop.permute.xlu0 %443
      %445 = vrot.lane.b32.xlu0 %v334, 16
      %v446 = vpop.permute.xlu0 %445
      %447 = vrot.lane.b32.xlu0 %v336, 16
      %v448 = vpop.permute.xlu0 %447
      %449 = vrot.lane.b32.xlu0 %v339, 16
      %v450 = vpop.permute.xlu0 %449
      %451 = vrot.lane.b32.xlu0 %v341, 16
      %v452 = vpop.permute.xlu0 %451
      %453 = vrot.lane.b32.xlu0 %v344, 16
      %v454 = vpop.permute.xlu0 %453
      %455 = vrot.lane.b32.xlu0 %v346, 16
      %v456 = vpop.permute.xlu0 %455
      %457 = vrot.lane.b32.xlu0 %v349, 16
      %v458 = vpop.permute.xlu0 %457
      %459 = vrot.lane.b32.xlu0 %v351, 16
      %v460 = vpop.permute.xlu0 %459
      %461 = vrot.lane.b32.xlu0 %v354, 16
      %v462 = vpop.permute.xlu0 %461
      %463 = vrot.lane.b32.xlu0 %v356, 16
      %v464 = vpop.permute.xlu0 %463
      %465 = vrot.lane.b32.xlu0 %v359, 16
      %v466 = vpop.permute.xlu0 %465
      %467 = vrot.lane.b32.xlu0 %v361, 16
      %v468 = vpop.permute.xlu0 %467
      %469 = vrot.lane.b32.xlu0 %v364, 16
      %v470 = vpop.permute.xlu0 %469
      %471 = vrot.lane.b32.xlu0 %v366, 16
      %v472 = vpop.permute.xlu0 %471
      %489 = vrot.lane.b32.xlu0 %v234, 24
      %v490 = vpop.permute.xlu0 %489
      %491 = vrot.lane.b32.xlu0 %v235, 24
      %v492 = vpop.permute.xlu0 %491
      %493 = vrot.lane.b32.xlu0 %v237, 24
      %v494 = vpop.permute.xlu0 %493
      %495 = vrot.lane.b32.xlu0 %v238, 24
      %v496 = vpop.permute.xlu0 %495
      %497 = vrot.lane.b32.xlu0 %v240, 24
      %v498 = vpop.permute.xlu0 %497
      %499 = vrot.lane.b32.xlu0 %v241, 24
      %v500 = vpop.permute.xlu0 %499
      %501 = vrot.lane.b32.xlu0 %v243, 24
      %v502 = vpop.permute.xlu0 %501
      %503 = vrot.lane.b32.xlu0 %v244, 24
      %v504 = vpop.permute.xlu0 %503
      %505 = vrot.lane.b32.xlu0 %v246, 24
      %v506 = vpop.permute.xlu0 %505
      %507 = vrot.lane.b32.xlu0 %v247, 24
      %v508 = vpop.permute.xlu0 %507
      %509 = vrot.lane.b32.xlu0 %v249, 24
      %v510 = vpop.permute.xlu0 %509
      %511 = vrot.lane.b32.xlu0 %v250, 24
      %v512 = vpop.permute.xlu0 %511
      %513 = vrot.lane.b32.xlu0 %v252, 24
      %v514 = vpop.permute.xlu0 %513
      %515 = vrot.lane.b32.xlu0 %v253, 24
      %v516 = vpop.permute.xlu0 %515
      %517 = vrot.lane.b32.xlu0 %v255, 24
      %v518 = vpop.permute.xlu0 %517
      %519 = vrot.lane.b32.xlu0 %v256, 24
      %v520 = vpop.permute.xlu0 %519
      %537 = vrot.lane.b32.xlu0 %v293, 32
      %v538 = vpop.permute.xlu0 %537
      %539 = vrot.lane.b32.xlu0 %v295, 32
      %v540 = vpop.permute.xlu0 %539
      %541 = vrot.lane.b32.xlu0 %v298, 32
      %v542 = vpop.permute.xlu0 %541
      %543 = vrot.lane.b32.xlu0 %v300, 32
      %v544 = vpop.permute.xlu0 %543
      %545 = vrot.lane.b32.xlu0 %v303, 32
      %v546 = vpop.permute.xlu0 %545
      %547 = vrot.lane.b32.xlu0 %v305, 32
      %v548 = vpop.permute.xlu0 %547
      %549 = vrot.lane.b32.xlu0 %v308, 32
      %v550 = vpop.permute.xlu0 %549
      %551 = vrot.lane.b32.xlu0 %v310, 32
      %v552 = vpop.permute.xlu0 %551
      %553 = vrot.lane.b32.xlu0 %v313, 32
      %v554 = vpop.permute.xlu0 %553
      %555 = vrot.lane.b32.xlu0 %v315, 32
      %v556 = vpop.permute.xlu0 %555
      %557 = vrot.lane.b32.xlu0 %v318, 32
      %v558 = vpop.permute.xlu0 %557
      %559 = vrot.lane.b32.xlu0 %v320, 32
      %v560 = vpop.permute.xlu0 %559
      %561 = vrot.lane.b32.xlu0 %v323, 32
      %v562 = vpop.permute.xlu0 %561
      %563 = vrot.lane.b32.xlu0 %v325, 32
      %v564 = vpop.permute.xlu0 %563
      %565 = vrot.lane.b32.xlu0 %v372, 32
      %v566 = vpop.permute.xlu0 %565
      %567 = vrot.lane.b32.xlu0 %v374, 32
      %v568 = vpop.permute.xlu0 %567
      %585 = vrot.lane.b32.xlu0 %v334, 40
      %v586 = vpop.permute.xlu0 %585
      %587 = vrot.lane.b32.xlu0 %v336, 40
      %v588 = vpop.permute.xlu0 %587
      %589 = vrot.lane.b32.xlu0 %v339, 40
      %v590 = vpop.permute.xlu0 %589
      %591 = vrot.lane.b32.xlu0 %v341, 40
      %v592 = vpop.permute.xlu0 %591
      %593 = vrot.lane.b32.xlu0 %v344, 40
      %v594 = vpop.permute.xlu0 %593
      %595 = vrot.lane.b32.xlu0 %v346, 40
      %v596 = vpop.permute.xlu0 %595
      %597 = vrot.lane.b32.xlu0 %v349, 40
      %v598 = vpop.permute.xlu0 %597
      %599 = vrot.lane.b32.xlu0 %v351, 40
      %v600 = vpop.permute.xlu0 %599
      %601 = vrot.lane.b32.xlu0 %v354, 40
      %v602 = vpop.permute.xlu0 %601
      %603 = vrot.lane.b32.xlu0 %v356, 40
      %v604 = vpop.permute.xlu0 %603
      %605 = vrot.lane.b32.xlu0 %v359, 40
      %v606 = vpop.permute.xlu0 %605
      %607 = vrot.lane.b32.xlu0 %v361, 40
      %v608 = vpop.permute.xlu0 %607
      %609 = vrot.lane.b32.xlu0 %v364, 40
      %v610 = vpop.permute.xlu0 %609
      %611 = vrot.lane.b32.xlu0 %v366, 40
      %v612 = vpop.permute.xlu0 %611
      %613 = vrot.lane.b32.xlu0 %v377, 40
      %v614 = vpop.permute.xlu0 %613
      %615 = vrot.lane.b32.xlu0 %v379, 40
      %v616 = vpop.permute.xlu0 %615
      %633 = vrot.lane.b32.xlu0 %v237, 48
      %v634 = vpop.permute.xlu0 %633
      %635 = vrot.lane.b32.xlu0 %v238, 48
      %v636 = vpop.permute.xlu0 %635
      %637 = vrot.lane.b32.xlu0 %v240, 48
      %v638 = vpop.permute.xlu0 %637
      %639 = vrot.lane.b32.xlu0 %v241, 48
      %v640 = vpop.permute.xlu0 %639
      %641 = vrot.lane.b32.xlu0 %v243, 48
      %v642 = vpop.permute.xlu0 %641
      %643 = vrot.lane.b32.xlu0 %v244, 48
      %v644 = vpop.permute.xlu0 %643
      %645 = vrot.lane.b32.xlu0 %v246, 48
      %v646 = vpop.permute.xlu0 %645
      %647 = vrot.lane.b32.xlu0 %v247, 48
      %v648 = vpop.permute.xlu0 %647
      %649 = vrot.lane.b32.xlu0 %v249, 48
      %v650 = vpop.permute.xlu0 %649
      %651 = vrot.lane.b32.xlu0 %v250, 48
      %v652 = vpop.permute.xlu0 %651
      %653 = vrot.lane.b32.xlu0 %v252, 48
      %v654 = vpop.permute.xlu0 %653
      %655 = vrot.lane.b32.xlu0 %v253, 48
      %v656 = vpop.permute.xlu0 %655
      %657 = vrot.lane.b32.xlu0 %v255, 48
      %v658 = vpop.permute.xlu0 %657
      %659 = vrot.lane.b32.xlu0 %v256, 48
      %v660 = vpop.permute.xlu0 %659
      %661 = vrot.lane.b32.xlu0 %v258, 48
      %v662 = vpop.permute.xlu0 %661
      %663 = vrot.lane.b32.xlu0 %v259, 48
      %v664 = vpop.permute.xlu0 %663
      %681 = vrot.lane.b32.xlu0 %v298, 56
      %v682 = vpop.permute.xlu0 %681
      %683 = vrot.lane.b32.xlu0 %v300, 56
      %v684 = vpop.permute.xlu0 %683
      %685 = vrot.lane.b32.xlu0 %v303, 56
      %v686 = vpop.permute.xlu0 %685
      %687 = vrot.lane.b32.xlu0 %v305, 56
      %v688 = vpop.permute.xlu0 %687
      %689 = vrot.lane.b32.xlu0 %v308, 56
      %v690 = vpop.permute.xlu0 %689
      %691 = vrot.lane.b32.xlu0 %v310, 56
      %v692 = vpop.permute.xlu0 %691
      %693 = vrot.lane.b32.xlu0 %v313, 56
      %v694 = vpop.permute.xlu0 %693
      %695 = vrot.lane.b32.xlu0 %v315, 56
      %v696 = vpop.permute.xlu0 %695
      %697 = vrot.lane.b32.xlu0 %v318, 56
      %v698 = vpop.permute.xlu0 %697
      %699 = vrot.lane.b32.xlu0 %v320, 56
      %v700 = vpop.permute.xlu0 %699
      %701 = vrot.lane.b32.xlu0 %v323, 56
      %v702 = vpop.permute.xlu0 %701
      %703 = vrot.lane.b32.xlu0 %v325, 56
      %v704 = vpop.permute.xlu0 %703
      %705 = vrot.lane.b32.xlu0 %v372, 56
      %v706 = vpop.permute.xlu0 %705
      %707 = vrot.lane.b32.xlu0 %v374, 56
      %v708 = vpop.permute.xlu0 %707
      %709 = vrot.lane.b32.xlu0 %v385, 56
      %v710 = vpop.permute.xlu0 %709
      %711 = vrot.lane.b32.xlu0 %v387, 56
      %v712 = vpop.permute.xlu0 %711
      %729 = vrot.lane.b32.xlu0 %v339, 64
      %v730 = vpop.permute.xlu0 %729
      %731 = vrot.lane.b32.xlu0 %v341, 64
      %v732 = vpop.permute.xlu0 %731
      %733 = vrot.lane.b32.xlu0 %v344, 64
      %v734 = vpop.permute.xlu0 %733
      %735 = vrot.lane.b32.xlu0 %v346, 64
      %v736 = vpop.permute.xlu0 %735
      %737 = vrot.lane.b32.xlu0 %v349, 64
      %v738 = vpop.permute.xlu0 %737
      %739 = vrot.lane.b32.xlu0 %v351, 64
      %v740 = vpop.permute.xlu0 %739
      %741 = vrot.lane.b32.xlu0 %v354, 64
      %v742 = vpop.permute.xlu0 %741
      %743 = vrot.lane.b32.xlu0 %v356, 64
      %v744 = vpop.permute.xlu0 %743
      %745 = vrot.lane.b32.xlu0 %v359, 64
      %v746 = vpop.permute.xlu0 %745
      %747 = vrot.lane.b32.xlu0 %v361, 64
      %v748 = vpop.permute.xlu0 %747
      %749 = vrot.lane.b32.xlu0 %v364, 64
      %v750 = vpop.permute.xlu0 %749
      %751 = vrot.lane.b32.xlu0 %v366, 64
      %v752 = vpop.permute.xlu0 %751
      %753 = vrot.lane.b32.xlu0 %v377, 64
      %v754 = vpop.permute.xlu0 %753
      %755 = vrot.lane.b32.xlu0 %v379, 64
      %v756 = vpop.permute.xlu0 %755
      %757 = vrot.lane.b32.xlu0 %v390, 64
      %v758 = vpop.permute.xlu0 %757
      %759 = vrot.lane.b32.xlu0 %v392, 64
      %v760 = vpop.permute.xlu0 %759
      %vm777 = vcmask 64512
      %v778 = vsel %vm777, %v231, %v394
      %v779 = vsel %vm777, %v232, %v396
      %v780 = vsel %vm777, %v234, %v398
      %v781 = vsel %vm777, %v235, %v400
      %v782 = vsel %vm777, %v237, %v402
      %v783 = vsel %vm777, %v238, %v404
      %v784 = vsel %vm777, %v240, %v406
      %v785 = vsel %vm777, %v241, %v408
      %v786 = vsel %vm777, %v243, %v410
      %v787 = vsel %vm777, %v244, %v412
      %v788 = vsel %vm777, %v246, %v414
      %v789 = vsel %vm777, %v247, %v416
      %v790 = vsel %vm777, %v249, %v418
      %v791 = vsel %vm777, %v250, %v420
      %v792 = vsel %vm777, %v252, %v422
      %v793 = vsel %vm777, %v253, %v424
      %vm794 = vcmask 130048
      %v795 = vsel %vm794, %v778, %v442
      %v796 = vsel %vm794, %v779, %v444
      %v797 = vsel %vm794, %v780, %v446
      %v798 = vsel %vm794, %v781, %v448
      %v799 = vsel %vm794, %v782, %v450
      %v800 = vsel %vm794, %v783, %v452
      %v801 = vsel %vm794, %v784, %v454
      %v802 = vsel %vm794, %v785, %v456
      %v803 = vsel %vm794, %v786, %v458
      %v804 = vsel %vm794, %v787, %v460
      %v805 = vsel %vm794, %v788, %v462
      %v806 = vsel %vm794, %v789, %v464
      %v807 = vsel %vm794, %v790, %v466
      %v808 = vsel %vm794, %v791, %v468
      %v809 = vsel %vm794, %v792, %v470
      %v810 = vsel %vm794, %v793, %v472
      %vm811 = vcmask 195584
      %v812 = vsel %vm811, %v795, %v490
      %v813 = vsel %vm811, %v796, %v492
      %v814 = vsel %vm811, %v797, %v494
      %v815 = vsel %vm811, %v798, %v496
      %v816 = vsel %vm811, %v799, %v498
      %v817 = vsel %vm811, %v800, %v500
      %v818 = vsel %vm811, %v801, %v502
      %v819 = vsel %vm811, %v802, %v504
      %v820 = vsel %vm811, %v803, %v506
      %v821 = vsel %vm811, %v804, %v508
      %v822 = vsel %vm811, %v805, %v510
      %v823 = vsel %vm811, %v806, %v512
      %v824 = vsel %vm811, %v807, %v514
      %v825 = vsel %vm811, %v808, %v516
      %v826 = vsel %vm811, %v809, %v518
      %v827 = vsel %vm811, %v810, %v520
      %vm828 = vcmask 261120
      %v829 = vsel %vm828, %v812, %v538
      %v830 = vsel %vm828, %v813, %v540
      %v831 = vsel %vm828, %v814, %v542
      %v832 = vsel %vm828, %v815, %v544
      %v833 = vsel %vm828, %v816, %v546
      %v834 = vsel %vm828, %v817, %v548
      %v835 = vsel %vm828, %v818, %v550
      %v836 = vsel %vm828, %v819, %v552
      %v837 = vsel %vm828, %v820, %v554
      %v838 = vsel %vm828, %v821, %v556
      %v839 = vsel %vm828, %v822, %v558
      %v840 = vsel %vm828, %v823, %v560
      %v841 = vsel %vm828, %v824, %v562
      %v842 = vsel %vm828, %v825, %v564
      %v843 = vsel %vm828, %v826, %v566
      %v844 = vsel %vm828, %v827, %v568
      %vm845 = vcmask 326656
      %v846 = vsel %vm845, %v829, %v586
      %v847 = vsel %vm845, %v830, %v588
      %v848 = vsel %vm845, %v831, %v590
      %v849 = vsel %vm845, %v832, %v592
      %v850 = vsel %vm845, %v833, %v594
      %v851 = vsel %vm845, %v834, %v596
      %v852 = vsel %vm845, %v835, %v598
      %v853 = vsel %vm845, %v836, %v600
      %v854 = vsel %vm845, %v837, %v602
      %v855 = vsel %vm845, %v838, %v604
      %v856 = vsel %vm845, %v839, %v606
      %v857 = vsel %vm845, %v840, %v608
      %v858 = vsel %vm845, %v841, %v610
      %v859 = vsel %vm845, %v842, %v612
      %v860 = vsel %vm845, %v843, %v614
      %v861 = vsel %vm845, %v844, %v616
      %vm862 = vcmask 392192
      %v863 = vsel %vm862, %v846, %v634
      %v864 = vsel %vm862, %v847, %v636
      %v865 = vsel %vm862, %v848, %v638
      %v866 = vsel %vm862, %v849, %v640
      %v867 = vsel %vm862, %v850, %v642
      %v868 = vsel %vm862, %v851, %v644
      %v869 = vsel %vm862, %v852, %v646
      %v870 = vsel %vm862, %v853, %v648
      %v871 = vsel %vm862, %v854, %v650
      %v872 = vsel %vm862, %v855, %v652
      %v873 = vsel %vm862, %v856, %v654
      %v874 = vsel %vm862, %v857, %v656
      %v875 = vsel %vm862, %v858, %v658
      %v876 = vsel %vm862, %v859, %v660
      %v877 = vsel %vm862, %v860, %v662
      %v878 = vsel %vm862, %v861, %v664
      %vm879 = vcmask 457728
      %v880 = vsel %vm879, %v863, %v682
      %v881 = vsel %vm879, %v864, %v684
      %v882 = vsel %vm879, %v865, %v686
      %v883 = vsel %vm879, %v866, %v688
      %v884 = vsel %vm879, %v867, %v690
      %v885 = vsel %vm879, %v868, %v692
      %v886 = vsel %vm879, %v869, %v694
      %v887 = vsel %vm879, %v870, %v696
      %v888 = vsel %vm879, %v871, %v698
      %v889 = vsel %vm879, %v872, %v700
      %v890 = vsel %vm879, %v873, %v702
      %v891 = vsel %vm879, %v874, %v704
      %v892 = vsel %vm879, %v875, %v706
      %v893 = vsel %vm879, %v876, %v708
      %v894 = vsel %vm879, %v877, %v710
      %v895 = vsel %vm879, %v878, %v712
      %vm896 = vcmask 523264
      %v897 = vsel %vm896, %v880, %v730
      %v898 = vsel %vm896, %v881, %v732
      %v899 = vsel %vm896, %v882, %v734
      %v900 = vsel %vm896, %v883, %v736
      %v901 = vsel %vm896, %v884, %v738
      %v902 = vsel %vm896, %v885, %v740
      %v903 = vsel %vm896, %v886, %v742
      %v904 = vsel %vm896, %v887, %v744
      %v905 = vsel %vm896, %v888, %v746
      %v906 = vsel %vm896, %v889, %v748
      %v907 = vsel %vm896, %v890, %v750
      %v908 = vsel %vm896, %v891, %v752
      %v909 = vsel %vm896, %v892, %v754
      %v910 = vsel %vm896, %v893, %v756
      %v911 = vsel %vm896, %v894, %v758
      %v912 = vsel %vm896, %v895, %v760
      %v913 = vpack.c.bf16 %v898, %v897
      %v914 = vpack.c.bf16 %v900, %v899
      %v915 = vpack.c.bf16 %v902, %v901
      %v916 = vpack.c.bf16 %v904, %v903
      %v917 = vpack.c.bf16 %v906, %v905
      %v918 = vpack.c.bf16 %v908, %v907
      %v919 = vpack.c.bf16 %v910, %v909
      %v920 = vpack.c.bf16 %v912, %v911
      %v921 = vld [vmem:[%s1] sm:$0xf]
      %v922 = vld [vmem:[%s1 + $0x4] sm:$0xf]
      %v923 = vld [vmem:[%s1 + $0x8] sm:$0xf]
      %v924 = vld [vmem:[%s1 + $0xc] sm:$0xf]
      %v925 = vld [vmem:[%s1 + $0x10] sm:$0xf]
      %v926 = vld [vmem:[%s1 + $0x14] sm:$0xf]
      %v927 = vld [vmem:[%s1 + $0x18] sm:$0xf]
      %v928 = vld [vmem:[%s1 + $0x1c] sm:$0xf]
      %v929 = vld [vmem:[%s1 + $0x20] sm:$0xf]
      %v930 = vld [vmem:[%s2] sm:$0x1]
      %v932 = vperm.slane %v930, 0
      %v943 = vunpack.c.l.b16 %v921
      %v944 = vunpack.c.l.b16 %v922
      %v945 = vunpack.c.l.b16 %v923
      %v946 = vunpack.c.l.b16 %v924
      %v947 = vunpack.c.l.b16 %v925
      %v948 = vunpack.c.l.b16 %v926
      %v949 = vunpack.c.l.b16 %v927
      %v950 = vunpack.c.l.b16 %v928
      %v951 = vunpack.c.l.b16 %v929
      %v952 = vpack.c.b16 %v944, %v943
      %v953 = vpack.c.b16 %v946, %v945
      %v954 = vpack.c.b16 %v948, %v947
      %v955 = vpack.c.b16 %v950, %v949
      %v956 = vpack.c.b16 %v951, %v951
      %vm961 = vcmask 588800
      %v963 = vsel %vm961, %v913, 0
      %v966 = vsel %vm961, %v914, 0
      %v969 = vsel %vm961, %v915, 0
      %v972 = vsel %vm961, %v916, 0
      %v975 = vsel %vm961, %v917, 0
      %v978 = vsel %vm961, %v918, 0
      %v981 = vsel %vm961, %v919, 0
      %v984 = vsel %vm961, %v920, 0
      %vm986 = vcmask 1043456
      %v988 = vsel %vm986, %v956, 0
      %990 = vmatpush.bf16.msra.mxu0 0
      %991 = vmatpush.bf16.msra.mxu0 0
      %992 = vmatpush.bf16.msra.mxu0 0
      %993 = vmatpush.bf16.msra.mxu0 %v988
      %994 = vmatpush.bf16.msra.mxu0 %v955
      %995 = vmatpush.bf16.msra.mxu0 %v954
      %996 = vmatpush.bf16.msra.mxu0 %v953
      %997 = vmatpush.bf16.msra.mxu0 %v952
      %998 = vmatmul.bf16.gmra.mxu0 %v963
      %v999 = vpop.f32.mrf.mxu0
      %v1000 = vadd.f32 %v932, %v999
      %v1001 = vpop.f32.mrf.mxu0
      %v1002 = vadd.f32 %v932, %v1001
      %1003 = vmatmul.bf16.gmra.mxu0 %v966
      %v1004 = vpop.f32.mrf.mxu0
      %v1005 = vadd.f32 %v932, %v1004
      %v1006 = vpop.f32.mrf.mxu0
      %v1007 = vadd.f32 %v932, %v1006
      %1008 = vmatmul.bf16.gmra.mxu0 %v969
      %v1009 = vpop.f32.mrf.mxu0
      %v1010 = vadd.f32 %v932, %v1009
      %v1011 = vpop.f32.mrf.mxu0
      %v1012 = vadd.f32 %v932, %v1011
      %1013 = vmatmul.bf16.gmra.mxu0 %v972
      %v1014 = vpop.f32.mrf.mxu0
      %v1015 = vadd.f32 %v932, %v1014
      %v1016 = vpop.f32.mrf.mxu0
      %v1017 = vadd.f32 %v932, %v1016
      %1018 = vmatmul.bf16.gmra.mxu0 %v975
      %v1019 = vpop.f32.mrf.mxu0
      %v1020 = vadd.f32 %v932, %v1019
      %v1021 = vpop.f32.mrf.mxu0
      %v1022 = vadd.f32 %v932, %v1021
      %1023 = vmatmul.bf16.gmra.mxu0 %v978
      %v1024 = vpop.f32.mrf.mxu0
      %v1025 = vadd.f32 %v932, %v1024
      %v1026 = vpop.f32.mrf.mxu0
      %v1027 = vadd.f32 %v932, %v1026
      %1028 = vmatmul.bf16.gmra.mxu0 %v981
      %v1029 = vpop.f32.mrf.mxu0
      %v1030 = vadd.f32 %v932, %v1029
      %v1031 = vpop.f32.mrf.mxu0
      %v1032 = vadd.f32 %v932, %v1031
      %1033 = vmatmul.bf16.gmra.mxu0 %v984
      %v1034 = vpop.f32.mrf.mxu0
      %v1035 = vadd.f32 %v932, %v1034
      %v1036 = vpop.f32.mrf.mxu0
      %v1037 = vadd.f32 %v932, %v1036
      %1038 = vdwg.mxu0
      %v1039 = vmax.f32 %v1000, 0.0
      %v1040 = vmax.f32 %v1002, 0.0
      %v1041 = vmax.f32 %v1005, 0.0
      %v1042 = vmax.f32 %v1007, 0.0
      %v1043 = vmax.f32 %v1010, 0.0
      %v1044 = vmax.f32 %v1012, 0.0
      %v1045 = vmax.f32 %v1015, 0.0
      %v1046 = vmax.f32 %v1017, 0.0
      %v1047 = vmax.f32 %v1020, 0.0
      %v1048 = vmax.f32 %v1022, 0.0
      %v1049 = vmax.f32 %v1025, 0.0
      %v1050 = vmax.f32 %v1027, 0.0
      %v1051 = vmax.f32 %v1030, 0.0
      %v1052 = vmax.f32 %v1032, 0.0
      %v1053 = vmax.f32 %v1035, 0.0
      %v1054 = vmax.f32 %v1037, 0.0
      %1055 = vst.msk [vmem:[%s194] sm:$0xff] %vm794, %v1039
      %1056 = vst.msk [vmem:[%s194 + $0x8] sm:$0xff] %vm794, %v1040
      %1057 = vst.msk [vmem:[%s194 + $0x10] sm:$0xff] %vm794, %v1041
      %1058 = vst.msk [vmem:[%s194 + $0x18] sm:$0xff] %vm794, %v1042
      %1059 = vst.msk [vmem:[%s194 + $0x20] sm:$0xff] %vm794, %v1043
      %1060 = vst.msk [vmem:[%s194 + $0x28] sm:$0xff] %vm794, %v1044
      %1061 = vst.msk [vmem:[%s194 + $0x30] sm:$0xff] %vm794, %v1045
      %1062 = vst.msk [vmem:[%s194 + $0x38] sm:$0xff] %vm794, %v1046
      %1063 = vst.msk [vmem:[%s194 + $0x40] sm:$0xff] %vm794, %v1047
      %1064 = vst.msk [vmem:[%s194 + $0x48] sm:$0xff] %vm794, %v1048
      %1065 = vst.msk [vmem:[%s194 + $0x50] sm:$0xff] %vm794, %v1049
      %1066 = vst.msk [vmem:[%s194 + $0x58] sm:$0xff] %vm794, %v1050
      %1067 = vst.msk [vmem:[%s194 + $0x60] sm:$0xff] %vm794, %v1051
      %1068 = vst.msk [vmem:[%s194 + $0x68] sm:$0xff] %vm794, %v1052
      %1069 = vst.msk [vmem:[%s194 + $0x70] sm:$0xff] %vm794, %v1053
      %1070 = vst.msk [vmem:[%s194 + $0x78] sm:$0xff] %vm794, %v1054
      %s1071 = smul.u32 8, %s19
      %p1072 = scmp.lt.s32.totalorder %s18, 1
      %s1073 = scalar_select %p1072, %s18, 1
      %p1074 = scmp.lt.s32.totalorder %s1071, 15
      %s1075 = scalar_select %p1074, %s1071, 15
      %s1076 = smul.addr %s1075, 2
      %s1077 = smul.addr %s1073, 32
      %s1078 = sadd.s32 %s1076, %s1077
      %s1079 = smul.addr %s1078, 8
      %s1080 = scalar_lea.vmem %s3, %s1079
      // Predicated region
      $region33: #{inception_2_forward.6} parent=31 // pred_check
        %p1081 = pneg %p114
      $region34: #{inception_2_forward.6} parent=31 // pred_check_branch
        %1083 = sbr.rel (%p1081) target = $region36
      $region35: #{inception_2_forward.6} parent=31 // pred_region
        %s1084 = smul.u32 8, %s19
      $region36: #{inception_2_forward.6} parent=31 // pred_fallthru
        _
    $region32: #{inception_2_forward.6} parent=5 // pred_fallthru
      _
    %p1085 = scmp.le.s32.totalorder 2, %s9
    // Predicated region
    $region37: #{inception_2_forward.6} parent=5 // pred_check
      %p1086 = pneg %p1085
    $region38: #{inception_2_forward.6} parent=5 // pred_check_branch
      %1088 = sbr.rel (%p1086) target = $region40
    $region39: #{inception_2_forward.6} parent=5 // pred_region
      %s1089 = ssub.s32 %s9, 2
      // Predicated region
      $region41: #{inception_2_forward.6} parent=39 // pred_check
        %p1090 = pneg %p120
      $region42: #{inception_2_forward.6} parent=39 // pred_check_branch
        %1092 = sbr.rel (%p1090) target = $region44
      $region43: #{inception_2_forward.6} parent=39 // pred_region
        %s1093 = smul.u32 8, %s21
        %p1094 = scmp.lt.s32.totalorder %s20, 1
        %s1095 = scalar_select %p1094, %s20, 1
        %p1096 = scmp.lt.s32.totalorder %s1093, 15
        %s1097 = scalar_select %p1096, %s1093, 15
        %s1098 = smul.addr %s1097, 2
        %s1099 = smul.addr %s1095, 32
        %s1100 = sadd.s32 %s1098, %s1099
        %s1101 = smul.addr %s1100, 8
        %s1102 = scalar_lea.vmem %s3, %s1101
      $region44: #{inception_2_forward.6} parent=39 // pred_fallthru
        _
    $region40: #{inception_2_forward.6} parent=5 // pred_fallthru
      _
  $region6: #{inception_2_forward.6} parent=0 // loop_footer
    %s13 = sadd.s32 1, %s9
  $region7: #{inception_2_forward.6} parent=0 // loop_footer_branch
    %8 = sbr.rel target = $region3
  $region8: #{inception_2_forward.6} parent=0 // loop_exit
    _

// kernel: inception_2_forward.7
$region0: #{inception_2_forward.7}
  #allocation0 [shape = 'u32[]', space=smem, size = 0x4, offset = 0x4, fixed_abs, tag = 'smem constant byte address 0x4 - core index']
  #allocation1 [shape = 'u32[72,128]{1,0:T(1,128)}', space=vmem, size = 0x9000, scoped, tag = 'internal scratch']
  %s0 = inlined_call_operand.vmem [shape: bf16[2,18,18,4], index: 0, kind: input, shape index: {}]
  %s1 = inlined_call_operand.vmem [shape: bf16[36,8], index: 1, kind: input, shape index: {}]
  %s2 = inlined_call_operand.vmem [shape: f32[1,8], index: 2, kind: input, shape index: {}]
  %s3 = inlined_call_operand.vmem [shape: bf16[2,16,16,8], index: 3, kind: output, shape index: {}]
  %s4 = sld [smem:[#allocation0]]
  $region45: #{inception_2_forward.7} parent=0
    _
  %s6 = ssub.s32 1, %s4
  %s7 = scalar_select 0, %s6, %s4
  loop: start=0, step=1, limit=6
  $region2: #{inception_2_forward.7} parent=0 // loop_pre_header
    _
  $region3: #{inception_2_forward.7} parent=0 // loop_header
    %s9 = sphi 0, %s13
    %p10 = scmp.ge.s32.totalorder %s9, 6
    %s16 = sphi 0, %s28
    %s17 = sphi 0, %s24
    %s18 = sphi 0, %s16
    %s19 = sphi 0, %s17
    %s20 = sphi 0, %s18
    %s21 = sphi 0, %s19
    %s31 = sphi 0, %s33
    %s34 = sphi 0, %s31
    %s35 = sphi 0, %s34
    %s51 = sphi 0, %s35
    %s55 = sphi 0, %s55
    %s57 = sphi 0, %s55
    %s58 = sphi 0, %s57
    %s72 = sphi 0, %s58
    %s76 = sphi 0, %s76
    %s78 = sphi 0, %s76
    %s79 = sphi 0, %s78
    %s93 = sphi 0, %s79
    %s101 = sphi 0, %s103
    %s104 = sphi 0, %s101
    %s105 = sphi 0, %s104
    %s121 = sphi 0, %s105
  $region4: #{inception_2_forward.7} parent=0 // loop_header_branch
    %12 = sbr.rel (%p10) target = $region8
  $region5: #{inception_2_forward.7} parent=0 // loop_body
    %s14 = ssub.s32 %s9, 1
    %s15 = ssub.s32 %s9, 2
    %s22 = sadd.s32 1, %s17
    %p23 = scmp.ge.s32.totalorder %s22, 2
    %s24 = scalar_select %p23, 0, %s22
    %s25 = sadd.s32 1, %s16
    %s26 = scalar_select %p23, %s25, %s16
    %p27 = scmp.ge.s32.totalorder %s26, 2
    %s28 = scalar_select %p27, 0, %s26
    %s29 = ssub.s32 %s16, %s28
    %p30 = scmp.eq.s32.totalorder %s29, 0
    %s32 = sadd.s32 %s31, 1
    %s33 = scalar_select %p30, %s31, %s32
    %p36 = pneg %p30
    %p37 = scmp.eq.s32.totalorder %s9, 3
    %p38 = por %p36, %p37
    %p39 = scmp.ne.s32.totalorder %s31, %s34
    %p40 = scmp.eq.s32.totalorder %s9, 0
    %p41 = por %p39, %p40
    %p42 = scmp.ne.s32.totalorder %s31, %s34
    %p43 = scmp.eq.s32.totalorder %s14, 3
    %p44 = por %p42, %p43
    %p45 = scmp.ne.s32.totalorder %s34, %s35
    %p46 = scmp.eq.s32.totalorder %s14, 0
    %p47 = por %p45, %p46
    %p48 = scmp.ne.s32.totalorder %s34, %s35
    %p49 = scmp.eq.s32.totalorder %s15, 3
    %p50 = por %p48, %p49
    %p52 = scmp.ne.s32.totalorder %s35, %s51
    %p53 = scmp.eq.s32.totalorder %s15, 0
    %p54 = por %p52, %p53
    %s56 = sadd.s32 %s55, 1
    %p59 = scmp.eq.s32.totalorder %s9, 3
    %p60 = scmp.ne.s32.totalorder %s55, %s57
    %p61 = scmp.eq.s32.totalorder %s9, 0
    %p62 = por %p60, %p61
    %p63 = scmp.ne.s32.totalorder %s55, %s57
    %p64 = scmp.eq.s32.totalorder %s14, 3
    %p65 = por %p63, %p64
    %p66 = scmp.ne.s32.totalorder %s57, %s58
    %p67 = scmp.eq.s32.totalorder %s14, 0
    %p68 = por %p66, %p67
    %p69 = scmp.ne.s32.totalorder %s57, %s58
    %p70 = scmp.eq.s32.totalorder %s15, 3
    %p71 = por %p69, %p70
    %p73 = scmp.ne.s32.totalorder %s58, %s72
    %p74 = scmp.eq.s32.totalorder %s15, 0
    %p75 = por %p73, %p74
    %s77 = sadd.s32 %s76, 1
    %p80 = scmp.eq.s32.totalorder %s9, 3
    %p81 = scmp.ne.s32.totalorder %s76, %s78
    %p82 = scmp.eq.s32.totalorder %s9, 0
    %p83 = por %p81, %p82
    %p84 = scmp.ne.s32.totalorder %s76, %s78
    %p85 = scmp.eq.s32.totalorder %s14, 3
    %p86 = por %p84, %p85
    %p87 = scmp.ne.s32.totalorder %s78, %s79
    %p88 = scmp.eq.s32.totalorder %s14, 0
    %p89 = por %p87, %p88
    %p90 = scmp.ne.s32.totalorder %s78, %s79
    %p91 = scmp.eq.s32.totalorder %s15, 3
    %p92 = por %p90, %p91
    %p94 = scmp.ne.s32.totalorder %s79, %s93
    %p95 = scmp.eq.s32.totalorder %s15, 0
    %p96 = por %p94, %p95
    %s97 = ssub.s32 %s16, %s28
    %s98 = ssub.s32 %s17, %s24
    %s99 = sor.u32 %s97, %s98
    %p100 = scmp.eq.s32.totalorder %s99, 0
    %s102 = sadd.s32 %s101, 1
    %s103 = scalar_select %p100, %s101, %s102
    %p106 = pneg %p100
    %p107 = scmp.eq.s32.totalorder %s9, 3
    %p108 = por %p106, %p107
    %p109 = scmp.ne.s32.totalorder %s101, %s104
    %p110 = scmp.eq.s32.totalorder %s9, 0
    %p111 = por %p109, %p110
    %p112 = scmp.ne.s32.totalorder %s101, %s104
    %p113 = scmp.eq.s32.totalorder %s14, 3
    %p114 = por %p112, %p113
    %p115 = scmp.ne.s32.totalorder %s104, %s105
    %p116 = scmp.eq.s32.totalorder %s14, 0
    %p117 = por %p115, %p116
    %p118 = scmp.ne.s32.totalorder %s104, %s105
    %p119 = scmp.eq.s32.totalorder %s15, 3
    %p120 = por %p118, %p119
    %p122 = scmp.ne.s32.totalorder %s105, %s121
    %p123 = scmp.eq.s32.totalorder %s15, 0
    %p124 = por %p122, %p123
    %p125 = scmp.le.s32.totalorder 1, %s9
    %p126 = scmp.lt.s32.totalorder %s9, 5
    %p127 = pnand %p125, %p126
    %p128 = pneg %p127
    // Predicated region
    $region9: #{inception_2_forward.7} parent=5 // pred_check
      _
    $region10: #{inception_2_forward.7} parent=5 // pred_check_branch
      %130 = sbr.rel (%p127) target = $region12
    $region11: #{inception_2_forward.7} parent=5 // pred_region
      %s131 = ssub.s32 %s9, 1
      // Predicated region
      $region13: #{inception_2_forward.7} parent=11 // pred_check
        %p132 = pneg %p68
      $region14: #{inception_2_forward.7} parent=11 // pred_check_branch
        %134 = sbr.rel (%p132) target = $region16
      $region15: #{inception_2_forward.7} parent=11 // pred_region
        _
      $region16: #{inception_2_forward.7} parent=11 // pred_fallthru
        _
      // Predicated region
      $region17: #{inception_2_forward.7} parent=11 // pred_check
        %p135 = pneg %p89
      $region18: #{inception_2_forward.7} parent=11 // pred_check_branch
        %137 = sbr.rel (%p135) target = $region20
      $region19: #{inception_2_forward.7} parent=11 // pred_region
        _
      $region20: #{inception_2_forward.7} parent=11 // pred_fallthru
        _
    $region12: #{inception_2_forward.7} parent=5 // pred_fallthru
      _
    %p138 = scmp.lt.s32.totalorder %s9, 4
    // Predicated region
    $region21: #{inception_2_forward.7} parent=5 // pred_check
      %p139 = pneg %p138
    $region22: #{inception_2_forward.7} parent=5 // pred_check_branch
      %141 = sbr.rel (%p139) target = $region24
    $region23: #{inception_2_forward.7} parent=5 // pred_region
      // Predicated region
      $region25: #{inception_2_forward.7} parent=23 // pred_check
        %p142 = pneg %p41
      $region26: #{inception_2_forward.7} parent=23 // pred_check_branch
        %144 = sbr.rel (%p142) target = $region28
      $region27: #{inception_2_forward.7} parent=23 // pred_region
        %p145 = scmp.lt.s32.totalorder %s16, 1
        %s146 = scalar_select %p145, %s16, 1
        %s147 = smul.addr %s146, 54
        %s148 = smul.addr %s147, 4
        %s149 = scalar_lea.vmem %s0, %s148
      $region28: #{inception_2_forward.7} parent=23 // pred_fallthru
        _
    $region24: #{inception_2_forward.7} parent=5 // pred_fallthru
      _
    %p150 = scmp.le.s32.totalorder 1, %s9
    %p151 = scmp.lt.s32.totalorder %s9, 5
    %p152 = pnand %p150, %p151
    %p153 = pneg %p152
    // Predicated region
    $region29: #{inception_2_forward.7} parent=5 // pred_check
      _
    $region30: #{inception_2_forward.7} parent=5 // pred_check_branch
      %155 = sbr.rel (%p152) target = $region32
    $region31: #{inception_2_forward.7} parent=5 // pred_region
      %s156 = ssub.s32 %s9, 1
      %p157 = scmp.lt.s32.totalorder %s18, 1
      %s158 = scalar_select %p157, %s18, 1
      %s159 = smul.addr %s158, 54
      %s160 = smul.addr %s159, 4
      %s161 = scalar_lea.vmem %s0, %s160
      %p162 = pneg %p47
      %p163 = pneg %p44
      %p164 = pneg %p68
      %p165 = pneg %p65
      %p166 = pneg %p89
      %p167 = pneg %p86
      %p168 = pneg %p117
      %p169 = pneg %p114
      %s170 = smul.u32 8, %s19
      %p171 = scmp.lt.s32.totalorder %s18, 1
      %s172 = scalar_select %p171, %s18, 1
      %p173 = scmp.lt.s32.totalorder %s170, 15
      %s174 = scalar_select %p173, %s170, 15
      %s175 = smul.addr %s174, 2
      %s176 = smul.addr %s172, 32
      %s177 = sadd.s32 %s175, %s176
      %s178 = smul.addr %s177, 4
      %s179 = scalar_lea.vmem %s3, %s178
      %p180 = scmp.lt.s32.totalorder %s18, 1
      %s181 = scalar_select %p180, %s18, 1
      %s182 = smul.addr %s181, 54
      %s183 = smul.addr %s182, 4
      %s184 = scalar_lea.vmem %s0, %s183
      %s185 = smul.u32 8, %s19
      %p186 = scmp.lt.s32.totalorder %s18, 1
      %s187 = scalar_select %p186, %s18, 1
      %p188 = scmp.lt.s32.totalorder %s185, 15
      %s189 = scalar_select %p188, %s185, 15
      %s190 = smul.addr %s189, 2
      %s191 = smul.addr %s187, 32
      %s192 = sadd.s32 %s190, %s191
      %s193 = smul.addr %s192, 4
      %s194 = scalar_lea.vmem %s3, %s193
      %s195 = smul.u32 8, %s19
      %s197 = smul.u32 %s19, 8
      %s198 = smul.u32 %s197, 3
      %s199 = smul.addr %s198, 4
      %s200 = scalar_lea.vmem %s184, %s199
      %v201 = vld [vmem:[%s200] sm:$0xf]
      %v202 = vld [vmem:[%s200 + $0x4] sm:$0xf]
      %v203 = vld [vmem:[%s200 + $0x8] sm:$0x1]
      %v204 = vld [vmem:[%s200 + $0xc] sm:$0xf]
      %v205 = vld [vmem:[%s200 + $0x10] sm:$0xf]
      %v206 = vld [vmem:[%s200 + $0x14] sm:$0x1]
      %v207 = vld [vmem:[%s200 + $0x18] sm:$0xf]
      %v208 = vld [vmem:[%s200 + $0x1c] sm:$0xf]
      %v209 = vld [vmem:[%s200 + $0x20] sm:$0x1]
      %v210 = vld [vmem:[%s200 + $0x24] sm:$0xf]
      %v211 = vld [vmem:[%s200 + $0x28] sm:$0xf]
      %v212 = vld [vmem:[%s200 + $0x2c] sm:$0x1]
      %v213 = vld [vmem:[%s200 + $0x30] sm:$0xf]
      %v214 = vld [vmem:[%s200 + $0x34] sm:$0xf]
      %v215 = vld [vmem:[%s200 + $0x38] sm:$0x1]
      %v216 = vld [vmem:[%s200 + $0x3c] sm:$0xf]
      %v217 = vld [vmem:[%s200 + $0x40] sm:$0xf]
      %v218 = vld [vmem:[%s200 + $0x44] sm:$0x1]
      %v219 = vld [vmem:[%s200 + $0x48] sm:$0xf]
      %v220 = vld [vmem:[%s200 + $0x4c] sm:$0xf]
      %v221 = vld [vmem:[%s200 + $0x50] sm:$0x1]
      %v222 = vld [vmem:[%s200 + $0x54] sm:$0xf]
      %v223 = vld [vmem:[%s200 + $0x58] sm:$0xf]
      %v224 = vld [vmem:[%s200 + $0x5c] sm:$0x1]
      %v225 = vld [vmem:[%s200 + $0x60] sm:$0xf]
      %v226 = vld [vmem:[%s200 + $0x64] sm:$0xf]
      %v227 = vld [vmem:[%s200 + $0x68] sm:$0x1]
      %v228 = vld [vmem:[%s200 + $0x6c] sm:$0xf]
      %v229 = vld [vmem:[%s200 + $0x70] sm:$0xf]
      %v230 = vld [vmem:[%s200 + $0x74] sm:$0x1]
      %v231 = vunpack.c.l.bf16 %v201
      %v232 = vunpack.c.l.bf16 %v202
      %v233 = vunpack.c.l.bf16 %v203
      %v234 = vunpack.c.l.bf16 %v204
      %v235 = vunpack.c.l.bf16 %v205
      %v236 = vunpack.c.l.bf16 %v206
      %v237 = vunpack.c.l.bf16 %v207
      %v238 = vunpack.c.l.bf16 %v208
      %v239 = vunpack.c.l.bf16 %v209
      %v240 = vunpack.c.l.bf16 %v210
      %v241 = vunpack.c.l.bf16 %v211
      %v242 = vunpack.c.l.bf16 %v212
      %v243 = vunpack.c.l.bf16 %v213
      %v244 = vunpack.c.l.bf16 %v214
      %v245 = vunpack.c.l.bf16 %v215
      %v246 = vunpack.c.l.bf16 %v216
      %v247 = vunpack.c.l.bf16 %v217
      %v248 = vunpack.c.l.bf16 %v218
      %v249 = vunpack.c.l.bf16 %v219
      %v250 = vunpack.c.l.bf16 %v220
      %v251 = vunpack.c.l.bf16 %v221
      %v252 = vunpack.c.l.bf16 %v222
      %v253 = vunpack.c.l.bf16 %v223
      %v254 = vunpack.c.l.bf16 %v224
      %v255 = vunpack.c.l.bf16 %v225
      %v256 = vunpack.c.l.bf16 %v226
      %v257 = vunpack.c.l.bf16 %v227
      %v258 = vunpack.c.l.bf16 %v228
      %v259 = vunpack.c.l.bf16 %v229
      %v260 = vunpack.c.l.bf16 %v230
      %vm285 = vcmask 1046528
      %v286 = vrot.slane %v231, 1
      %v287 = vrot.slane %v232, 1
      %v288 = vsel %vm285, %v286, %v287
      %v289 = vrot.slane %v233, 1
      %v290 = vsel %vm285, %v287, %v289
      %v291 = vrot.slane %v234, 1
      %v292 = vrot.slane %v235, 1
      %v293 = vsel %vm285, %v291, %v292
      %v294 = vrot.slane %v236, 1
      %v295 = vsel %vm285, %v292, %v294
      %v296 = vrot.slane %v237, 1
      %v297 = vrot.slane %v238, 1
      %v298 = vsel %vm285, %v296, %v297
      %v299 = vrot.slane %v239, 1
      %v300 = vsel %vm285, %v297, %v299
      %v301 = vrot.slane %v240, 1
      %v302 = vrot.slane %v241, 1
      %v303 = vsel %vm285, %v301, %v302
      %v304 = vrot.slane %v242, 1
      %v305 = vsel %vm285, %v302, %v304
      %v306 = vrot.slane %v243, 1
      %v307 = vrot.slane %v244, 1
      %v308 = vsel %vm285, %v306, %v307
      %v309 = vrot.slane %v245, 1
      %v310 = vsel %vm285, %v307, %v309
      %v311 = vrot.slane %v246, 1
      %v312 = vrot.slane %v247, 1
      %v313 = vsel %vm285, %v311, %v312
      %v314 = vrot.slane %v248, 1
      %v315 = vsel %vm285, %v312, %v314
      %v316 = vrot.slane %v249, 1
      %v317 = vrot.slane %v250, 1
      %v318 = vsel %vm285, %v316, %v317
      %v319 = vrot.slane %v251, 1
      %v320 = vsel %vm285, %v317, %v319
      %v321 = vrot.slane %v252, 1
      %v322 = vrot.slane %v253, 1
      %v323 = vsel %vm285, %v321, %v322
      %v324 = vrot.slane %v254, 1
      %v325 = vsel %vm285, %v322, %v324
      %vm326 = vcmask 1045504
      %v327 = vrot.slane %v231, 2
      %v328 = vrot.slane %v232, 2
      %v329 = vsel %vm326, %v327, %v328
      %v330 = vrot.slane %v233, 2
      %v331 = vsel %vm326, %v328, %v330
      %v332 = vrot.slane %v234, 2
      %v333 = vrot.slane %v235, 2
      %v334 = vsel %vm326, %v332, %v333
      %v335 = vrot.slane %v236, 2
      %v336 = vsel %vm326, %v333, %v335
      %v337 = vrot.slane %v237, 2
      %v338 = vrot.slane %v238, 2
      %v339 = vsel %vm326, %v337, %v338
      %v340 = vrot.slane %v239, 2
      %v341 = vsel %vm326, %v338, %v340
      %v342 = vrot.slane %v240, 2
      %v343 = vrot.slane %v241, 2
      %v344 = vsel %vm326, %v342, %v343
      %v345 = vrot.slane %v242, 2
      %v346 = vsel %vm326, %v343, %v345
      %v347 = vrot.slane %v243, 2
      %v348 = vrot.slane %v244, 2
      %v349 = vsel %vm326, %v347, %v348
      %v350 = vrot.slane %v245, 2
      %v351 = vsel %vm326, %v348, %v350
      %v352 = vrot.slane %v246, 2
      %v353 = vrot.slane %v247, 2
      %v354 = vsel %vm326, %v352, %v353
      %v355 = vrot.slane %v248, 2
      %v356 = vsel %vm326, %v353, %v355
      %v357 = vrot.slane %v249, 2
      %v358 = vrot.slane %v250, 2
      %v359 = vsel %vm326, %v357, %v358
      %v360 = vrot.slane %v251, 2
      %v361 = vsel %vm326, %v358, %v360
      %v362 = vrot.slane %v252, 2
      %v363 = vrot.slane %v253, 2
      %v364 = vsel %vm326, %v362, %v363
      %v365 = vrot.slane %v254, 2
      %v366 = vsel %vm326, %v363, %v365
      %v370 = vrot.slane %v255, 1
      %v371 = vrot.slane %v256, 1
      %v372 = vsel %vm285, %v370, %v371
      %v373 = vrot.slane %v257, 1
      %v374 = vsel %vm285, %v371, %v373
      %v375 = vrot.slane %v255, 2
      %v376 = vrot.slane %v256, 2
      %v377 = vsel %vm326, %v375, %v376
      %v378 = vrot.slane %v257, 2
      %v379 = vsel %vm326, %v376, %v378
      %v383 = vrot.slane %v258, 1
      %v384 = vrot.slane %v259, 1
      %v385 = vsel %vm285, %v383, %v384
      %v386 = vrot.slane %v260, 1
      %v387 = vsel %vm285, %v384, %v386
      %v388 = vrot.slane %v258, 2
      %v389 = vrot.slane %v259, 2
      %v390 = vsel %vm326, %v388, %v389
      %v391 = vrot.slane %v260, 2
      %v392 = vsel %vm326, %v389, %v391
      %393 = vrot.lane.b32.xlu0 %v288, 4
      %v394 = vpop.permute.xlu0 %393
      %395 = vrot.lane.b32.xlu0 %v290, 4
      %v396 = vpop.permute.xlu0 %395
      %397 = vrot.lane.b32.xlu0 %v293, 4
      %v398 = vpop.permute.xlu0 %397
      %399 = vrot.lane.b32.xlu0 %v295, 4
      %v400 = vpop.permute.xlu0 %399
      %401 = vrot.lane.b32.xlu0 %v298, 4
      %v402 = vpop.permute.xlu0 %401
      %403 = vrot.lane.b32.xlu0 %v300, 4
      %v404 = vpop.permute.xlu0 %403
      %405 = vrot.lane.b32.xlu0 %v303, 4
      %v406 = vpop.permute.xlu0 %405
      %407 = vrot.lane.b32.xlu0 %v305, 4
      %v408 = vpop.permute.xlu0 %407
      %409 = vrot.lane.b32.xlu0 %v308, 4
      %v410 = vpop.permute.xlu0 %409
      %411 = vrot.lane.b32.xlu0 %v310, 4
      %v412 = vpop.permute.xlu0 %411
      %413 = vrot.lane.b32.xlu0 %v313, 4
      %v414 = vpop.permute.xlu0 %413
      %415 = vrot.lane.b32.xlu0 %v315, 4
      %v416 = vpop.permute.xlu0 %415
      %417 = vrot.lane.b32.xlu0 %v318, 4
      %v418 = vpop.permute.xlu0 %417
      %419 = vrot.lane.b32.xlu0 %v320, 4
      %v420 = vpop.permute.xlu0 %419
      %421 = vrot.lane.b32.xlu0 %v323, 4
      %v422 = vpop.permute.xlu0 %421
      %423 = vrot.lane.b32.xlu0 %v325, 4
      %v424 = vpop.permute.xlu0 %423
      %441 = vrot.lane.b32.xlu0 %v329, 8
      %v442 = vpop.permute.xlu0 %441
      %443 = vrot.lane.b32.xlu0 %v331, 8
      %v444 = vpop.permute.xlu0 %443
      %445 = vrot.lane.b32.xlu0 %v334, 8
      %v446 = vpop.permute.xlu0 %445
      %447 = vrot.lane.b32.xlu0 %v336, 8
      %v448 = vpop.permute.xlu0 %447
      %449 = vrot.lane.b32.xlu0 %v339, 8
      %v450 = vpop.permute.xlu0 %449
      %451 = vrot.lane.b32.xlu0 %v341, 8
      %v452 = vpop.permute.xlu0 %451
      %453 = vrot.lane.b32.xlu0 %v344, 8
      %v454 = vpop.permute.xlu0 %453
      %455 = vrot.lane.b32.xlu0 %v346, 8
      %v456 = vpop.permute.xlu0 %455
      %457 = vrot.lane.b32.xlu0 %v349, 8
      %v458 = vpop.permute.xlu0 %457
      %459 = vrot.lane.b32.xlu0 %v351, 8
      %v460 = vpop.permute.xlu0 %459
      %461 = vrot.lane.b32.xlu0 %v354, 8
      %v462 = vpop.permute.xlu0 %461
      %463 = vrot.lane.b32.xlu0 %v356, 8
      %v464 = vpop.permute.xlu0 %463
      %465 = vrot.lane.b32.xlu0 %v359, 8
      %v466 = vpop.permute.xlu0 %465
      %467 = vrot.lane.b32.xlu0 %v361, 8
      %v468 = vpop.permute.xlu0 %467
      %469 = vrot.lane.b32.xlu0 %v364, 8
      %v470 = vpop.permute.xlu0 %469
      %471 = vrot.lane.b32.xlu0 %v366, 8
      %v472 = vpop.permute.xlu0 %471
      %489 = vrot.lane.b32.xlu0 %v234, 12
      %v490 = vpop.permute.xlu0 %489
      %491 = vrot.lane.b32.xlu0 %v235, 12
      %v492 = vpop.permute.xlu0 %491
      %493 = vrot.lane.b32.xlu0 %v237, 12
      %v494 = vpop.permute.xlu0 %493
      %495 = vrot.lane.b32.xlu0 %v238, 12
      %v496 = vpop.permute.xlu0 %495
      %497 = vrot.lane.b32.xlu0 %v240, 12
      %v498 = vpop.permute.xlu0 %497
      %499 = vrot.lane.b32.xlu0 %v241, 12
      %v500 = vpop.permute.xlu0 %499
      %501 = vrot.lane.b32.xlu0 %v243, 12
      %v502 = vpop.permute.xlu0 %501
      %503 = vrot.lane.b32.xlu0 %v244, 12
      %v504 = vpop.permute.xlu0 %503
      %505 = vrot.lane.b32.xlu0 %v246, 12
      %v506 = vpop.permute.xlu0 %505
      %507 = vrot.lane.b32.xlu0 %v247, 12
      %v508 = vpop.permute.xlu0 %507
      %509 = vrot.lane.b32.xlu0 %v249, 12
      %v510 = vpop.permute.xlu0 %509
      %511 = vrot.lane.b32.xlu0 %v250, 12
      %v512 = vpop.permute.xlu0 %511
      %513 = vrot.lane.b32.xlu0 %v252, 12
      %v514 = vpop.permute.xlu0 %513
      %515 = vrot.lane.b32.xlu0 %v253, 12
      %v516 = vpop.permute.xlu0 %515
      %517 = vrot.lane.b32.xlu0 %v255, 12
      %v518 = vpop.permute.xlu0 %517
      %519 = vrot.lane.b32.xlu0 %v256, 12
      %v520 = vpop.permute.xlu0 %519
      %537 = vrot.lane.b32.xlu0 %v293, 16
      %v538 = vpop.permute.xlu0 %537
      %539 = vrot.lane.b32.xlu0 %v295, 16
      %v540 = vpop.permute.xlu0 %539
      %541 = vrot.lane.b32.xlu0 %v298, 16
      %v542 = vpop.permute.xlu0 %541
      %543 = vrot.lane.b32.xlu0 %v300, 16
      %v544 = vpop.permute.xlu0 %543
      %545 = vrot.lane.b32.xlu0 %v303, 16
      %v546 = vpop.permute.xlu0 %545
      %547 = vrot.lane.b32.xlu0 %v305, 16
      %v548 = vpop.permute.xlu0 %547
      %549 = vrot.lane.b32.xlu0 %v308, 16
      %v550 = vpop.permute.xlu0 %549
      %551 = vrot.lane.b32.xlu0 %v310, 16
      %v552 = vpop.permute.xlu0 %551
      %553 = vrot.lane.b32.xlu0 %v313, 16
      %v554 = vpop.permute.xlu0 %553
      %555 = vrot.lane.b32.xlu0 %v315, 16
      %v556 = vpop.permute.xlu0 %555
      %557 = vrot.lane.b32.xlu0 %v318, 16
      %v558 = vpop.permute.xlu0 %557
      %559 = vrot.lane.b32.xlu0 %v320, 16
      %v560 = vpop.permute.xlu0 %559
      %561 = vrot.lane.b32.xlu0 %v323, 16
      %v562 = vpop.permute.xlu0 %561
      %563 = vrot.lane.b32.xlu0 %v325, 16
      %v564 = vpop.permute.xlu0 %563
      %565 = vrot.lane.b32.xlu0 %v372, 16
      %v566 = vpop.permute.xlu0 %565
      %567 = vrot.lane.b32.xlu0 %v374, 16
      %v568 = vpop.permute.xlu0 %567
      %585 = vrot.lane.b32.xlu0 %v334, 20
      %v586 = vpop.permute.xlu0 %585
      %587 = vrot.lane.b32.xlu0 %v336, 20
      %v588 = vpop.permute.xlu0 %587
      %589 = vrot.lane.b32.xlu0 %v339, 20
      %v590 = vpop.permute.xlu0 %589
      %591 = vrot.lane.b32.xlu0 %v341, 20
      %v592 = vpop.permute.xlu0 %591
      %593 = vrot.lane.b32.xlu0 %v344, 20
      %v594 = vpop.permute.xlu0 %593
      %595 = vrot.lane.b32.xlu0 %v346, 20
      %v596 = vpop.permute.xlu0 %595
      %597 = vrot.lane.b32.xlu0 %v349, 20
      %v598 = vpop.permute.xlu0 %597
      %599 = vrot.lane.b32.xlu0 %v351, 20
      %v600 = vpop.permute.xlu0 %599
      %601 = vrot.lane.b32.xlu0 %v354, 20
      %v602 = vpop.permute.xlu0 %601
      %603 = vrot.lane.b32.xlu0 %v356, 20
      %v604 = vpop.permute.xlu0 %603
      %605 = vrot.lane.b32.xlu0 %v359, 20
      %v606 = vpop.permute.xlu0 %605
      %607 = vrot.lane.b32.xlu0 %v361, 20
      %v608 = vpop.permute.xlu0 %607
      %609 = vrot.lane.b32.xlu0 %v364, 20
      %v610 = vpop.permute.xlu0 %609
      %611 = vrot.lane.b32.xlu0 %v366, 20
      %v612 = vpop.permute.xlu0 %611
      %613 = vrot.lane.b32.xlu0 %v377, 20
      %v614 = vpop.permute.xlu0 %613
      %615 = vrot.lane.b32.xlu0 %v379, 20
      %v616 = vpop.permute.xlu0 %615
      %633 = vrot.lane.b32.xlu0 %v237, 24
      %v634 = vpop.permute.xlu0 %633
      %635 = vrot.lane.b32.xlu0 %v238, 24
      %v636 = vpop.permute.xlu0 %635
      %637 = vrot.lane.b32.xlu0 %v240, 24
      %v638 = vpop.permute.xlu0 %637
      %639 = vrot.lane.b32.xlu0 %v241, 24
      %v640 = vpop.permute.xlu0 %639
      %641 = vrot.lane.b32.xlu0 %v243, 24
      %v642 = vpop.permute.xlu0 %641
      %643 = vrot.lane.b32.xlu0 %v244, 24
      %v644 = vpop.permute.xlu0 %643
      %645 = vrot.lane.b32.xlu0 %v246, 24
      %v646 = vpop.permute.xlu0 %645
      %647 = vrot.lane.b32.xlu0 %v247, 24
      %v648 = vpop.permute.xlu0 %647
      %649 = vrot.lane.b32.xlu0 %v249, 24
      %v650 = vpop.permute.xlu0 %649
      %651 = vrot.lane.b32.xlu0 %v250, 24
      %v652 = vpop.permute.xlu0 %651
      %653 = vrot.lane.b32.xlu0 %v252, 24
      %v654 = vpop.permute.xlu0 %653
      %655 = vrot.lane.b32.xlu0 %v253, 24
      %v656 = vpop.permute.xlu0 %655
      %657 = vrot.lane.b32.xlu0 %v255, 24
      %v658 = vpop.permute.xlu0 %657
      %659 = vrot.lane.b32.xlu0 %v256, 24
      %v660 = vpop.permute.xlu0 %659
      %661 = vrot.lane.b32.xlu0 %v258, 24
      %v662 = vpop.permute.xlu0 %661
      %663 = vrot.lane.b32.xlu0 %v259, 24
      %v664 = vpop.permute.xlu0 %663
      %681 = vrot.lane.b32.xlu0 %v298, 28
      %v682 = vpop.permute.xlu0 %681
      %683 = vrot.lane.b32.xlu0 %v300, 28
      %v684 = vpop.permute.xlu0 %683
      %685 = vrot.lane.b32.xlu0 %v303, 28
      %v686 = vpop.permute.xlu0 %685
      %687 = vrot.lane.b32.xlu0 %v305, 28
      %v688 = vpop.permute.xlu0 %687
      %689 = vrot.lane.b32.xlu0 %v308, 28
      %v690 = vpop.permute.xlu0 %689
      %691 = vrot.lane.b32.xlu0 %v310, 28
      %v692 = vpop.permute.xlu0 %691
      %693 = vrot.lane.b32.xlu0 %v313, 28
      %v694 = vpop.permute.xlu0 %693
      %695 = vrot.lane.b32.xlu0 %v315, 28
      %v696 = vpop.permute.xlu0 %695
      %697 = vrot.lane.b32.xlu0 %v318, 28
      %v698 = vpop.permute.xlu0 %697
      %699 = vrot.lane.b32.xlu0 %v320, 28
      %v700 = vpop.permute.xlu0 %699
      %701 = vrot.lane.b32.xlu0 %v323, 28
      %v702 = vpop.permute.xlu0 %701
      %703 = vrot.lane.b32.xlu0 %v325, 28
      %v704 = vpop.permute.xlu0 %703
      %705 = vrot.lane.b32.xlu0 %v372, 28
      %v706 = vpop.permute.xlu0 %705
      %707 = vrot.lane.b32.xlu0 %v374, 28
      %v708 = vpop.permute.xlu0 %707
      %709 = vrot.lane.b32.xlu0 %v385, 28
      %v710 = vpop.permute.xlu0 %709
      %711 = vrot.lane.b32.xlu0 %v387, 28
      %v712 = vpop.permute.xlu0 %711
      %729 = vrot.lane.b32.xlu0 %v339, 32
      %v730 = vpop.permute.xlu0 %729
      %731 = vrot.lane.b32.xlu0 %v341, 32
      %v732 = vpop.permute.xlu0 %731
      %733 = vrot.lane.b32.xlu0 %v344, 32
      %v734 = vpop.permute.xlu0 %733
      %735 = vrot.lane.b32.xlu0 %v346, 32
      %v736 = vpop.permute.xlu0 %735
      %737 = vrot.lane.b32.xlu0 %v349, 32
      %v738 = vpop.permute.xlu0 %737
      %739 = vrot.lane.b32.xlu0 %v351, 32
      %v740 = vpop.permute.xlu0 %739
      %741 = vrot.lane.b32.xlu0 %v354, 32
      %v742 = vpop.permute.xlu0 %741
      %743 = vrot.lane.b32.xlu0 %v356, 32
      %v744 = vpop.permute.xlu0 %743
      %745 = vrot.lane.b32.xlu0 %v359, 32
      %v746 = vpop.permute.xlu0 %745
      %747 = vrot.lane.b32.xlu0 %v361, 32
      %v748 = vpop.permute.xlu0 %747
      %749 = vrot.lane.b32.xlu0 %v364, 32
      %v750 = vpop.permute.xlu0 %749
      %751 = vrot.lane.b32.xlu0 %v366, 32
      %v752 = vpop.permute.xlu0 %751
      %753 = vrot.lane.b32.xlu0 %v377, 32
      %v754 = vpop.permute.xlu0 %753
      %755 = vrot.lane.b32.xlu0 %v379, 32
      %v756 = vpop.permute.xlu0 %755
      %757 = vrot.lane.b32.xlu0 %v390, 32
      %v758 = vpop.permute.xlu0 %757
      %759 = vrot.lane.b32.xlu0 %v392, 32
      %v760 = vpop.permute.xlu0 %759
      %vm777 = vcmask 31744
      %v778 = vsel %vm777, %v231, %v394
      %v779 = vsel %vm777, %v232, %v396
      %v780 = vsel %vm777, %v234, %v398
      %v781 = vsel %vm777, %v235, %v400
      %v782 = vsel %vm777, %v237, %v402
      %v783 = vsel %vm777, %v238, %v404
      %v784 = vsel %vm777, %v240, %v406
      %v785 = vsel %vm777, %v241, %v408
      %v786 = vsel %vm777, %v243, %v410
      %v787 = vsel %vm777, %v244, %v412
      %v788 = vsel %vm777, %v246, %v414
      %v789 = vsel %vm777, %v247, %v416
      %v790 = vsel %vm777, %v249, %v418
      %v791 = vsel %vm777, %v250, %v420
      %v792 = vsel %vm777, %v252, %v422
      %v793 = vsel %vm777, %v253, %v424
      %vm794 = vcmask 64512
      %v795 = vsel %vm794, %v778, %v442
      %v796 = vsel %vm794, %v779, %v444
      %v797 = vsel %vm794, %v780, %v446
      %v798 = vsel %vm794, %v781, %v448
      %v799 = vsel %vm794, %v782, %v450
      %v800 = vsel %vm794, %v783, %v452
      %v801 = vsel %vm794, %v784, %v454
      %v802 = vsel %vm794, %v785, %v456
      %v803 = vsel %vm794, %v786, %v458
      %v804 = vsel %vm794, %v787, %v460
      %v805 = vsel %vm794, %v788, %v462
      %v806 = vsel %vm794, %v789, %v464
      %v807 = vsel %vm794, %v790, %v466
      %v808 = vsel %vm794, %v791, %v468
      %v809 = vsel %vm794, %v792, %v470
      %v810 = vsel %vm794, %v793, %v472
      %vm811 = vcmask 97280
      %v812 = vsel %vm811, %v795, %v490
      %v813 = vsel %vm811, %v796, %v492
      %v814 = vsel %vm811, %v797, %v494
      %v815 = vsel %vm811, %v798, %v496
      %v816 = vsel %vm811, %v799, %v498
      %v817 = vsel %vm811, %v800, %v500
      %v818 = vsel %vm811, %v801, %v502
      %v819 = vsel %vm811, %v802, %v504
      %v820 = vsel %vm811, %v803, %v506
      %v821 = vsel %vm811, %v804, %v508
      %v822 = vsel %vm811, %v805, %v510
      %v823 = vsel %vm811, %v806, %v512
      %v824 = vsel %vm811, %v807, %v514
      %v825 = vsel %vm811, %v808, %v516
      %v826 = vsel %vm811, %v809, %v518
      %v827 = vsel %vm811, %v810, %v520
      %vm828 = vcmask 130048
      %v829 = vsel %vm828, %v812, %v538
      %v830 = vsel %vm828, %v813, %v540
      %v831 = vsel %vm828, %v814, %v542
      %v832 = vsel %vm828, %v815, %v544
      %v833 = vsel %vm828, %v816, %v546
      %v834 = vsel %vm828, %v817, %v548
      %v835 = vsel %vm828, %v818, %v550
      %v836 = vsel %vm828, %v819, %v552
      %v837 = vsel %vm828, %v820, %v554
      %v838 = vsel %vm828, %v821, %v556
      %v839 = vsel %vm828, %v822, %v558
      %v840 = vsel %vm828, %v823, %v560
      %v841 = vsel %vm828, %v824, %v562
      %v842 = vsel %vm828, %v825, %v564
      %v843 = vsel %vm828, %v826, %v566
      %v844 = vsel %vm828, %v827, %v568
      %vm845 = vcmask 162816
      %v846 = vsel %vm845, %v829, %v586
      %v847 = vsel %vm845, %v830, %v588
      %v848 = vsel %vm845, %v831, %v590
      %v849 = vsel %vm845, %v832, %v592
      %v850 = vsel %vm845, %v833, %v594
      %v851 = vsel %vm845, %v834, %v596
      %v852 = vsel %vm845, %v835, %v598
      %v853 = vsel %vm845, %v836, %v600
      %v854 = vsel %vm845, %v837, %v602
      %v855 = vsel %vm845, %v838, %v604
      %v856 = vsel %vm845, %v839, %v606
      %v857 = vsel %vm845, %v840, %v608
      %v858 = vsel %vm845, %v841, %v610
      %v859 = vsel %vm845, %v842, %v612
      %v860 = vsel %vm845, %v843, %v614
      %v861 = vsel %vm845, %v844, %v616
      %vm862 = vcmask 195584
      %v863 = vsel %vm862, %v846, %v634
      %v864 = vsel %vm862, %v847, %v636
      %v865 = vsel %vm862, %v848, %v638
      %v866 = vsel %vm862, %v849, %v640
      %v867 = vsel %vm862, %v850, %v642
      %v868 = vsel %vm862, %v851, %v644
      %v869 = vsel %vm862, %v852, %v646
      %v870 = vsel %vm862, %v853, %v648
      %v871 = vsel %vm862, %v854, %v650
      %v872 = vsel %vm862, %v855, %v652
      %v873 = vsel %vm862, %v856, %v654
      %v874 = vsel %vm862, %v857, %v656
      %v875 = vsel %vm862, %v858, %v658
      %v876 = vsel %vm862, %v859, %v660
      %v877 = vsel %vm862, %v860, %v662
      %v878 = vsel %vm862, %v861, %v664
      %vm879 = vcmask 228352
      %v880 = vsel %vm879, %v863, %v682
      %v881 = vsel %vm879, %v864, %v684
      %v882 = vsel %vm879, %v865, %v686
      %v883 = vsel %vm879, %v866, %v688
      %v884 = vsel %vm879, %v867, %v690
      %v885 = vsel %vm879, %v868, %v692
      %v886 = vsel %vm879, %v869, %v694
      %v887 = vsel %vm879, %v870, %v696
      %v888 = vsel %vm879, %v871, %v698
      %v889 = vsel %vm879, %v872, %v700
      %v890 = vsel %vm879, %v873, %v702
      %v891 = vsel %vm879, %v874, %v704
      %v892 = vsel %vm879, %v875, %v706
      %v893 = vsel %vm879, %v876, %v708
      %v894 = vsel %vm879, %v877, %v710
      %v895 = vsel %vm879, %v878, %v712
      %vm896 = vcmask 261120
      %v897 = vsel %vm896, %v880, %v730
      %v898 = vsel %vm896, %v881, %v732
      %v899 = vsel %vm896, %v882, %v734
      %v900 = vsel %vm896, %v883, %v736
      %v901 = vsel %vm896, %v884, %v738
      %v902 = vsel %vm896, %v885, %v740
      %v903 = vsel %vm896, %v886, %v742
      %v904 = vsel %vm896, %v887, %v744
      %v905 = vsel %vm896, %v888, %v746
      %v906 = vsel %vm896, %v889, %v748
      %v907 = vsel %vm896, %v890, %v750
      %v908 = vsel %vm896, %v891, %v752
      %v909 = vsel %vm896, %v892, %v754
      %v910 = vsel %vm896, %v893, %v756
      %v911 = vsel %vm896, %v894, %v758
      %v912 = vsel %vm896, %v895, %v760
      %v913 = vpack.c.bf16 %v898, %v897
      %v914 = vpack.c.bf16 %v900, %v899
      %v915 = vpack.c.bf16 %v902, %v901
      %v916 = vpack.c.bf16 %v904, %v903
      %v917 = vpack.c.bf16 %v906, %v905
      %v918 = vpack.c.bf16 %v908, %v907
      %v919 = vpack.c.bf16 %v910, %v909
      %v920 = vpack.c.bf16 %v912, %v911
      %v921 = vld [vmem:[%s1] sm:$0xf]
      %v922 = vld [vmem:[%s1 + $0x4] sm:$0xf]
      %v923 = vld [vmem:[%s1 + $0x8] sm:$0xf]
      %v924 = vld [vmem:[%s1 + $0xc] sm:$0xf]
      %v925 = vld [vmem:[%s1 + $0x10] sm:$0x3]
      %v926 = vld [vmem:[%s2] sm:$0x1]
      %v928 = vperm.slane %v926, 0
      %v935 = vunpack.c.l.b16 %v921
      %v936 = vunpack.c.l.b16 %v922
      %v937 = vunpack.c.l.b16 %v923
      %v938 = vunpack.c.l.b16 %v924
      %v939 = vunpack.c.l.b16 %v925
      %v940 = vpack.c.b16 %v936, %v935
      %v941 = vpack.c.b16 %v938, %v937
      %v942 = vpack.c.b16 %v939, %v939
      %vm945 = vcmask 293888
      %v947 = vsel %vm945, %v913, 0
      %v950 = vsel %vm945, %v914, 0
      %v953 = vsel %vm945, %v915, 0
      %v956 = vsel %vm945, %v916, 0
      %v959 = vsel %vm945, %v917, 0
      %v962 = vsel %vm945, %v918, 0
      %v965 = vsel %vm945, %v919, 0
      %v968 = vsel %vm945, %v920, 0
      %vm970 = vcmask 1041408
      %v972 = vsel %vm970, %v942, 0
      %974 = vmatpush.bf16.msra.mxu0 0
      %975 = vmatpush.bf16.msra.mxu0 0
      %976 = vmatpush.bf16.msra.mxu0 0
      %977 = vmatpush.bf16.msra.mxu0 0
      %978 = vmatpush.bf16.msra.mxu0 0
      %979 = vmatpush.bf16.msra.mxu0 %v972
      %980 = vmatpush.bf16.msra.mxu0 %v941
      %981 = vmatpush.bf16.msra.mxu0 %v940
      %982 = vmatmul.bf16.gmra.mxu0 %v947
      %v983 = vpop.f32.mrf.mxu0
      %v984 = vadd.f32 %v928, %v983
      %v985 = vpop.f32.mrf.mxu0
      %v986 = vadd.f32 %v928, %v985
      %987 = vmatmul.bf16.gmra.mxu0 %v950
      %v988 = vpop.f32.mrf.mxu0
      %v989 = vadd.f32 %v928, %v988
      %v990 = vpop.f32.mrf.mxu0
      %v991 = vadd.f32 %v928, %v990
      %992 = vmatmul.bf16.gmra.mxu0 %v953
      %v993 = vpop.f32.mrf.mxu0
      %v994 = vadd.f32 %v928, %v993
      %v995 = vpop.f32.mrf.mxu0
      %v996 = vadd.f32 %v928, %v995
      %997 = vmatmul.bf16.gmra.mxu0 %v956
      %v998 = vpop.f32.mrf.mxu0
      %v999 = vadd.f32 %v928, %v998
      %v1000 = vpop.f32.mrf.mxu0
      %v1001 = vadd.f32 %v928, %v1000
      %1002 = vmatmul.bf16.gmra.mxu0 %v959
      %v1003 = vpop.f32.mrf.mxu0
      %v1004 = vadd.f32 %v928, %v1003
      %v1005 = vpop.f32.mrf.mxu0
      %v1006 = vadd.f32 %v928, %v1005
      %1007 = vmatmul.bf16.gmra.mxu0 %v962
      %v1008 = vpop.f32.mrf.mxu0
      %v1009 = vadd.f32 %v928, %v1008
      %v1010 = vpop.f32.mrf.mxu0
      %v1011 = vadd.f32 %v928, %v1010
      %1012 = vmatmul.bf16.gmra.mxu0 %v965
      %v1013 = vpop.f32.mrf.mxu0
      %v1014 = vadd.f32 %v928, %v1013
      %v1015 = vpop.f32.mrf.mxu0
      %v1016 = vadd.f32 %v928, %v1015
      %1017 = vmatmul.bf16.gmra.mxu0 %v968
      %v1018 = vpop.f32.mrf.mxu0
      %v1019 = vadd.f32 %v928, %v1018
      %v1020 = vpop.f32.mrf.mxu0
      %v1021 = vadd.f32 %v928, %v1020
      %1022 = vdwg.mxu0
      %v1023 = vmax.f32 %v984, 0.0
      %v1024 = vmax.f32 %v986, 0.0
      %v1025 = vmax.f32 %v989, 0.0
      %v1026 = vmax.f32 %v991, 0.0
      %v1027 = vmax.f32 %v994, 0.0
      %v1028 = vmax.f32 %v996, 0.0
      %v1029 = vmax.f32 %v999, 0.0
      %v1030 = vmax.f32 %v1001, 0.0
      %v1031 = vmax.f32 %v1004, 0.0
      %v1032 = vmax.f32 %v1006, 0.0
      %v1033 = vmax.f32 %v1009, 0.0
      %v1034 = vmax.f32 %v1011, 0.0
      %v1035 = vmax.f32 %v1014, 0.0
      %v1036 = vmax.f32 %v1016, 0.0
      %v1037 = vmax.f32 %v1019, 0.0
      %v1038 = vmax.f32 %v1021, 0.0
      %v1039 = vpack.c.bf16 %v1023, %v1023
      %v1040 = vpack.c.bf16 %v1024, %v1024
      %v1041 = vpack.c.bf16 %v1025, %v1025
      %v1042 = vpack.c.bf16 %v1026, %v1026
      %v1043 = vpack.c.bf16 %v1027, %v1027
      %v1044 = vpack.c.bf16 %v1028, %v1028
      %v1045 = vpack.c.bf16 %v1029, %v1029
      %v1046 = vpack.c.bf16 %v1030, %v1030
      %v1047 = vpack.c.bf16 %v1031, %v1031
      %v1048 = vpack.c.bf16 %v1032, %v1032
      %v1049 = vpack.c.bf16 %v1033, %v1033
      %v1050 = vpack.c.bf16 %v1034, %v1034
      %v1051 = vpack.c.bf16 %v1035, %v1035
      %v1052 = vpack.c.bf16 %v1036, %v1036
      %v1053 = vpack.c.bf16 %v1037, %v1037
      %v1054 = vpack.c.bf16 %v1038, %v1038
      %vm1055 = vcmask 60416
      %1056 = vst.msk [vmem:[%s194] sm:$0xf] %vm1055, %v1039
      %1057 = vst.msk [vmem:[%s194 + $0x4] sm:$0xf] %vm1055, %v1040
      %1058 = vst.msk [vmem:[%s194 + $0x8] sm:$0xf] %vm1055, %v1041
      %1059 = vst.msk [vmem:[%s194 + $0xc] sm:$0xf] %vm1055, %v1042
      %1060 = vst.msk [vmem:[%s194 + $0x10] sm:$0xf] %vm1055, %v1043
      %1061 = vst.msk [vmem:[%s194 + $0x14] sm:$0xf] %vm1055, %v1044
      %1062 = vst.msk [vmem:[%s194 + $0x18] sm:$0xf] %vm1055, %v1045
      %1063 = vst.msk [vmem:[%s194 + $0x1c] sm:$0xf] %vm1055, %v1046
      %1064 = vst.msk [vmem:[%s194 + $0x20] sm:$0xf] %vm1055, %v1047
      %1065 = vst.msk [vmem:[%s194 + $0x24] sm:$0xf] %vm1055, %v1048
      %1066 = vst.msk [vmem:[%s194 + $0x28] sm:$0xf] %vm1055, %v1049
      %1067 = vst.msk [vmem:[%s194 + $0x2c] sm:$0xf] %vm1055, %v1050
      %1068 = vst.msk [vmem:[%s194 + $0x30] sm:$0xf] %vm1055, %v1051
      %1069 = vst.msk [vmem:[%s194 + $0x34] sm:$0xf] %vm1055, %v1052
      %1070 = vst.msk [vmem:[%s194 + $0x38] sm:$0xf] %vm1055, %v1053
      %1071 = vst.msk [vmem:[%s194 + $0x3c] sm:$0xf] %vm1055, %v1054
      %s1072 = smul.u32 8, %s19
      %p1073 = scmp.lt.s32.totalorder %s18, 1
      %s1074 = scalar_select %p1073, %s18, 1
      %p1075 = scmp.lt.s32.totalorder %s1072, 15
      %s1076 = scalar_select %p1075, %s1072, 15
      %s1077 = smul.addr %s1076, 2
      %s1078 = smul.addr %s1074, 32
      %s1079 = sadd.s32 %s1077, %s1078
      %s1080 = smul.addr %s1079, 4
      %s1081 = scalar_lea.vmem %s3, %s1080
      // Predicated region
      $region33: #{inception_2_forward.7} parent=31 // pred_check
        %p1082 = pneg %p114
      $region34: #{inception_2_forward.7} parent=31 // pred_check_branch
        %1084 = sbr.rel (%p1082) target = $region36
      $region35: #{inception_2_forward.7} parent=31 // pred_region
        %s1085 = smul.u32 8, %s19
      $region36: #{inception_2_forward.7} parent=31 // pred_fallthru
        _
    $region32: #{inception_2_forward.7} parent=5 // pred_fallthru
      _
    %p1086 = scmp.le.s32.totalorder 2, %s9
    // Predicated region
    $region37: #{inception_2_forward.7} parent=5 // pred_check
      %p1087 = pneg %p1086
    $region38: #{inception_2_forward.7} parent=5 // pred_check_branch
      %1089 = sbr.rel (%p1087) target = $region40
    $region39: #{inception_2_forward.7} parent=5 // pred_region
      %s1090 = ssub.s32 %s9, 2
      // Predicated region
      $region41: #{inception_2_forward.7} parent=39 // pred_check
        %p1091 = pneg %p120
      $region42: #{inception_2_forward.7} parent=39 // pred_check_branch
        %1093 = sbr.rel (%p1091) target = $region44
      $region43: #{inception_2_forward.7} parent=39 // pred_region
        %s1094 = smul.u32 8, %s21
        %p1095 = scmp.lt.s32.totalorder %s20, 1
        %s1096 = scalar_select %p1095, %s20, 1
        %p1097 = scmp.lt.s32.totalorder %s1094, 15
        %s1098 = scalar_select %p1097, %s1094, 15
        %s1099 = smul.addr %s1098, 2
        %s1100 = smul.addr %s1096, 32
        %s1101 = sadd.s32 %s1099, %s1100
        %s1102 = smul.addr %s1101, 4
        %s1103 = scalar_lea.vmem %s3, %s1102
      $region44: #{inception_2_forward.7} parent=39 // pred_fallthru
        _
    $region40: #{inception_2_forward.7} parent=5 // pred_fallthru
      _
  $region6: #{inception_2_forward.7} parent=0 // loop_footer
    %s13 = sadd.s32 1, %s9
  $region7: #{inception_2_forward.7} parent=0 // loop_footer_branch
    %8 = sbr.rel target = $region3
  $region8: #{inception_2_forward.7} parent=0 // loop_exit
    _

// kernel: inception_2_forward.5
$region0: #{inception_2_forward.5}
  #allocation0 [shape = 'u32[]', space=smem, size = 0x4, offset = 0x4, fixed_abs, tag = 'smem constant byte address 0x4 - core index']
  #allocation1 [shape = 'u32[72,128]{1,0:T(1,128)}', space=vmem, size = 0x9000, scoped, tag = 'internal scratch']
  %s0 = inlined_call_operand.vmem [shape: bf16[512,8], index: 0, kind: input, shape index: {}]
  %s1 = inlined_call_operand.vmem [shape: bf16[8,8], index: 1, kind: input, shape index: {}]
  %s2 = inlined_call_operand.vmem [shape: bf16[8,8], index: 2, kind: input, shape index: {}]
  %s3 = inlined_call_operand.vmem [shape: bf16[8,4], index: 3, kind: input, shape index: {}]
  %s4 = inlined_call_operand.vmem [shape: f32[1,8], index: 4, kind: input, shape index: {}]
  %s5 = inlined_call_operand.vmem [shape: f32[1,8], index: 5, kind: input, shape index: {}]
  %s6 = inlined_call_operand.vmem [shape: f32[1,4], index: 6, kind: input, shape index: {}]
  %s7 = inlined_call_operand.vmem [shape: f32[512,8], index: 7, kind: output, shape index: {0}]
  %s8 = inlined_call_operand.vmem [shape: bf16[512,8], index: 8, kind: output, shape index: {1}]
  %s9 = inlined_call_operand.vmem [shape: bf16[512,4], index: 9, kind: output, shape index: {2}]
  %10 = xla_tuple %s7, %s8, %s9
  %s11 = sld [smem:[#allocation0]]
  $region54: #{inception_2_forward.5} parent=0
    _
  %s13 = ssub.s32 1, %s11
  %s14 = scalar_select 0, %s13, %s11
  // Predicated region
  $region2: #{inception_2_forward.5} parent=0 // pred_check
    _
  $region3: #{inception_2_forward.5} parent=0 // pred_check_branch
    %16 = sbr.rel (0) target = $region5
  $region4: #{inception_2_forward.5} parent=0 // pred_region
    _
  $region5: #{inception_2_forward.5} parent=0 // pred_fallthru
    _
  // Predicated region
  $region6: #{inception_2_forward.5} parent=0 // pred_check
    _
  $region7: #{inception_2_forward.5} parent=0 // pred_check_branch
    %18 = sbr.rel (0) target = $region9
  $region8: #{inception_2_forward.5} parent=0 // pred_region
    _
  $region9: #{inception_2_forward.5} parent=0 // pred_fallthru
    _
  // Predicated region
  $region10: #{inception_2_forward.5} parent=0 // pred_check
    _
  $region11: #{inception_2_forward.5} parent=0 // pred_check_branch
    %20 = sbr.rel (0) target = $region13
  $region12: #{inception_2_forward.5} parent=0 // pred_region
    _
  $region13: #{inception_2_forward.5} parent=0 // pred_fallthru
    _
  // Predicated region
  $region14: #{inception_2_forward.5} parent=0 // pred_check
    _
  $region15: #{inception_2_forward.5} parent=0 // pred_check_branch
    %22 = sbr.rel (0) target = $region17
  $region16: #{inception_2_forward.5} parent=0 // pred_region
    _
  $region17: #{inception_2_forward.5} parent=0 // pred_fallthru
    _
  // Predicated region
  $region18: #{inception_2_forward.5} parent=0 // pred_check
    _
  $region19: #{inception_2_forward.5} parent=0 // pred_check_branch
    %24 = sbr.rel (0) target = $region21
  $region20: #{inception_2_forward.5} parent=0 // pred_region
    _
  $region21: #{inception_2_forward.5} parent=0 // pred_fallthru
    _
  // Predicated region
  $region22: #{inception_2_forward.5} parent=0 // pred_check
    _
  $region23: #{inception_2_forward.5} parent=0 // pred_check_branch
    %26 = sbr.rel (0) target = $region25
  $region24: #{inception_2_forward.5} parent=0 // pred_region
    _
  $region25: #{inception_2_forward.5} parent=0 // pred_fallthru
    _
  // Predicated region
  $region26: #{inception_2_forward.5} parent=0 // pred_check
    _
  $region27: #{inception_2_forward.5} parent=0 // pred_check_branch
    %28 = sbr.rel (0) target = $region29
  $region28: #{inception_2_forward.5} parent=0 // pred_region
    _
  $region29: #{inception_2_forward.5} parent=0 // pred_fallthru
    _
  %v30 = vld [vmem:[%s0] sm:$0xf]
  %v31 = vld [vmem:[%s0 + $0x4] sm:$0xf]
  %v32 = vld [vmem:[%s0 + $0x8] sm:$0xf]
  %v33 = vld [vmem:[%s0 + $0xc] sm:$0xf]
  %v34 = vld [vmem:[%s0 + $0x10] sm:$0xf]
  %v35 = vld [vmem:[%s0 + $0x14] sm:$0xf]
  %v36 = vld [vmem:[%s0 + $0x18] sm:$0xf]
  %v37 = vld [vmem:[%s0 + $0x1c] sm:$0xf]
  %v38 = vld [vmem:[%s0 + $0x20] sm:$0xf]
  %v39 = vld [vmem:[%s0 + $0x24] sm:$0xf]
  %v40 = vld [vmem:[%s0 + $0x28] sm:$0xf]
  %v41 = vld [vmem:[%s0 + $0x2c] sm:$0xf]
  %v42 = vld [vmem:[%s0 + $0x30] sm:$0xf]
  %v43 = vld [vmem:[%s0 + $0x34] sm:$0xf]
  %v44 = vld [vmem:[%s0 + $0x38] sm:$0xf]
  %v45 = vld [vmem:[%s0 + $0x3c] sm:$0xf]
  %v46 = vld [vmem:[%s0 + $0x40] sm:$0xf]
  %v47 = vld [vmem:[%s0 + $0x44] sm:$0xf]
  %v48 = vld [vmem:[%s0 + $0x48] sm:$0xf]
  %v49 = vld [vmem:[%s0 + $0x4c] sm:$0xf]
  %v50 = vld [vmem:[%s0 + $0x50] sm:$0xf]
  %v51 = vld [vmem:[%s0 + $0x54] sm:$0xf]
  %v52 = vld [vmem:[%s0 + $0x58] sm:$0xf]
  %v53 = vld [vmem:[%s0 + $0x5c] sm:$0xf]
  %v54 = vld [vmem:[%s0 + $0x60] sm:$0xf]
  %v55 = vld [vmem:[%s0 + $0x64] sm:$0xf]
  %v56 = vld [vmem:[%s0 + $0x68] sm:$0xf]
  %v57 = vld [vmem:[%s0 + $0x6c] sm:$0xf]
  %v58 = vld [vmem:[%s0 + $0x70] sm:$0xf]
  %v59 = vld [vmem:[%s0 + $0x74] sm:$0xf]
  %v60 = vld [vmem:[%s0 + $0x78] sm:$0xf]
  %v61 = vld [vmem:[%s0 + $0x7c] sm:$0xf]
  %v62 = vld [vmem:[%s0 + $0x80] sm:$0xf]
  %v63 = vld [vmem:[%s0 + $0x84] sm:$0xf]
  %v64 = vld [vmem:[%s0 + $0x88] sm:$0xf]
  %v65 = vld [vmem:[%s0 + $0x8c] sm:$0xf]
  %v66 = vld [vmem:[%s0 + $0x90] sm:$0xf]
  %v67 = vld [vmem:[%s0 + $0x94] sm:$0xf]
  %v68 = vld [vmem:[%s0 + $0x98] sm:$0xf]
  %v69 = vld [vmem:[%s0 + $0x9c] sm:$0xf]
  %v70 = vld [vmem:[%s0 + $0xa0] sm:$0xf]
  %v71 = vld [vmem:[%s0 + $0xa4] sm:$0xf]
  %v72 = vld [vmem:[%s0 + $0xa8] sm:$0xf]
  %v73 = vld [vmem:[%s0 + $0xac] sm:$0xf]
  %v74 = vld [vmem:[%s0 + $0xb0] sm:$0xf]
  %v75 = vld [vmem:[%s0 + $0xb4] sm:$0xf]
  %v76 = vld [vmem:[%s0 + $0xb8] sm:$0xf]
  %v77 = vld [vmem:[%s0 + $0xbc] sm:$0xf]
  %v78 = vld [vmem:[%s0 + $0xc0] sm:$0xf]
  %v79 = vld [vmem:[%s0 + $0xc4] sm:$0xf]
  %v80 = vld [vmem:[%s0 + $0xc8] sm:$0xf]
  %v81 = vld [vmem:[%s0 + $0xcc] sm:$0xf]
  %v82 = vld [vmem:[%s0 + $0xd0] sm:$0xf]
  %v83 = vld [vmem:[%s0 + $0xd4] sm:$0xf]
  %v84 = vld [vmem:[%s0 + $0xd8] sm:$0xf]
  %v85 = vld [vmem:[%s0 + $0xdc] sm:$0xf]
  %v86 = vld [vmem:[%s0 + $0xe0] sm:$0xf]
  %v87 = vld [vmem:[%s0 + $0xe4] sm:$0xf]
  %v88 = vld [vmem:[%s0 + $0xe8] sm:$0xf]
  %v89 = vld [vmem:[%s0 + $0xec] sm:$0xf]
  %v90 = vld [vmem:[%s0 + $0xf0] sm:$0xf]
  %v91 = vld [vmem:[%s0 + $0xf4] sm:$0xf]
  %v92 = vld [vmem:[%s0 + $0xf8] sm:$0xf]
  %v93 = vld [vmem:[%s0 + $0xfc] sm:$0xf]
  %v94 = vld [vmem:[%s1] sm:$0xf]
  %v95 = vld [vmem:[%s4] sm:$0x1]
  %v97 = vperm.slane %v95, 0
  %v163 = vunpack.c.l.b16 %v30
  %v164 = vunpack.c.l.b16 %v31
  %v165 = vunpack.c.l.b16 %v32
  %v166 = vunpack.c.l.b16 %v33
  %v167 = vunpack.c.l.b16 %v34
  %v168 = vunpack.c.l.b16 %v35
  %v169 = vunpack.c.l.b16 %v36
  %v170 = vunpack.c.l.b16 %v37
  %v171 = vunpack.c.l.b16 %v38
  %v172 = vunpack.c.l.b16 %v39
  %v173 = vunpack.c.l.b16 %v40
  %v174 = vunpack.c.l.b16 %v41
  %v175 = vunpack.c.l.b16 %v42
  %v176 = vunpack.c.l.b16 %v43
  %v177 = vunpack.c.l.b16 %v44
  %v178 = vunpack.c.l.b16 %v45
  %v179 = vunpack.c.l.b16 %v46
  %v180 = vunpack.c.l.b16 %v47
  %v181 = vunpack.c.l.b16 %v48
  %v182 = vunpack.c.l.b16 %v49
  %v183 = vunpack.c.l.b16 %v50
  %v184 = vunpack.c.l.b16 %v51
  %v185 = vunpack.c.l.b16 %v52
  %v186 = vunpack.c.l.b16 %v53
  %v187 = vunpack.c.l.b16 %v54
  %v188 = vunpack.c.l.b16 %v55
  %v189 = vunpack.c.l.b16 %v56
  %v190 = vunpack.c.l.b16 %v57
  %v191 = vunpack.c.l.b16 %v58
  %v192 = vunpack.c.l.b16 %v59
  %v193 = vunpack.c.l.b16 %v60
  %v194 = vunpack.c.l.b16 %v61
  %v195 = vunpack.c.l.b16 %v62
  %v196 = vunpack.c.l.b16 %v63
  %v197 = vunpack.c.l.b16 %v64
  %v198 = vunpack.c.l.b16 %v65
  %v199 = vunpack.c.l.b16 %v66
  %v200 = vunpack.c.l.b16 %v67
  %v201 = vunpack.c.l.b16 %v68
  %v202 = vunpack.c.l.b16 %v69
  %v203 = vunpack.c.l.b16 %v70
  %v204 = vunpack.c.l.b16 %v71
  %v205 = vunpack.c.l.b16 %v72
  %v206 = vunpack.c.l.b16 %v73
  %v207 = vunpack.c.l.b16 %v74
  %v208 = vunpack.c.l.b16 %v75
  %v209 = vunpack.c.l.b16 %v76
  %v210 = vunpack.c.l.b16 %v77
  %v211 = vunpack.c.l.b16 %v78
  %v212 = vunpack.c.l.b16 %v79
  %v213 = vunpack.c.l.b16 %v80
  %v214 = vunpack.c.l.b16 %v81
  %v215 = vunpack.c.l.b16 %v82
  %v216 = vunpack.c.l.b16 %v83
  %v217 = vunpack.c.l.b16 %v84
  %v218 = vunpack.c.l.b16 %v85
  %v219 = vunpack.c.l.b16 %v86
  %v220 = vunpack.c.l.b16 %v87
  %v221 = vunpack.c.l.b16 %v88
  %v222 = vunpack.c.l.b16 %v89
  %v223 = vunpack.c.l.b16 %v90
  %v224 = vunpack.c.l.b16 %v91
  %v225 = vunpack.c.l.b16 %v92
  %v226 = vunpack.c.l.b16 %v93
  %v227 = vpack.c.b16 %v164, %v163
  %v228 = vpack.c.b16 %v166, %v165
  %v229 = vpack.c.b16 %v168, %v167
  %v230 = vpack.c.b16 %v170, %v169
  %v231 = vpack.c.b16 %v172, %v171
  %v232 = vpack.c.b16 %v174, %v173
  %v233 = vpack.c.b16 %v176, %v175
  %v234 = vpack.c.b16 %v178, %v177
  %v235 = vpack.c.b16 %v180, %v179
  %v236 = vpack.c.b16 %v182, %v181
  %v237 = vpack.c.b16 %v184, %v183
  %v238 = vpack.c.b16 %v186, %v185
  %v239 = vpack.c.b16 %v188, %v187
  %v240 = vpack.c.b16 %v190, %v189
  %v241 = vpack.c.b16 %v192, %v191
  %v242 = vpack.c.b16 %v194, %v193
  %v243 = vpack.c.b16 %v196, %v195
  %v244 = vpack.c.b16 %v198, %v197
  %v245 = vpack.c.b16 %v200, %v199
  %v246 = vpack.c.b16 %v202, %v201
  %v247 = vpack.c.b16 %v204, %v203
  %v248 = vpack.c.b16 %v206, %v205
  %v249 = vpack.c.b16 %v208, %v207
  %v250 = vpack.c.b16 %v210, %v209
  %v251 = vpack.c.b16 %v212, %v211
  %v252 = vpack.c.b16 %v214, %v213
  %v253 = vpack.c.b16 %v216, %v215
  %v254 = vpack.c.b16 %v218, %v217
  %v255 = vpack.c.b16 %v220, %v219
  %v256 = vpack.c.b16 %v222, %v221
  %v257 = vpack.c.b16 %v224, %v223
  %v258 = vpack.c.b16 %v226, %v225
  %vm259 = vcmask 64512
  %v261 = vsel %vm259, %v227, 0
  %v264 = vsel %vm259, %v228, 0
  %v267 = vsel %vm259, %v229, 0
  %v270 = vsel %vm259, %v230, 0
  %v273 = vsel %vm259, %v231, 0
  %v276 = vsel %vm259, %v232, 0
  %v279 = vsel %vm259, %v233, 0
  %v282 = vsel %vm259, %v234, 0
  %v285 = vsel %vm259, %v235, 0
  %v288 = vsel %vm259, %v236, 0
  %v291 = vsel %vm259, %v237, 0
  %v294 = vsel %vm259, %v238, 0
  %v297 = vsel %vm259, %v239, 0
  %v300 = vsel %vm259, %v240, 0
  %v303 = vsel %vm259, %v241, 0
  %v306 = vsel %vm259, %v242, 0
  %v309 = vsel %vm259, %v243, 0
  %v312 = vsel %vm259, %v244, 0
  %v315 = vsel %vm259, %v245, 0
  %v318 = vsel %vm259, %v246, 0
  %v321 = vsel %vm259, %v247, 0
  %v324 = vsel %vm259, %v248, 0
  %v327 = vsel %vm259, %v249, 0
  %v330 = vsel %vm259, %v250, 0
  %v333 = vsel %vm259, %v251, 0
  %v336 = vsel %vm259, %v252, 0
  %v339 = vsel %vm259, %v253, 0
  %v342 = vsel %vm259, %v254, 0
  %v345 = vsel %vm259, %v255, 0
  %v348 = vsel %vm259, %v256, 0
  %v351 = vsel %vm259, %v257, 0
  %v354 = vsel %vm259, %v258, 0
  %vm356 = vcmask 1043456
  %v358 = vsel %vm356, %v94, 0
  %360 = vmatpush.bf16.msra.mxu0 0
  %361 = vmatpush.bf16.msra.mxu0 0
  %362 = vmatpush.bf16.msra.mxu0 0
  %363 = vmatpush.bf16.msra.mxu0 0
  %364 = vmatpush.bf16.msra.mxu0 0
  %365 = vmatpush.bf16.msra.mxu0 0
  %366 = vmatpush.bf16.msra.mxu0 0
  %367 = vmatpush.bf16.msra.mxu0 %v358
  %368 = vmatmul.bf16.gmra.mxu0 %v261
  %v369 = vpop.f32.mrf.mxu0
  %v370 = vadd.f32 %v97, %v369
  %v371 = vpop.f32.mrf.mxu0
  %v372 = vadd.f32 %v97, %v371
  %373 = vmatmul.bf16.gmra.mxu0 %v264
  %v374 = vpop.f32.mrf.mxu0
  %v375 = vadd.f32 %v97, %v374
  %v376 = vpop.f32.mrf.mxu0
  %v377 = vadd.f32 %v97, %v376
  %378 = vmatmul.bf16.gmra.mxu0 %v267
  %v379 = vpop.f32.mrf.mxu0
  %v380 = vadd.f32 %v97, %v379
  %v381 = vpop.f32.mrf.mxu0
  %v382 = vadd.f32 %v97, %v381
  %383 = vmatmul.bf16.gmra.mxu0 %v270
  %v384 = vpop.f32.mrf.mxu0
  %v385 = vadd.f32 %v97, %v384
  %v386 = vpop.f32.mrf.mxu0
  %v387 = vadd.f32 %v97, %v386
  %388 = vmatmul.bf16.gmra.mxu0 %v273
  %v389 = vpop.f32.mrf.mxu0
  %v390 = vadd.f32 %v97, %v389
  %v391 = vpop.f32.mrf.mxu0
  %v392 = vadd.f32 %v97, %v391
  %393 = vmatmul.bf16.gmra.mxu0 %v276
  %v394 = vpop.f32.mrf.mxu0
  %v395 = vadd.f32 %v97, %v394
  %v396 = vpop.f32.mrf.mxu0
  %v397 = vadd.f32 %v97, %v396
  %398 = vmatmul.bf16.gmra.mxu0 %v279
  %v399 = vpop.f32.mrf.mxu0
  %v400 = vadd.f32 %v97, %v399
  %v401 = vpop.f32.mrf.mxu0
  %v402 = vadd.f32 %v97, %v401
  %403 = vmatmul.bf16.gmra.mxu0 %v282
  %v404 = vpop.f32.mrf.mxu0
  %v405 = vadd.f32 %v97, %v404
  %v406 = vpop.f32.mrf.mxu0
  %v407 = vadd.f32 %v97, %v406
  %408 = vmatmul.bf16.gmra.mxu0 %v285
  %v409 = vpop.f32.mrf.mxu0
  %v410 = vadd.f32 %v97, %v409
  %v411 = vpop.f32.mrf.mxu0
  %v412 = vadd.f32 %v97, %v411
  %413 = vmatmul.bf16.gmra.mxu0 %v288
  %v414 = vpop.f32.mrf.mxu0
  %v415 = vadd.f32 %v97, %v414
  %v416 = vpop.f32.mrf.mxu0
  %v417 = vadd.f32 %v97, %v416
  %418 = vmatmul.bf16.gmra.mxu0 %v291
  %v419 = vpop.f32.mrf.mxu0
  %v420 = vadd.f32 %v97, %v419
  %v421 = vpop.f32.mrf.mxu0
  %v422 = vadd.f32 %v97, %v421
  %423 = vmatmul.bf16.gmra.mxu0 %v294
  %v424 = vpop.f32.mrf.mxu0
  %v425 = vadd.f32 %v97, %v424
  %v426 = vpop.f32.mrf.mxu0
  %v427 = vadd.f32 %v97, %v426
  %428 = vmatmul.bf16.gmra.mxu0 %v297
  %v429 = vpop.f32.mrf.mxu0
  %v430 = vadd.f32 %v97, %v429
  %v431 = vpop.f32.mrf.mxu0
  %v432 = vadd.f32 %v97, %v431
  %433 = vmatmul.bf16.gmra.mxu0 %v300
  %v434 = vpop.f32.mrf.mxu0
  %v435 = vadd.f32 %v97, %v434
  %v436 = vpop.f32.mrf.mxu0
  %v437 = vadd.f32 %v97, %v436
  %438 = vmatmul.bf16.gmra.mxu0 %v303
  %v439 = vpop.f32.mrf.mxu0
  %v440 = vadd.f32 %v97, %v439
  %v441 = vpop.f32.mrf.mxu0
  %v442 = vadd.f32 %v97, %v441
  %443 = vmatmul.bf16.gmra.mxu0 %v306
  %v444 = vpop.f32.mrf.mxu0
  %v445 = vadd.f32 %v97, %v444
  %v446 = vpop.f32.mrf.mxu0
  %v447 = vadd.f32 %v97, %v446
  %448 = vmatmul.bf16.gmra.mxu0 %v309
  %v449 = vpop.f32.mrf.mxu0
  %v450 = vadd.f32 %v97, %v449
  %v451 = vpop.f32.mrf.mxu0
  %v452 = vadd.f32 %v97, %v451
  %453 = vmatmul.bf16.gmra.mxu0 %v312
  %v454 = vpop.f32.mrf.mxu0
  %v455 = vadd.f32 %v97, %v454
  %v456 = vpop.f32.mrf.mxu0
  %v457 = vadd.f32 %v97, %v456
  %458 = vmatmul.bf16.gmra.mxu0 %v315
  %v459 = vpop.f32.mrf.mxu0
  %v460 = vadd.f32 %v97, %v459
  %v461 = vpop.f32.mrf.mxu0
  %v462 = vadd.f32 %v97, %v461
  %463 = vmatmul.bf16.gmra.mxu0 %v318
  %v464 = vpop.f32.mrf.mxu0
  %v465 = vadd.f32 %v97, %v464
  %v466 = vpop.f32.mrf.mxu0
  %v467 = vadd.f32 %v97, %v466
  %468 = vmatmul.bf16.gmra.mxu0 %v321
  %v469 = vpop.f32.mrf.mxu0
  %v470 = vadd.f32 %v97, %v469
  %v471 = vpop.f32.mrf.mxu0
  %v472 = vadd.f32 %v97, %v471
  %473 = vmatmul.bf16.gmra.mxu0 %v324
  %v474 = vpop.f32.mrf.mxu0
  %v475 = vadd.f32 %v97, %v474
  %v476 = vpop.f32.mrf.mxu0
  %v477 = vadd.f32 %v97, %v476
  %478 = vmatmul.bf16.gmra.mxu0 %v327
  %v479 = vpop.f32.mrf.mxu0
  %v480 = vadd.f32 %v97, %v479
  %v481 = vpop.f32.mrf.mxu0
  %v482 = vadd.f32 %v97, %v481
  %483 = vmatmul.bf16.gmra.mxu0 %v330
  %v484 = vpop.f32.mrf.mxu0
  %v485 = vadd.f32 %v97, %v484
  %v486 = vpop.f32.mrf.mxu0
  %v487 = vadd.f32 %v97, %v486
  %488 = vmatmul.bf16.gmra.mxu0 %v333
  %v489 = vpop.f32.mrf.mxu0
  %v490 = vadd.f32 %v97, %v489
  %v491 = vpop.f32.mrf.mxu0
  %v492 = vadd.f32 %v97, %v491
  %493 = vmatmul.bf16.gmra.mxu0 %v336
  %v494 = vpop.f32.mrf.mxu0
  %v495 = vadd.f32 %v97, %v494
  %v496 = vpop.f32.mrf.mxu0
  %v497 = vadd.f32 %v97, %v496
  %498 = vmatmul.bf16.gmra.mxu0 %v339
  %v499 = vpop.f32.mrf.mxu0
  %v500 = vadd.f32 %v97, %v499
  %v501 = vpop.f32.mrf.mxu0
  %v502 = vadd.f32 %v97, %v501
  %503 = vmatmul.bf16.gmra.mxu0 %v342
  %v504 = vpop.f32.mrf.mxu0
  %v505 = vadd.f32 %v97, %v504
  %v506 = vpop.f32.mrf.mxu0
  %v507 = vadd.f32 %v97, %v506
  %508 = vmatmul.bf16.gmra.mxu0 %v345
  %v509 = vpop.f32.mrf.mxu0
  %v510 = vadd.f32 %v97, %v509
  %v511 = vpop.f32.mrf.mxu0
  %v512 = vadd.f32 %v97, %v511
  %513 = vmatmul.bf16.gmra.mxu0 %v348
  %v514 = vpop.f32.mrf.mxu0
  %v515 = vadd.f32 %v97, %v514
  %v516 = vpop.f32.mrf.mxu0
  %v517 = vadd.f32 %v97, %v516
  %518 = vmatmul.bf16.gmra.mxu0 %v351
  %v519 = vpop.f32.mrf.mxu0
  %v520 = vadd.f32 %v97, %v519
  %v521 = vpop.f32.mrf.mxu0
  %v522 = vadd.f32 %v97, %v521
  %523 = vmatmul.bf16.gmra.mxu0 %v354
  %v524 = vpop.f32.mrf.mxu0
  %v525 = vadd.f32 %v97, %v524
  %v526 = vpop.f32.mrf.mxu0
  %v527 = vadd.f32 %v97, %v526
  %528 = vdwg.mxu0
  %v529 = vmax.f32 %v370, 0.0
  %v530 = vmax.f32 %v372, 0.0
  %v531 = vmax.f32 %v375, 0.0
  %v532 = vmax.f32 %v377, 0.0
  %v533 = vmax.f32 %v380, 0.0
  %v534 = vmax.f32 %v382, 0.0
  %v535 = vmax.f32 %v385, 0.0
  %v536 = vmax.f32 %v387, 0.0
  %v537 = vmax.f32 %v390, 0.0
  %v538 = vmax.f32 %v392, 0.0
  %v539 = vmax.f32 %v395, 0.0
  %v540 = vmax.f32 %v397, 0.0
  %v541 = vmax.f32 %v400, 0.0
  %v542 = vmax.f32 %v402, 0.0
  %v543 = vmax.f32 %v405, 0.0
  %v544 = vmax.f32 %v407, 0.0
  %v545 = vmax.f32 %v410, 0.0
  %v546 = vmax.f32 %v412, 0.0
  %v547 = vmax.f32 %v415, 0.0
  %v548 = vmax.f32 %v417, 0.0
  %v549 = vmax.f32 %v420, 0.0
  %v550 = vmax.f32 %v422, 0.0
  %v551 = vmax.f32 %v425, 0.0
  %v552 = vmax.f32 %v427, 0.0
  %v553 = vmax.f32 %v430, 0.0
  %v554 = vmax.f32 %v432, 0.0
  %v555 = vmax.f32 %v435, 0.0
  %v556 = vmax.f32 %v437, 0.0
  %v557 = vmax.f32 %v440, 0.0
  %v558 = vmax.f32 %v442, 0.0
  %v559 = vmax.f32 %v445, 0.0
  %v560 = vmax.f32 %v447, 0.0
  %v561 = vmax.f32 %v450, 0.0
  %v562 = vmax.f32 %v452, 0.0
  %v563 = vmax.f32 %v455, 0.0
  %v564 = vmax.f32 %v457, 0.0
  %v565 = vmax.f32 %v460, 0.0
  %v566 = vmax.f32 %v462, 0.0
  %v567 = vmax.f32 %v465, 0.0
  %v568 = vmax.f32 %v467, 0.0
  %v569 = vmax.f32 %v470, 0.0
  %v570 = vmax.f32 %v472, 0.0
  %v571 = vmax.f32 %v475, 0.0
  %v572 = vmax.f32 %v477, 0.0
  %v573 = vmax.f32 %v480, 0.0
  %v574 = vmax.f32 %v482, 0.0
  %v575 = vmax.f32 %v485, 0.0
  %v576 = vmax.f32 %v487, 0.0
  %v577 = vmax.f32 %v490, 0.0
  %v578 = vmax.f32 %v492, 0.0
  %v579 = vmax.f32 %v495, 0.0
  %v580 = vmax.f32 %v497, 0.0
  %v581 = vmax.f32 %v500, 0.0
  %v582 = vmax.f32 %v502, 0.0
  %v583 = vmax.f32 %v505, 0.0
  %v584 = vmax.f32 %v507, 0.0
  %v585 = vmax.f32 %v510, 0.0
  %v586 = vmax.f32 %v512, 0.0
  %v587 = vmax.f32 %v515, 0.0
  %v588 = vmax.f32 %v517, 0.0
  %v589 = vmax.f32 %v520, 0.0
  %v590 = vmax.f32 %v522, 0.0
  %v591 = vmax.f32 %v525, 0.0
  %v592 = vmax.f32 %v527, 0.0
  %593 = vst.msk [vmem:[%s7] sm:$0xff] %vm259, %v529
  %594 = vst.msk [vmem:[%s7 + $0x8] sm:$0xff] %vm259, %v530
  %595 = vst.msk [vmem:[%s7 + $0x10] sm:$0xff] %vm259, %v531
  %596 = vst.msk [vmem:[%s7 + $0x18] sm:$0xff] %vm259, %v532
  %597 = vst.msk [vmem:[%s7 + $0x20] sm:$0xff] %vm259, %v533
  %598 = vst.msk [vmem:[%s7 + $0x28] sm:$0xff] %vm259, %v534
  %599 = vst.msk [vmem:[%s7 + $0x30] sm:$0xff] %vm259, %v535
  %600 = vst.msk [vmem:[%s7 + $0x38] sm:$0xff] %vm259, %v536
  %601 = vst.msk [vmem:[%s7 + $0x40] sm:$0xff] %vm259, %v537
  %602 = vst.msk [vmem:[%s7 + $0x48] sm:$0xff] %vm259, %v538
  %603 = vst.msk [vmem:[%s7 + $0x50] sm:$0xff] %vm259, %v539
  %604 = vst.msk [vmem:[%s7 + $0x58] sm:$0xff] %vm259, %v540
  %605 = vst.msk [vmem:[%s7 + $0x60] sm:$0xff] %vm259, %v541
  %606 = vst.msk [vmem:[%s7 + $0x68] sm:$0xff] %vm259, %v542
  %607 = vst.msk [vmem:[%s7 + $0x70] sm:$0xff] %vm259, %v543
  %608 = vst.msk [vmem:[%s7 + $0x78] sm:$0xff] %vm259, %v544
  %609 = vst.msk [vmem:[%s7 + $0x80] sm:$0xff] %vm259, %v545
  %610 = vst.msk [vmem:[%s7 + $0x88] sm:$0xff] %vm259, %v546
  %611 = vst.msk [vmem:[%s7 + $0x90] sm:$0xff] %vm259, %v547
  %612 = vst.msk [vmem:[%s7 + $0x98] sm:$0xff] %vm259, %v548
  %613 = vst.msk [vmem:[%s7 + $0xa0] sm:$0xff] %vm259, %v549
  %614 = vst.msk [vmem:[%s7 + $0xa8] sm:$0xff] %vm259, %v550
  %615 = vst.msk [vmem:[%s7 + $0xb0] sm:$0xff] %vm259, %v551
  %616 = vst.msk [vmem:[%s7 + $0xb8] sm:$0xff] %vm259, %v552
  %617 = vst.msk [vmem:[%s7 + $0xc0] sm:$0xff] %vm259, %v553
  %618 = vst.msk [vmem:[%s7 + $0xc8] sm:$0xff] %vm259, %v554
  %619 = vst.msk [vmem:[%s7 + $0xd0] sm:$0xff] %vm259, %v555
  %620 = vst.msk [vmem:[%s7 + $0xd8] sm:$0xff] %vm259, %v556
  %621 = vst.msk [vmem:[%s7 + $0xe0] sm:$0xff] %vm259, %v557
  %622 = vst.msk [vmem:[%s7 + $0xe8] sm:$0xff] %vm259, %v558
  %623 = vst.msk [vmem:[%s7 + $0xf0] sm:$0xff] %vm259, %v559
  %624 = vst.msk [vmem:[%s7 + $0xf8] sm:$0xff] %vm259, %v560
  %625 = vst.msk [vmem:[%s7 + $0x100] sm:$0xff] %vm259, %v561
  %626 = vst.msk [vmem:[%s7 + $0x108] sm:$0xff] %vm259, %v562
  %627 = vst.msk [vmem:[%s7 + $0x110] sm:$0xff] %vm259, %v563
  %628 = vst.msk [vmem:[%s7 + $0x118] sm:$0xff] %vm259, %v564
  %629 = vst.msk [vmem:[%s7 + $0x120] sm:$0xff] %vm259, %v565
  %630 = vst.msk [vmem:[%s7 + $0x128] sm:$0xff] %vm259, %v566
  %631 = vst.msk [vmem:[%s7 + $0x130] sm:$0xff] %vm259, %v567
  %632 = vst.msk [vmem:[%s7 + $0x138] sm:$0xff] %vm259, %v568
  %633 = vst.msk [vmem:[%s7 + $0x140] sm:$0xff] %vm259, %v569
  %634 = vst.msk [vmem:[%s7 + $0x148] sm:$0xff] %vm259, %v570
  %635 = vst.msk [vmem:[%s7 + $0x150] sm:$0xff] %vm259, %v571
  %636 = vst.msk [vmem:[%s7 + $0x158] sm:$0xff] %vm259, %v572
  %637 = vst.msk [vmem:[%s7 + $0x160] sm:$0xff] %vm259, %v573
  %638 = vst.msk [vmem:[%s7 + $0x168] sm:$0xff] %vm259, %v574
  %639 = vst.msk [vmem:[%s7 + $0x170] sm:$0xff] %vm259, %v575
  %640 = vst.msk [vmem:[%s7 + $0x178] sm:$0xff] %vm259, %v576
  %641 = vst.msk [vmem:[%s7 + $0x180] sm:$0xff] %vm259, %v577
  %642 = vst.msk [vmem:[%s7 + $0x188] sm:$0xff] %vm259, %v578
  %643 = vst.msk [vmem:[%s7 + $0x190] sm:$0xff] %vm259, %v579
  %644 = vst.msk [vmem:[%s7 + $0x198] sm:$0xff] %vm259, %v580
  %645 = vst.msk [vmem:[%s7 + $0x1a0] sm:$0xff] %vm259, %v581
  %646 = vst.msk [vmem:[%s7 + $0x1a8] sm:$0xff] %vm259, %v582
  %647 = vst.msk [vmem:[%s7 + $0x1b0] sm:$0xff] %vm259, %v583
  %648 = vst.msk [vmem:[%s7 + $0x1b8] sm:$0xff] %vm259, %v584
  %649 = vst.msk [vmem:[%s7 + $0x1c0] sm:$0xff] %vm259, %v585
  %650 = vst.msk [vmem:[%s7 + $0x1c8] sm:$0xff] %vm259, %v586
  %651 = vst.msk [vmem:[%s7 + $0x1d0] sm:$0xff] %vm259, %v587
  %652 = vst.msk [vmem:[%s7 + $0x1d8] sm:$0xff] %vm259, %v588
  %653 = vst.msk [vmem:[%s7 + $0x1e0] sm:$0xff] %vm259, %v589
  %654 = vst.msk [vmem:[%s7 + $0x1e8] sm:$0xff] %vm259, %v590
  %655 = vst.msk [vmem:[%s7 + $0x1f0] sm:$0xff] %vm259, %v591
  %656 = vst.msk [vmem:[%s7 + $0x1f8] sm:$0xff] %vm259, %v592
  %v657 = vld [vmem:[%s2] sm:$0xf]
  %v658 = vld [vmem:[%s5] sm:$0x1]
  %v660 = vperm.slane %v658, 0
  %v663 = vsel %vm356, %v657, 0
  %665 = vmatpush.bf16.msra.mxu0 0
  %666 = vmatpush.bf16.msra.mxu0 0
  %667 = vmatpush.bf16.msra.mxu0 0
  %668 = vmatpush.bf16.msra.mxu0 0
  %669 = vmatpush.bf16.msra.mxu0 0
  %670 = vmatpush.bf16.msra.mxu0 0
  %671 = vmatpush.bf16.msra.mxu0 0
  %672 = vmatpush.bf16.msra.mxu0 %v663
  %673 = vmatmul.bf16.gmra.mxu0 %v261
  %v674 = vpop.f32.mrf.mxu0
  %v675 = vadd.f32 %v660, %v674
  %v676 = vpop.f32.mrf.mxu0
  %v677 = vadd.f32 %v660, %v676
  %678 = vmatmul.bf16.gmra.mxu0 %v264
  %v679 = vpop.f32.mrf.mxu0
  %v680 = vadd.f32 %v660, %v679
  %v681 = vpop.f32.mrf.mxu0
  %v682 = vadd.f32 %v660, %v681
  %683 = vmatmul.bf16.gmra.mxu0 %v267
  %v684 = vpop.f32.mrf.mxu0
  %v685 = vadd.f32 %v660, %v684
  %v686 = vpop.f32.mrf.mxu0
  %v687 = vadd.f32 %v660, %v686
  %688 = vmatmul.bf16.gmra.mxu0 %v270
  %v689 = vpop.f32.mrf.mxu0
  %v690 = vadd.f32 %v660, %v689
  %v691 = vpop.f32.mrf.mxu0
  %v692 = vadd.f32 %v660, %v691
  %693 = vmatmul.bf16.gmra.mxu0 %v273
  %v694 = vpop.f32.mrf.mxu0
  %v695 = vadd.f32 %v660, %v694
  %v696 = vpop.f32.mrf.mxu0
  %v697 = vadd.f32 %v660, %v696
  %698 = vmatmul.bf16.gmra.mxu0 %v276
  %v699 = vpop.f32.mrf.mxu0
  %v700 = vadd.f32 %v660, %v699
  %v701 = vpop.f32.mrf.mxu0
  %v702 = vadd.f32 %v660, %v701
  %703 = vmatmul.bf16.gmra.mxu0 %v279
  %v704 = vpop.f32.mrf.mxu0
  %v705 = vadd.f32 %v660, %v704
  %v706 = vpop.f32.mrf.mxu0
  %v707 = vadd.f32 %v660, %v706
  %708 = vmatmul.bf16.gmra.mxu0 %v282
  %v709 = vpop.f32.mrf.mxu0
  %v710 = vadd.f32 %v660, %v709
  %v711 = vpop.f32.mrf.mxu0
  %v712 = vadd.f32 %v660, %v711
  %713 = vmatmul.bf16.gmra.mxu0 %v285
  %v714 = vpop.f32.mrf.mxu0
  %v715 = vadd.f32 %v660, %v714
  %v716 = vpop.f32.mrf.mxu0
  %v717 = vadd.f32 %v660, %v716
  %718 = vmatmul.bf16.gmra.mxu0 %v288
  %v719 = vpop.f32.mrf.mxu0
  %v720 = vadd.f32 %v660, %v719
  %v721 = vpop.f32.mrf.mxu0
  %v722 = vadd.f32 %v660, %v721
  %723 = vmatmul.bf16.gmra.mxu0 %v291
  %v724 = vpop.f32.mrf.mxu0
  %v725 = vadd.f32 %v660, %v724
  %v726 = vpop.f32.mrf.mxu0
  %v727 = vadd.f32 %v660, %v726
  %728 = vmatmul.bf16.gmra.mxu0 %v294
  %v729 = vpop.f32.mrf.mxu0
  %v730 = vadd.f32 %v660, %v729
  %v731 = vpop.f32.mrf.mxu0
  %v732 = vadd.f32 %v660, %v731
  %733 = vmatmul.bf16.gmra.mxu0 %v297
  %v734 = vpop.f32.mrf.mxu0
  %v735 = vadd.f32 %v660, %v734
  %v736 = vpop.f32.mrf.mxu0
  %v737 = vadd.f32 %v660, %v736
  %738 = vmatmul.bf16.gmra.mxu0 %v300
  %v739 = vpop.f32.mrf.mxu0
  %v740 = vadd.f32 %v660, %v739
  %v741 = vpop.f32.mrf.mxu0
  %v742 = vadd.f32 %v660, %v741
  %743 = vmatmul.bf16.gmra.mxu0 %v303
  %v744 = vpop.f32.mrf.mxu0
  %v745 = vadd.f32 %v660, %v744
  %v746 = vpop.f32.mrf.mxu0
  %v747 = vadd.f32 %v660, %v746
  %748 = vmatmul.bf16.gmra.mxu0 %v306
  %v749 = vpop.f32.mrf.mxu0
  %v750 = vadd.f32 %v660, %v749
  %v751 = vpop.f32.mrf.mxu0
  %v752 = vadd.f32 %v660, %v751
  %753 = vmatmul.bf16.gmra.mxu0 %v309
  %v754 = vpop.f32.mrf.mxu0
  %v755 = vadd.f32 %v660, %v754
  %v756 = vpop.f32.mrf.mxu0
  %v757 = vadd.f32 %v660, %v756
  %758 = vmatmul.bf16.gmra.mxu0 %v312
  %v759 = vpop.f32.mrf.mxu0
  %v760 = vadd.f32 %v660, %v759
  %v761 = vpop.f32.mrf.mxu0
  %v762 = vadd.f32 %v660, %v761
  %763 = vmatmul.bf16.gmra.mxu0 %v315
  %v764 = vpop.f32.mrf.mxu0
  %v765 = vadd.f32 %v660, %v764
  %v766 = vpop.f32.mrf.mxu0
  %v767 = vadd.f32 %v660, %v766
  %768 = vmatmul.bf16.gmra.mxu0 %v318
  %v769 = vpop.f32.mrf.mxu0
  %v770 = vadd.f32 %v660, %v769
  %v771 = vpop.f32.mrf.mxu0
  %v772 = vadd.f32 %v660, %v771
  %773 = vmatmul.bf16.gmra.mxu0 %v321
  %v774 = vpop.f32.mrf.mxu0
  %v775 = vadd.f32 %v660, %v774
  %v776 = vpop.f32.mrf.mxu0
  %v777 = vadd.f32 %v660, %v776
  %778 = vmatmul.bf16.gmra.mxu0 %v324
  %v779 = vpop.f32.mrf.mxu0
  %v780 = vadd.f32 %v660, %v779
  %v781 = vpop.f32.mrf.mxu0
  %v782 = vadd.f32 %v660, %v781
  %783 = vmatmul.bf16.gmra.mxu0 %v327
  %v784 = vpop.f32.mrf.mxu0
  %v785 = vadd.f32 %v660, %v784
  %v786 = vpop.f32.mrf.mxu0
  %v787 = vadd.f32 %v660, %v786
  %788 = vmatmul.bf16.gmra.mxu0 %v330
  %v789 = vpop.f32.mrf.mxu0
  %v790 = vadd.f32 %v660, %v789
  %v791 = vpop.f32.mrf.mxu0
  %v792 = vadd.f32 %v660, %v791
  %793 = vmatmul.bf16.gmra.mxu0 %v333
  %v794 = vpop.f32.mrf.mxu0
  %v795 = vadd.f32 %v660, %v794
  %v796 = vpop.f32.mrf.mxu0
  %v797 = vadd.f32 %v660, %v796
  %798 = vmatmul.bf16.gmra.mxu0 %v336
  %v799 = vpop.f32.mrf.mxu0
  %v800 = vadd.f32 %v660, %v799
  %v801 = vpop.f32.mrf.mxu0
  %v802 = vadd.f32 %v660, %v801
  %803 = vmatmul.bf16.gmra.mxu0 %v339
  %v804 = vpop.f32.mrf.mxu0
  %v805 = vadd.f32 %v660, %v804
  %v806 = vpop.f32.mrf.mxu0
  %v807 = vadd.f32 %v660, %v806
  %808 = vmatmul.bf16.gmra.mxu0 %v342
  %v809 = vpop.f32.mrf.mxu0
  %v810 = vadd.f32 %v660, %v809
  %v811 = vpop.f32.mrf.mxu0
  %v812 = vadd.f32 %v660, %v811
  %813 = vmatmul.bf16.gmra.mxu0 %v345
  %v814 = vpop.f32.mrf.mxu0
  %v815 = vadd.f32 %v660, %v814
  %v816 = vpop.f32.mrf.mxu0
  %v817 = vadd.f32 %v660, %v816
  %818 = vmatmul.bf16.gmra.mxu0 %v348
  %v819 = vpop.f32.mrf.mxu0
  %v820 = vadd.f32 %v660, %v819
  %v821 = vpop.f32.mrf.mxu0
  %v822 = vadd.f32 %v660, %v821
  %823 = vmatmul.bf16.gmra.mxu0 %v351
  %v824 = vpop.f32.mrf.mxu0
  %v825 = vadd.f32 %v660, %v824
  %v826 = vpop.f32.mrf.mxu0
  %v827 = vadd.f32 %v660, %v826
  %828 = vmatmul.bf16.gmra.mxu0 %v354
  %v829 = vpop.f32.mrf.mxu0
  %v830 = vadd.f32 %v660, %v829
  %v831 = vpop.f32.mrf.mxu0
  %v832 = vadd.f32 %v660, %v831
  %833 = vdwg.mxu0
  %v834 = vmax.f32 %v675, 0.0
  %v835 = vmax.f32 %v677, 0.0
  %v836 = vmax.f32 %v680, 0.0
  %v837 = vmax.f32 %v682, 0.0
  %v838 = vmax.f32 %v685, 0.0
  %v839 = vmax.f32 %v687, 0.0
  %v840 = vmax.f32 %v690, 0.0
  %v841 = vmax.f32 %v692, 0.0
  %v842 = vmax.f32 %v695, 0.0
  %v843 = vmax.f32 %v697, 0.0
  %v844 = vmax.f32 %v700, 0.0
  %v845 = vmax.f32 %v702, 0.0
  %v846 = vmax.f32 %v705, 0.0
  %v847 = vmax.f32 %v707, 0.0
  %v848 = vmax.f32 %v710, 0.0
  %v849 = vmax.f32 %v712, 0.0
  %v850 = vmax.f32 %v715, 0.0
  %v851 = vmax.f32 %v717, 0.0
  %v852 = vmax.f32 %v720, 0.0
  %v853 = vmax.f32 %v722, 0.0
  %v854 = vmax.f32 %v725, 0.0
  %v855 = vmax.f32 %v727, 0.0
  %v856 = vmax.f32 %v730, 0.0
  %v857 = vmax.f32 %v732, 0.0
  %v858 = vmax.f32 %v735, 0.0
  %v859 = vmax.f32 %v737, 0.0
  %v860 = vmax.f32 %v740, 0.0
  %v861 = vmax.f32 %v742, 0.0
  %v862 = vmax.f32 %v745, 0.0
  %v863 = vmax.f32 %v747, 0.0
  %v864 = vmax.f32 %v750, 0.0
  %v865 = vmax.f32 %v752, 0.0
  %v866 = vmax.f32 %v755, 0.0
  %v867 = vmax.f32 %v757, 0.0
  %v868 = vmax.f32 %v760, 0.0
  %v869 = vmax.f32 %v762, 0.0
  %v870 = vmax.f32 %v765, 0.0
  %v871 = vmax.f32 %v767, 0.0
  %v872 = vmax.f32 %v770, 0.0
  %v873 = vmax.f32 %v772, 0.0
  %v874 = vmax.f32 %v775, 0.0
  %v875 = vmax.f32 %v777, 0.0
  %v876 = vmax.f32 %v780, 0.0
  %v877 = vmax.f32 %v782, 0.0
  %v878 = vmax.f32 %v785, 0.0
  %v879 = vmax.f32 %v787, 0.0
  %v880 = vmax.f32 %v790, 0.0
  %v881 = vmax.f32 %v792, 0.0
  %v882 = vmax.f32 %v795, 0.0
  %v883 = vmax.f32 %v797, 0.0
  %v884 = vmax.f32 %v800, 0.0
  %v885 = vmax.f32 %v802, 0.0
  %v886 = vmax.f32 %v805, 0.0
  %v887 = vmax.f32 %v807, 0.0
  %v888 = vmax.f32 %v810, 0.0
  %v889 = vmax.f32 %v812, 0.0
  %v890 = vmax.f32 %v815, 0.0
  %v891 = vmax.f32 %v817, 0.0
  %v892 = vmax.f32 %v820, 0.0
  %v893 = vmax.f32 %v822, 0.0
  %v894 = vmax.f32 %v825, 0.0
  %v895 = vmax.f32 %v827, 0.0
  %v896 = vmax.f32 %v830, 0.0
  %v897 = vmax.f32 %v832, 0.0
  %v898 = vpack.c.bf16 %v834, %v834
  %v899 = vpack.c.bf16 %v835, %v835
  %v900 = vpack.c.bf16 %v836, %v836
  %v901 = vpack.c.bf16 %v837, %v837
  %v902 = vpack.c.bf16 %v838, %v838
  %v903 = vpack.c.bf16 %v839, %v839
  %v904 = vpack.c.bf16 %v840, %v840
  %v905 = vpack.c.bf16 %v841, %v841
  %v906 = vpack.c.bf16 %v842, %v842
  %v907 = vpack.c.bf16 %v843, %v843
  %v908 = vpack.c.bf16 %v844, %v844
  %v909 = vpack.c.bf16 %v845, %v845
  %v910 = vpack.c.bf16 %v846, %v846
  %v911 = vpack.c.bf16 %v847, %v847
  %v912 = vpack.c.bf16 %v848, %v848
  %v913 = vpack.c.bf16 %v849, %v849
  %v914 = vpack.c.bf16 %v850, %v850
  %v915 = vpack.c.bf16 %v851, %v851
  %v916 = vpack.c.bf16 %v852, %v852
  %v917 = vpack.c.bf16 %v853, %v853
  %v918 = vpack.c.bf16 %v854, %v854
  %v919 = vpack.c.bf16 %v855, %v855
  %v920 = vpack.c.bf16 %v856, %v856
  %v921 = vpack.c.bf16 %v857, %v857
  %v922 = vpack.c.bf16 %v858, %v858
  %v923 = vpack.c.bf16 %v859, %v859
  %v924 = vpack.c.bf16 %v860, %v860
  %v925 = vpack.c.bf16 %v861, %v861
  %v926 = vpack.c.bf16 %v862, %v862
  %v927 = vpack.c.bf16 %v863, %v863
  %v928 = vpack.c.bf16 %v864, %v864
  %v929 = vpack.c.bf16 %v865, %v865
  %v930 = vpack.c.bf16 %v866, %v866
  %v931 = vpack.c.bf16 %v867, %v867
  %v932 = vpack.c.bf16 %v868, %v868
  %v933 = vpack.c.bf16 %v869, %v869
  %v934 = vpack.c.bf16 %v870, %v870
  %v935 = vpack.c.bf16 %v871, %v871
  %v936 = vpack.c.bf16 %v872, %v872
  %v937 = vpack.c.bf16 %v873, %v873
  %v938 = vpack.c.bf16 %v874, %v874
  %v939 = vpack.c.bf16 %v875, %v875
  %v940 = vpack.c.bf16 %v876, %v876
  %v941 = vpack.c.bf16 %v877, %v877
  %v942 = vpack.c.bf16 %v878, %v878
  %v943 = vpack.c.bf16 %v879, %v879
  %v944 = vpack.c.bf16 %v880, %v880
  %v945 = vpack.c.bf16 %v881, %v881
  %v946 = vpack.c.bf16 %v882, %v882
  %v947 = vpack.c.bf16 %v883, %v883
  %v948 = vpack.c.bf16 %v884, %v884
  %v949 = vpack.c.bf16 %v885, %v885
  %v950 = vpack.c.bf16 %v886, %v886
  %v951 = vpack.c.bf16 %v887, %v887
  %v952 = vpack.c.bf16 %v888, %v888
  %v953 = vpack.c.bf16 %v889, %v889
  %v954 = vpack.c.bf16 %v890, %v890
  %v955 = vpack.c.bf16 %v891, %v891
  %v956 = vpack.c.bf16 %v892, %v892
  %v957 = vpack.c.bf16 %v893, %v893
  %v958 = vpack.c.bf16 %v894, %v894
  %v959 = vpack.c.bf16 %v895, %v895
  %v960 = vpack.c.bf16 %v896, %v896
  %v961 = vpack.c.bf16 %v897, %v897
  %vm962 = vcmask 60416
  %963 = vst.msk [vmem:[%s8] sm:$0xf] %vm962, %v898
  %964 = vst.msk [vmem:[%s8 + $0x4] sm:$0xf] %vm962, %v899
  %965 = vst.msk [vmem:[%s8 + $0x8] sm:$0xf] %vm962, %v900
  %966 = vst.msk [vmem:[%s8 + $0xc] sm:$0xf] %vm962, %v901
  %967 = vst.msk [vmem:[%s8 + $0x10] sm:$0xf] %vm962, %v902
  %968 = vst.msk [vmem:[%s8 + $0x14] sm:$0xf] %vm962, %v903
  %969 = vst.msk [vmem:[%s8 + $0x18] sm:$0xf] %vm962, %v904
  %970 = vst.msk [vmem:[%s8 + $0x1c] sm:$0xf] %vm962, %v905
  %971 = vst.msk [vmem:[%s8 + $0x20] sm:$0xf] %vm962, %v906
  %972 = vst.msk [vmem:[%s8 + $0x24] sm:$0xf] %vm962, %v907
  %973 = vst.msk [vmem:[%s8 + $0x28] sm:$0xf] %vm962, %v908
  %974 = vst.msk [vmem:[%s8 + $0x2c] sm:$0xf] %vm962, %v909
  %975 = vst.msk [vmem:[%s8 + $0x30] sm:$0xf] %vm962, %v910
  %976 = vst.msk [vmem:[%s8 + $0x34] sm:$0xf] %vm962, %v911
  %977 = vst.msk [vmem:[%s8 + $0x38] sm:$0xf] %vm962, %v912
  %978 = vst.msk [vmem:[%s8 + $0x3c] sm:$0xf] %vm962, %v913
  %979 = vst.msk [vmem:[%s8 + $0x40] sm:$0xf] %vm962, %v914
  %980 = vst.msk [vmem:[%s8 + $0x44] sm:$0xf] %vm962, %v915
  %981 = vst.msk [vmem:[%s8 + $0x48] sm:$0xf] %vm962, %v916
  %982 = vst.msk [vmem:[%s8 + $0x4c] sm:$0xf] %vm962, %v917
  %983 = vst.msk [vmem:[%s8 + $0x50] sm:$0xf] %vm962, %v918
  %984 = vst.msk [vmem:[%s8 + $0x54] sm:$0xf] %vm962, %v919
  %985 = vst.msk [vmem:[%s8 + $0x58] sm:$0xf] %vm962, %v920
  %986 = vst.msk [vmem:[%s8 + $0x5c] sm:$0xf] %vm962, %v921
  %987 = vst.msk [vmem:[%s8 + $0x60] sm:$0xf] %vm962, %v922
  %988 = vst.msk [vmem:[%s8 + $0x64] sm:$0xf] %vm962, %v923
  %989 = vst.msk [vmem:[%s8 + $0x68] sm:$0xf] %vm962, %v924
  %990 = vst.msk [vmem:[%s8 + $0x6c] sm:$0xf] %vm962, %v925
  %991 = vst.msk [vmem:[%s8 + $0x70] sm:$0xf] %vm962, %v926
  %992 = vst.msk [vmem:[%s8 + $0x74] sm:$0xf] %vm962, %v927
  %993 = vst.msk [vmem:[%s8 + $0x78] sm:$0xf] %vm962, %v928
  %994 = vst.msk [vmem:[%s8 + $0x7c] sm:$0xf] %vm962, %v929
  %995 = vst.msk [vmem:[%s8 + $0x80] sm:$0xf] %vm962, %v930
  %996 = vst.msk [vmem:[%s8 + $0x84] sm:$0xf] %vm962, %v931
  %997 = vst.msk [vmem:[%s8 + $0x88] sm:$0xf] %vm962, %v932
  %998 = vst.msk [vmem:[%s8 + $0x8c] sm:$0xf] %vm962, %v933
  %999 = vst.msk [vmem:[%s8 + $0x90] sm:$0xf] %vm962, %v934
  %1000 = vst.msk [vmem:[%s8 + $0x94] sm:$0xf] %vm962, %v935
  %1001 = vst.msk [vmem:[%s8 + $0x98] sm:$0xf] %vm962, %v936
  %1002 = vst.msk [vmem:[%s8 + $0x9c] sm:$0xf] %vm962, %v937
  %1003 = vst.msk [vmem:[%s8 + $0xa0] sm:$0xf] %vm962, %v938
  %1004 = vst.msk [vmem:[%s8 + $0xa4] sm:$0xf] %vm962, %v939
  %1005 = vst.msk [vmem:[%s8 + $0xa8] sm:$0xf] %vm962, %v940
  %1006 = vst.msk [vmem:[%s8 + $0xac] sm:$0xf] %vm962, %v941
  %1007 = vst.msk [vmem:[%s8 + $0xb0] sm:$0xf] %vm962, %v942
  %1008 = vst.msk [vmem:[%s8 + $0xb4] sm:$0xf] %vm962, %v943
  %1009 = vst.msk [vmem:[%s8 + $0xb8] sm:$0xf] %vm962, %v944
  %1010 = vst.msk [vmem:[%s8 + $0xbc] sm:$0xf] %vm962, %v945
  %1011 = vst.msk [vmem:[%s8 + $0xc0] sm:$0xf] %vm962, %v946
  %1012 = vst.msk [vmem:[%s8 + $0xc4] sm:$0xf] %vm962, %v947
  %1013 = vst.msk [vmem:[%s8 + $0xc8] sm:$0xf] %vm962, %v948
  %1014 = vst.msk [vmem:[%s8 + $0xcc] sm:$0xf] %vm962, %v949
  %1015 = vst.msk [vmem:[%s8 + $0xd0] sm:$0xf] %vm962, %v950
  %1016 = vst.msk [vmem:[%s8 + $0xd4] sm:$0xf] %vm962, %v951
  %1017 = vst.msk [vmem:[%s8 + $0xd8] sm:$0xf] %vm962, %v952
  %1018 = vst.msk [vmem:[%s8 + $0xdc] sm:$0xf] %vm962, %v953
  %1019 = vst.msk [vmem:[%s8 + $0xe0] sm:$0xf] %vm962, %v954
  %1020 = vst.msk [vmem:[%s8 + $0xe4] sm:$0xf] %vm962, %v955
  %1021 = vst.msk [vmem:[%s8 + $0xe8] sm:$0xf] %vm962, %v956
  %1022 = vst.msk [vmem:[%s8 + $0xec] sm:$0xf] %vm962, %v957
  %1023 = vst.msk [vmem:[%s8 + $0xf0] sm:$0xf] %vm962, %v958
  %1024 = vst.msk [vmem:[%s8 + $0xf4] sm:$0xf] %vm962, %v959
  %1025 = vst.msk [vmem:[%s8 + $0xf8] sm:$0xf] %vm962, %v960
  %1026 = vst.msk [vmem:[%s8 + $0xfc] sm:$0xf] %vm962, %v961
  %v1027 = vld [vmem:[%s3] sm:$0xf]
  %v1028 = vld [vmem:[%s6] sm:$0x1]
  %v1030 = vperm.slane %v1028, 0
  %v1033 = vsel %vm356, %v1027, 0
  %1035 = vmatpush.bf16.msra.mxu0 0
  %1036 = vmatpush.bf16.msra.mxu0 0
  %1037 = vmatpush.bf16.msra.mxu0 0
  %1038 = vmatpush.bf16.msra.mxu0 0
  %1039 = vmatpush.bf16.msra.mxu0 0
  %1040 = vmatpush.bf16.msra.mxu0 0
  %1041 = vmatpush.bf16.msra.mxu0 0
  %1042 = vmatpush.bf16.msra.mxu0 %v1033
  %1043 = vmatmul.bf16.gmra.mxu0 %v261
  %v1044 = vpop.f32.mrf.mxu0
  %v1045 = vadd.f32 %v1030, %v1044
  %v1046 = vpop.f32.mrf.mxu0
  %v1047 = vadd.f32 %v1030, %v1046
  %1048 = vmatmul.bf16.gmra.mxu0 %v264
  %v1049 = vpop.f32.mrf.mxu0
  %v1050 = vadd.f32 %v1030, %v1049
  %v1051 = vpop.f32.mrf.mxu0
  %v1052 = vadd.f32 %v1030, %v1051
  %1053 = vmatmul.bf16.gmra.mxu0 %v267
  %v1054 = vpop.f32.mrf.mxu0
  %v1055 = vadd.f32 %v1030, %v1054
  %v1056 = vpop.f32.mrf.mxu0
  %v1057 = vadd.f32 %v1030, %v1056
  %1058 = vmatmul.bf16.gmra.mxu0 %v270
  %v1059 = vpop.f32.mrf.mxu0
  %v1060 = vadd.f32 %v1030, %v1059
  %v1061 = vpop.f32.mrf.mxu0
  %v1062 = vadd.f32 %v1030, %v1061
  %1063 = vmatmul.bf16.gmra.mxu0 %v273
  %v1064 = vpop.f32.mrf.mxu0
  %v1065 = vadd.f32 %v1030, %v1064
  %v1066 = vpop.f32.mrf.mxu0
  %v1067 = vadd.f32 %v1030, %v1066
  %1068 = vmatmul.bf16.gmra.mxu0 %v276
  %v1069 = vpop.f32.mrf.mxu0
  %v1070 = vadd.f32 %v1030, %v1069
  %v1071 = vpop.f32.mrf.mxu0
  %v1072 = vadd.f32 %v1030, %v1071
  %1073 = vmatmul.bf16.gmra.mxu0 %v279
  %v1074 = vpop.f32.mrf.mxu0
  %v1075 = vadd.f32 %v1030, %v1074
  %v1076 = vpop.f32.mrf.mxu0
  %v1077 = vadd.f32 %v1030, %v1076
  %1078 = vmatmul.bf16.gmra.mxu0 %v282
  %v1079 = vpop.f32.mrf.mxu0
  %v1080 = vadd.f32 %v1030, %v1079
  %v1081 = vpop.f32.mrf.mxu0
  %v1082 = vadd.f32 %v1030, %v1081
  %1083 = vmatmul.bf16.gmra.mxu0 %v285
  %v1084 = vpop.f32.mrf.mxu0
  %v1085 = vadd.f32 %v1030, %v1084
  %v1086 = vpop.f32.mrf.mxu0
  %v1087 = vadd.f32 %v1030, %v1086
  %1088 = vmatmul.bf16.gmra.mxu0 %v288
  %v1089 = vpop.f32.mrf.mxu0
  %v1090 = vadd.f32 %v1030, %v1089
  %v1091 = vpop.f32.mrf.mxu0
  %v1092 = vadd.f32 %v1030, %v1091
  %1093 = vmatmul.bf16.gmra.mxu0 %v291
  %v1094 = vpop.f32.mrf.mxu0
  %v1095 = vadd.f32 %v1030, %v1094
  %v1096 = vpop.f32.mrf.mxu0
  %v1097 = vadd.f32 %v1030, %v1096
  %1098 = vmatmul.bf16.gmra.mxu0 %v294
  %v1099 = vpop.f32.mrf.mxu0
  %v1100 = vadd.f32 %v1030, %v1099
  %v1101 = vpop.f32.mrf.mxu0
  %v1102 = vadd.f32 %v1030, %v1101
  %1103 = vmatmul.bf16.gmra.mxu0 %v297
  %v1104 = vpop.f32.mrf.mxu0
  %v1105 = vadd.f32 %v1030, %v1104
  %v1106 = vpop.f32.mrf.mxu0
  %v1107 = vadd.f32 %v1030, %v1106
  %1108 = vmatmul.bf16.gmra.mxu0 %v300
  %v1109 = vpop.f32.mrf.mxu0
  %v1110 = vadd.f32 %v1030, %v1109
  %v1111 = vpop.f32.mrf.mxu0
  %v1112 = vadd.f32 %v1030, %v1111
  %1113 = vmatmul.bf16.gmra.mxu0 %v303
  %v1114 = vpop.f32.mrf.mxu0
  %v1115 = vadd.f32 %v1030, %v1114
  %v1116 = vpop.f32.mrf.mxu0
  %v1117 = vadd.f32 %v1030, %v1116
  %1118 = vmatmul.bf16.gmra.mxu0 %v306
  %v1119 = vpop.f32.mrf.mxu0
  %v1120 = vadd.f32 %v1030, %v1119
  %v1121 = vpop.f32.mrf.mxu0
  %v1122 = vadd.f32 %v1030, %v1121
  %1123 = vmatmul.bf16.gmra.mxu0 %v309
  %v1124 = vpop.f32.mrf.mxu0
  %v1125 = vadd.f32 %v1030, %v1124
  %v1126 = vpop.f32.mrf.mxu0
  %v1127 = vadd.f32 %v1030, %v1126
  %1128 = vmatmul.bf16.gmra.mxu0 %v312
  %v1129 = vpop.f32.mrf.mxu0
  %v1130 = vadd.f32 %v1030, %v1129
  %v1131 = vpop.f32.mrf.mxu0
  %v1132 = vadd.f32 %v1030, %v1131
  %1133 = vmatmul.bf16.gmra.mxu0 %v315
  %v1134 = vpop.f32.mrf.mxu0
  %v1135 = vadd.f32 %v1030, %v1134
  %v1136 = vpop.f32.mrf.mxu0
  %v1137 = vadd.f32 %v1030, %v1136
  %1138 = vmatmul.bf16.gmra.mxu0 %v318
  %v1139 = vpop.f32.mrf.mxu0
  %v1140 = vadd.f32 %v1030, %v1139
  %v1141 = vpop.f32.mrf.mxu0
  %v1142 = vadd.f32 %v1030, %v1141
  %1143 = vmatmul.bf16.gmra.mxu0 %v321
  %v1144 = vpop.f32.mrf.mxu0
  %v1145 = vadd.f32 %v1030, %v1144
  %v1146 = vpop.f32.mrf.mxu0
  %v1147 = vadd.f32 %v1030, %v1146
  %1148 = vmatmul.bf16.gmra.mxu0 %v324
  %v1149 = vpop.f32.mrf.mxu0
  %v1150 = vadd.f32 %v1030, %v1149
  %v1151 = vpop.f32.mrf.mxu0
  %v1152 = vadd.f32 %v1030, %v1151
  %1153 = vmatmul.bf16.gmra.mxu0 %v327
  %v1154 = vpop.f32.mrf.mxu0
  %v1155 = vadd.f32 %v1030, %v1154
  %v1156 = vpop.f32.mrf.mxu0
  %v1157 = vadd.f32 %v1030, %v1156
  %1158 = vmatmul.bf16.gmra.mxu0 %v330
  %v1159 = vpop.f32.mrf.mxu0
  %v1160 = vadd.f32 %v1030, %v1159
  %v1161 = vpop.f32.mrf.mxu0
  %v1162 = vadd.f32 %v1030, %v1161
  %1163 = vmatmul.bf16.gmra.mxu0 %v333
  %v1164 = vpop.f32.mrf.mxu0
  %v1165 = vadd.f32 %v1030, %v1164
  %v1166 = vpop.f32.mrf.mxu0
  %v1167 = vadd.f32 %v1030, %v1166
  %1168 = vmatmul.bf16.gmra.mxu0 %v336
  %v1169 = vpop.f32.mrf.mxu0
  %v1170 = vadd.f32 %v1030, %v1169
  %v1171 = vpop.f32.mrf.mxu0
  %v1172 = vadd.f32 %v1030, %v1171
  %1173 = vmatmul.bf16.gmra.mxu0 %v339
  %v1174 = vpop.f32.mrf.mxu0
  %v1175 = vadd.f32 %v1030, %v1174
  %v1176 = vpop.f32.mrf.mxu0
  %v1177 = vadd.f32 %v1030, %v1176
  %1178 = vmatmul.bf16.gmra.mxu0 %v342
  %v1179 = vpop.f32.mrf.mxu0
  %v1180 = vadd.f32 %v1030, %v1179
  %v1181 = vpop.f32.mrf.mxu0
  %v1182 = vadd.f32 %v1030, %v1181
  %1183 = vmatmul.bf16.gmra.mxu0 %v345
  %v1184 = vpop.f32.mrf.mxu0
  %v1185 = vadd.f32 %v1030, %v1184
  %v1186 = vpop.f32.mrf.mxu0
  %v1187 = vadd.f32 %v1030, %v1186
  %1188 = vmatmul.bf16.gmra.mxu0 %v348
  %v1189 = vpop.f32.mrf.mxu0
  %v1190 = vadd.f32 %v1030, %v1189
  %v1191 = vpop.f32.mrf.mxu0
  %v1192 = vadd.f32 %v1030, %v1191
  %1193 = vmatmul.bf16.gmra.mxu0 %v351
  %v1194 = vpop.f32.mrf.mxu0
  %v1195 = vadd.f32 %v1030, %v1194
  %v1196 = vpop.f32.mrf.mxu0
  %v1197 = vadd.f32 %v1030, %v1196
  %1198 = vmatmul.bf16.gmra.mxu0 %v354
  %v1199 = vpop.f32.mrf.mxu0
  %v1200 = vadd.f32 %v1030, %v1199
  %v1201 = vpop.f32.mrf.mxu0
  %v1202 = vadd.f32 %v1030, %v1201
  %1203 = vdwg.mxu0
  %v1204 = vmax.f32 %v1045, 0.0
  %v1205 = vmax.f32 %v1047, 0.0
  %v1206 = vmax.f32 %v1050, 0.0
  %v1207 = vmax.f32 %v1052, 0.0
  %v1208 = vmax.f32 %v1055, 0.0
  %v1209 = vmax.f32 %v1057, 0.0
  %v1210 = vmax.f32 %v1060, 0.0
  %v1211 = vmax.f32 %v1062, 0.0
  %v1212 = vmax.f32 %v1065, 0.0
  %v1213 = vmax.f32 %v1067, 0.0
  %v1214 = vmax.f32 %v1070, 0.0
  %v1215 = vmax.f32 %v1072, 0.0
  %v1216 = vmax.f32 %v1075, 0.0
  %v1217 = vmax.f32 %v1077, 0.0
  %v1218 = vmax.f32 %v1080, 0.0
  %v1219 = vmax.f32 %v1082, 0.0
  %v1220 = vmax.f32 %v1085, 0.0
  %v1221 = vmax.f32 %v1087, 0.0
  %v1222 = vmax.f32 %v1090, 0.0
  %v1223 = vmax.f32 %v1092, 0.0
  %v1224 = vmax.f32 %v1095, 0.0
  %v1225 = vmax.f32 %v1097, 0.0
  %v1226 = vmax.f32 %v1100, 0.0
  %v1227 = vmax.f32 %v1102, 0.0
  %v1228 = vmax.f32 %v1105, 0.0
  %v1229 = vmax.f32 %v1107, 0.0
  %v1230 = vmax.f32 %v1110, 0.0
  %v1231 = vmax.f32 %v1112, 0.0
  %v1232 = vmax.f32 %v1115, 0.0
  %v1233 = vmax.f32 %v1117, 0.0
  %v1234 = vmax.f32 %v1120, 0.0
  %v1235 = vmax.f32 %v1122, 0.0
  %v1236 = vmax.f32 %v1125, 0.0
  %v1237 = vmax.f32 %v1127, 0.0
  %v1238 = vmax.f32 %v1130, 0.0
  %v1239 = vmax.f32 %v1132, 0.0
  %v1240 = vmax.f32 %v1135, 0.0
  %v1241 = vmax.f32 %v1137, 0.0
  %v1242 = vmax.f32 %v1140, 0.0
  %v1243 = vmax.f32 %v1142, 0.0
  %v1244 = vmax.f32 %v1145, 0.0
  %v1245 = vmax.f32 %v1147, 0.0
  %v1246 = vmax.f32 %v1150, 0.0
  %v1247 = vmax.f32 %v1152, 0.0
  %v1248 = vmax.f32 %v1155, 0.0
  %v1249 = vmax.f32 %v1157, 0.0
  %v1250 = vmax.f32 %v1160, 0.0
  %v1251 = vmax.f32 %v1162, 0.0
  %v1252 = vmax.f32 %v1165, 0.0
  %v1253 = vmax.f32 %v1167, 0.0
  %v1254 = vmax.f32 %v1170, 0.0
  %v1255 = vmax.f32 %v1172, 0.0
  %v1256 = vmax.f32 %v1175, 0.0
  %v1257 = vmax.f32 %v1177, 0.0
  %v1258 = vmax.f32 %v1180, 0.0
  %v1259 = vmax.f32 %v1182, 0.0
  %v1260 = vmax.f32 %v1185, 0.0
  %v1261 = vmax.f32 %v1187, 0.0
  %v1262 = vmax.f32 %v1190, 0.0
  %v1263 = vmax.f32 %v1192, 0.0
  %v1264 = vmax.f32 %v1195, 0.0
  %v1265 = vmax.f32 %v1197, 0.0
  %v1266 = vmax.f32 %v1200, 0.0
  %v1267 = vmax.f32 %v1202, 0.0
  %v1268 = vpack.c.bf16 %v1204, %v1204
  %v1269 = vpack.c.bf16 %v1205, %v1205
  %v1270 = vpack.c.bf16 %v1206, %v1206
  %v1271 = vpack.c.bf16 %v1207, %v1207
  %v1272 = vpack.c.bf16 %v1208, %v1208
  %v1273 = vpack.c.bf16 %v1209, %v1209
  %v1274 = vpack.c.bf16 %v1210, %v1210
  %v1275 = vpack.c.bf16 %v1211, %v1211
  %v1276 = vpack.c.bf16 %v1212, %v1212
  %v1277 = vpack.c.bf16 %v1213, %v1213
  %v1278 = vpack.c.bf16 %v1214, %v1214
  %v1279 = vpack.c.bf16 %v1215, %v1215
  %v1280 = vpack.c.bf16 %v1216, %v1216
  %v1281 = vpack.c.bf16 %v1217, %v1217
  %v1282 = vpack.c.bf16 %v1218, %v1218
  %v1283 = vpack.c.bf16 %v1219, %v1219
  %v1284 = vpack.c.bf16 %v1220, %v1220
  %v1285 = vpack.c.bf16 %v1221, %v1221
  %v1286 = vpack.c.bf16 %v1222, %v1222
  %v1287 = vpack.c.bf16 %v1223, %v1223
  %v1288 = vpack.c.bf16 %v1224, %v1224
  %v1289 = vpack.c.bf16 %v1225, %v1225
  %v1290 = vpack.c.bf16 %v1226, %v1226
  %v1291 = vpack.c.bf16 %v1227, %v1227
  %v1292 = vpack.c.bf16 %v1228, %v1228
  %v1293 = vpack.c.bf16 %v1229, %v1229
  %v1294 = vpack.c.bf16 %v1230, %v1230
  %v1295 = vpack.c.bf16 %v1231, %v1231
  %v1296 = vpack.c.bf16 %v1232, %v1232
  %v1297 = vpack.c.bf16 %v1233, %v1233
  %v1298 = vpack.c.bf16 %v1234, %v1234
  %v1299 = vpack.c.bf16 %v1235, %v1235
  %v1300 = vpack.c.bf16 %v1236, %v1236
  %v1301 = vpack.c.bf16 %v1237, %v1237
  %v1302 = vpack.c.bf16 %v1238, %v1238
  %v1303 = vpack.c.bf16 %v1239, %v1239
  %v1304 = vpack.c.bf16 %v1240, %v1240
  %v1305 = vpack.c.bf16 %v1241, %v1241
  %v1306 = vpack.c.bf16 %v1242, %v1242
  %v1307 = vpack.c.bf16 %v1243, %v1243
  %v1308 = vpack.c.bf16 %v1244, %v1244
  %v1309 = vpack.c.bf16 %v1245, %v1245
  %v1310 = vpack.c.bf16 %v1246, %v1246
  %v1311 = vpack.c.bf16 %v1247, %v1247
  %v1312 = vpack.c.bf16 %v1248, %v1248
  %v1313 = vpack.c.bf16 %v1249, %v1249
  %v1314 = vpack.c.bf16 %v1250, %v1250
  %v1315 = vpack.c.bf16 %v1251, %v1251
  %v1316 = vpack.c.bf16 %v1252, %v1252
  %v1317 = vpack.c.bf16 %v1253, %v1253
  %v1318 = vpack.c.bf16 %v1254, %v1254
  %v1319 = vpack.c.bf16 %v1255, %v1255
  %v1320 = vpack.c.bf16 %v1256, %v1256
  %v1321 = vpack.c.bf16 %v1257, %v1257
  %v1322 = vpack.c.bf16 %v1258, %v1258
  %v1323 = vpack.c.bf16 %v1259, %v1259
  %v1324 = vpack.c.bf16 %v1260, %v1260
  %v1325 = vpack.c.bf16 %v1261, %v1261
  %v1326 = vpack.c.bf16 %v1262, %v1262
  %v1327 = vpack.c.bf16 %v1263, %v1263
  %v1328 = vpack.c.bf16 %v1264, %v1264
  %v1329 = vpack.c.bf16 %v1265, %v1265
  %v1330 = vpack.c.bf16 %v1266, %v1266
  %v1331 = vpack.c.bf16 %v1267, %v1267
  %vm1332 = vcmask 27648
  %1333 = vst.msk [vmem:[%s9] sm:$0xf] %vm1332, %v1268
  %1334 = vst.msk [vmem:[%s9 + $0x4] sm:$0xf] %vm1332, %v1269
  %1335 = vst.msk [vmem:[%s9 + $0x8] sm:$0xf] %vm1332, %v1270
  %1336 = vst.msk [vmem:[%s9 + $0xc] sm:$0xf] %vm1332, %v1271
  %1337 = vst.msk [vmem:[%s9 + $0x10] sm:$0xf] %vm1332, %v1272
  %1338 = vst.msk [vmem:[%s9 + $0x14] sm:$0xf] %vm1332, %v1273
  %1339 = vst.msk [vmem:[%s9 + $0x18] sm:$0xf] %vm1332, %v1274
  %1340 = vst.msk [vmem:[%s9 + $0x1c] sm:$0xf] %vm1332, %v1275
  %1341 = vst.msk [vmem:[%s9 + $0x20] sm:$0xf] %vm1332, %v1276
  %1342 = vst.msk [vmem:[%s9 + $0x24] sm:$0xf] %vm1332, %v1277
  %1343 = vst.msk [vmem:[%s9 + $0x28] sm:$0xf] %vm1332, %v1278
  %1344 = vst.msk [vmem:[%s9 + $0x2c] sm:$0xf] %vm1332, %v1279
  %1345 = vst.msk [vmem:[%s9 + $0x30] sm:$0xf] %vm1332, %v1280
  %1346 = vst.msk [vmem:[%s9 + $0x34] sm:$0xf] %vm1332, %v1281
  %1347 = vst.msk [vmem:[%s9 + $0x38] sm:$0xf] %vm1332, %v1282
  %1348 = vst.msk [vmem:[%s9 + $0x3c] sm:$0xf] %vm1332, %v1283
  %1349 = vst.msk [vmem:[%s9 + $0x40] sm:$0xf] %vm1332, %v1284
  %1350 = vst.msk [vmem:[%s9 + $0x44] sm:$0xf] %vm1332, %v1285
  %1351 = vst.msk [vmem:[%s9 + $0x48] sm:$0xf] %vm1332, %v1286
  %1352 = vst.msk [vmem:[%s9 + $0x4c] sm:$0xf] %vm1332, %v1287
  %1353 = vst.msk [vmem:[%s9 + $0x50] sm:$0xf] %vm1332, %v1288
  %1354 = vst.msk [vmem:[%s9 + $0x54] sm:$0xf] %vm1332, %v1289
  %1355 = vst.msk [vmem:[%s9 + $0x58] sm:$0xf] %vm1332, %v1290
  %1356 = vst.msk [vmem:[%s9 + $0x5c] sm:$0xf] %vm1332, %v1291
  %1357 = vst.msk [vmem:[%s9 + $0x60] sm:$0xf] %vm1332, %v1292
  %1358 = vst.msk [vmem:[%s9 + $0x64] sm:$0xf] %vm1332, %v1293
  %1359 = vst.msk [vmem:[%s9 + $0x68] sm:$0xf] %vm1332, %v1294
  %1360 = vst.msk [vmem:[%s9 + $0x6c] sm:$0xf] %vm1332, %v1295
  %1361 = vst.msk [vmem:[%s9 + $0x70] sm:$0xf] %vm1332, %v1296
  %1362 = vst.msk [vmem:[%s9 + $0x74] sm:$0xf] %vm1332, %v1297
  %1363 = vst.msk [vmem:[%s9 + $0x78] sm:$0xf] %vm1332, %v1298
  %1364 = vst.msk [vmem:[%s9 + $0x7c] sm:$0xf] %vm1332, %v1299
  %1365 = vst.msk [vmem:[%s9 + $0x80] sm:$0xf] %vm1332, %v1300
  %1366 = vst.msk [vmem:[%s9 + $0x84] sm:$0xf] %vm1332, %v1301
  %1367 = vst.msk [vmem:[%s9 + $0x88] sm:$0xf] %vm1332, %v1302
  %1368 = vst.msk [vmem:[%s9 + $0x8c] sm:$0xf] %vm1332, %v1303
  %1369 = vst.msk [vmem:[%s9 + $0x90] sm:$0xf] %vm1332, %v1304
  %1370 = vst.msk [vmem:[%s9 + $0x94] sm:$0xf] %vm1332, %v1305
  %1371 = vst.msk [vmem:[%s9 + $0x98] sm:$0xf] %vm1332, %v1306
  %1372 = vst.msk [vmem:[%s9 + $0x9c] sm:$0xf] %vm1332, %v1307
  %1373 = vst.msk [vmem:[%s9 + $0xa0] sm:$0xf] %vm1332, %v1308
  %1374 = vst.msk [vmem:[%s9 + $0xa4] sm:$0xf] %vm1332, %v1309
  %1375 = vst.msk [vmem:[%s9 + $0xa8] sm:$0xf] %vm1332, %v1310
  %1376 = vst.msk [vmem:[%s9 + $0xac] sm:$0xf] %vm1332, %v1311
  %1377 = vst.msk [vmem:[%s9 + $0xb0] sm:$0xf] %vm1332, %v1312
  %1378 = vst.msk [vmem:[%s9 + $0xb4] sm:$0xf] %vm1332, %v1313
  %1379 = vst.msk [vmem:[%s9 + $0xb8] sm:$0xf] %vm1332, %v1314
  %1380 = vst.msk [vmem:[%s9 + $0xbc] sm:$0xf] %vm1332, %v1315
  %1381 = vst.msk [vmem:[%s9 + $0xc0] sm:$0xf] %vm1332, %v1316
  %1382 = vst.msk [vmem:[%s9 + $0xc4] sm:$0xf] %vm1332, %v1317
  %1383 = vst.msk [vmem:[%s9 + $0xc8] sm:$0xf] %vm1332, %v1318
  %1384 = vst.msk [vmem:[%s9 + $0xcc] sm:$0xf] %vm1332, %v1319
  %1385 = vst.msk [vmem:[%s9 + $0xd0] sm:$0xf] %vm1332, %v1320
  %1386 = vst.msk [vmem:[%s9 + $0xd4] sm:$0xf] %vm1332, %v1321
  %1387 = vst.msk [vmem:[%s9 + $0xd8] sm:$0xf] %vm1332, %v1322
  %1388 = vst.msk [vmem:[%s9 + $0xdc] sm:$0xf] %vm1332, %v1323
  %1389 = vst.msk [vmem:[%s9 + $0xe0] sm:$0xf] %vm1332, %v1324
  %1390 = vst.msk [vmem:[%s9 + $0xe4] sm:$0xf] %vm1332, %v1325
  %1391 = vst.msk [vmem:[%s9 + $0xe8] sm:$0xf] %vm1332, %v1326
  %1392 = vst.msk [vmem:[%s9 + $0xec] sm:$0xf] %vm1332, %v1327
  %1393 = vst.msk [vmem:[%s9 + $0xf0] sm:$0xf] %vm1332, %v1328
  %1394 = vst.msk [vmem:[%s9 + $0xf4] sm:$0xf] %vm1332, %v1329
  %1395 = vst.msk [vmem:[%s9 + $0xf8] sm:$0xf] %vm1332, %v1330
  %1396 = vst.msk [vmem:[%s9 + $0xfc] sm:$0xf] %vm1332, %v1331
  // Predicated region
  $region30: #{inception_2_forward.5} parent=0 // pred_check
    _
  $region31: #{inception_2_forward.5} parent=0 // pred_check_branch
    %1398 = sbr.rel (0) target = $region33
  $region32: #{inception_2_forward.5} parent=0 // pred_region
    _
  $region33: #{inception_2_forward.5} parent=0 // pred_fallthru
    _
  // Predicated region
  $region34: #{inception_2_forward.5} parent=0 // pred_check
    _
  $region35: #{inception_2_forward.5} parent=0 // pred_check_branch
    %1400 = sbr.rel (0) target = $region37
  $region36: #{inception_2_forward.5} parent=0 // pred_region
    _
  $region37: #{inception_2_forward.5} parent=0 // pred_fallthru
    _
  // Predicated region
  $region38: #{inception_2_forward.5} parent=0 // pred_check
    _
  $region39: #{inception_2_forward.5} parent=0 // pred_check_branch
    %1402 = sbr.rel (0) target = $region41
  $region40: #{inception_2_forward.5} parent=0 // pred_region
    _
  $region41: #{inception_2_forward.5} parent=0 // pred_fallthru
    _
  // Predicated region
  $region42: #{inception_2_forward.5} parent=0 // pred_check
    _
  $region43: #{inception_2_forward.5} parent=0 // pred_check_branch
    %1404 = sbr.rel (0) target = $region45
  $region44: #{inception_2_forward.5} parent=0 // pred_region
    _
  $region45: #{inception_2_forward.5} parent=0 // pred_fallthru
    _
  // Predicated region
  $region46: #{inception_2_forward.5} parent=0 // pred_check
    _
  $region47: #{inception_2_forward.5} parent=0 // pred_check_branch
    %1406 = sbr.rel (0) target = $region49
  $region48: #{inception_2_forward.5} parent=0 // pred_region
    _
  $region49: #{inception_2_forward.5} parent=0 // pred_fallthru
    _
  // Predicated region
  $region50: #{inception_2_forward.5} parent=0 // pred_check
    _
  $region51: #{inception_2_forward.5} parent=0 // pred_check_branch
    %1408 = sbr.rel (0) target = $region53
  $region52: #{inception_2_forward.5} parent=0 // pred_region
    _
  $region53: #{inception_2_forward.5} parent=0 // pred_fallthru
    _

// kernel: inception_2_forward.8
$region0: #{inception_2_forward.8}
  #allocation0 [shape = 'u32[]', space=smem, size = 0x4, offset = 0x4, fixed_abs, tag = 'smem constant byte address 0x4 - core index']
  #allocation1 [shape = 'u32[72,128]{1,0:T(1,128)}', space=vmem, size = 0x9000, scoped, tag = 'internal scratch']
  %s0 = inlined_call_operand.vmem [shape: bf16[2,18,18,8], index: 0, kind: input, shape index: {}]
  %s1 = inlined_call_operand.vmem [shape: bf16[72,8], index: 1, kind: input, shape index: {}]
  %s2 = inlined_call_operand.vmem [shape: f32[1,8], index: 2, kind: input, shape index: {}]
  %s3 = inlined_call_operand.vmem [shape: f32[2,16,16,8], index: 3, kind: output, shape index: {}]
  %s4 = sld [smem:[#allocation0]]
  $region45: #{inception_2_forward.8} parent=0
    _
  %s6 = ssub.s32 1, %s4
  %s7 = scalar_select 0, %s6, %s4
  loop: start=0, step=1, limit=6
  $region2: #{inception_2_forward.8} parent=0 // loop_pre_header
    _
  $region3: #{inception_2_forward.8} parent=0 // loop_header
    %s9 = sphi 0, %s13
    %p10 = scmp.ge.s32.totalorder %s9, 6
    %s16 = sphi 0, %s28
    %s17 = sphi 0, %s24
    %s18 = sphi 0, %s16
    %s19 = sphi 0, %s17
    %s20 = sphi 0, %s18
    %s21 = sphi 0, %s19
    %s31 = sphi 0, %s33
    %s34 = sphi 0, %s31
    %s35 = sphi 0, %s34
    %s51 = sphi 0, %s35
    %s55 = sphi 0, %s55
    %s57 = sphi 0, %s55
    %s58 = sphi 0, %s57
    %s72 = sphi 0, %s58
    %s76 = sphi 0, %s76
    %s78 = sphi 0, %s76
    %s79 = sphi 0, %s78
    %s93 = sphi 0, %s79
    %s101 = sphi 0, %s103
    %s104 = sphi 0, %s101
    %s105 = sphi 0, %s104
    %s121 = sphi 0, %s105
  $region4: #{inception_2_forward.8} parent=0 // loop_header_branch
    %12 = sbr.rel (%p10) target = $region8
  $region5: #{inception_2_forward.8} parent=0 // loop_body
    %s14 = ssub.s32 %s9, 1
    %s15 = ssub.s32 %s9, 2
    %s22 = sadd.s32 1, %s17
    %p23 = scmp.ge.s32.totalorder %s22, 2
    %s24 = scalar_select %p23, 0, %s22
    %s25 = sadd.s32 1, %s16
    %s26 = scalar_select %p23, %s25, %s16
    %p27 = scmp.ge.s32.totalorder %s26, 2
    %s28 = scalar_select %p27, 0, %s26
    %s29 = ssub.s32 %s16, %s28
    %p30 = scmp.eq.s32.totalorder %s29, 0
    %s32 = sadd.s32 %s31, 1
    %s33 = scalar_select %p30, %s31, %s32
    %p36 = pneg %p30
    %p37 = scmp.eq.s32.totalorder %s9, 3
    %p38 = por %p36, %p37
    %p39 = scmp.ne.s32.totalorder %s31, %s34
    %p40 = scmp.eq.s32.totalorder %s9, 0
    %p41 = por %p39, %p40
    %p42 = scmp.ne.s32.totalorder %s31, %s34
    %p43 = scmp.eq.s32.totalorder %s14, 3
    %p44 = por %p42, %p43
    %p45 = scmp.ne.s32.totalorder %s34, %s35
    %p46 = scmp.eq.s32.totalorder %s14, 0
    %p47 = por %p45, %p46
    %p48 = scmp.ne.s32.totalorder %s34, %s35
    %p49 = scmp.eq.s32.totalorder %s15, 3
    %p50 = por %p48, %p49
    %p52 = scmp.ne.s32.totalorder %s35, %s51
    %p53 = scmp.eq.s32.totalorder %s15, 0
    %p54 = por %p52, %p53
    %s56 = sadd.s32 %s55, 1
    %p59 = scmp.eq.s32.totalorder %s9, 3
    %p60 = scmp.ne.s32.totalorder %s55, %s57
    %p61 = scmp.eq.s32.totalorder %s9, 0
    %p62 = por %p60, %p61
    %p63 = scmp.ne.s32.totalorder %s55, %s57
    %p64 = scmp.eq.s32.totalorder %s14, 3
    %p65 = por %p63, %p64
    %p66 = scmp.ne.s32.totalorder %s57, %s58
    %p67 = scmp.eq.s32.totalorder %s14, 0
    %p68 = por %p66, %p67
    %p69 = scmp.ne.s32.totalorder %s57, %s58
    %p70 = scmp.eq.s32.totalorder %s15, 3
    %p71 = por %p69, %p70
    %p73 = scmp.ne.s32.totalorder %s58, %s72
    %p74 = scmp.eq.s32.totalorder %s15, 0
    %p75 = por %p73, %p74
    %s77 = sadd.s32 %s76, 1
    %p80 = scmp.eq.s32.totalorder %s9, 3
    %p81 = scmp.ne.s32.totalorder %s76, %s78
    %p82 = scmp.eq.s32.totalorder %s9, 0
    %p83 = por %p81, %p82
    %p84 = scmp.ne.s32.totalorder %s76, %s78
    %p85 = scmp.eq.s32.totalorder %s14, 3
    %p86 = por %p84, %p85
    %p87 = scmp.ne.s32.totalorder %s78, %s79
    %p88 = scmp.eq.s32.totalorder %s14, 0
    %p89 = por %p87, %p88
    %p90 = scmp.ne.s32.totalorder %s78, %s79
    %p91 = scmp.eq.s32.totalorder %s15, 3
    %p92 = por %p90, %p91
    %p94 = scmp.ne.s32.totalorder %s79, %s93
    %p95 = scmp.eq.s32.totalorder %s15, 0
    %p96 = por %p94, %p95
    %s97 = ssub.s32 %s16, %s28
    %s98 = ssub.s32 %s17, %s24
    %s99 = sor.u32 %s97, %s98
    %p100 = scmp.eq.s32.totalorder %s99, 0
    %s102 = sadd.s32 %s101, 1
    %s103 = scalar_select %p100, %s101, %s102
    %p106 = pneg %p100
    %p107 = scmp.eq.s32.totalorder %s9, 3
    %p108 = por %p106, %p107
    %p109 = scmp.ne.s32.totalorder %s101, %s104
    %p110 = scmp.eq.s32.totalorder %s9, 0
    %p111 = por %p109, %p110
    %p112 = scmp.ne.s32.totalorder %s101, %s104
    %p113 = scmp.eq.s32.totalorder %s14, 3
    %p114 = por %p112, %p113
    %p115 = scmp.ne.s32.totalorder %s104, %s105
    %p116 = scmp.eq.s32.totalorder %s14, 0
    %p117 = por %p115, %p116
    %p118 = scmp.ne.s32.totalorder %s104, %s105
    %p119 = scmp.eq.s32.totalorder %s15, 3
    %p120 = por %p118, %p119
    %p122 = scmp.ne.s32.totalorder %s105, %s121
    %p123 = scmp.eq.s32.totalorder %s15, 0
    %p124 = por %p122, %p123
    %p125 = scmp.le.s32.totalorder 1, %s9
    %p126 = scmp.lt.s32.totalorder %s9, 5
    %p127 = pnand %p125, %p126
    %p128 = pneg %p127
    // Predicated region
    $region9: #{inception_2_forward.8} parent=5 // pred_check
      _
    $region10: #{inception_2_forward.8} parent=5 // pred_check_branch
      %130 = sbr.rel (%p127) target = $region12
    $region11: #{inception_2_forward.8} parent=5 // pred_region
      %s131 = ssub.s32 %s9, 1
      // Predicated region
      $region13: #{inception_2_forward.8} parent=11 // pred_check
        %p132 = pneg %p68
      $region14: #{inception_2_forward.8} parent=11 // pred_check_branch
        %134 = sbr.rel (%p132) target = $region16
      $region15: #{inception_2_forward.8} parent=11 // pred_region
        _
      $region16: #{inception_2_forward.8} parent=11 // pred_fallthru
        _
      // Predicated region
      $region17: #{inception_2_forward.8} parent=11 // pred_check
        %p135 = pneg %p89
      $region18: #{inception_2_forward.8} parent=11 // pred_check_branch
        %137 = sbr.rel (%p135) target = $region20
      $region19: #{inception_2_forward.8} parent=11 // pred_region
        _
      $region20: #{inception_2_forward.8} parent=11 // pred_fallthru
        _
    $region12: #{inception_2_forward.8} parent=5 // pred_fallthru
      _
    %p138 = scmp.lt.s32.totalorder %s9, 4
    // Predicated region
    $region21: #{inception_2_forward.8} parent=5 // pred_check
      %p139 = pneg %p138
    $region22: #{inception_2_forward.8} parent=5 // pred_check_branch
      %141 = sbr.rel (%p139) target = $region24
    $region23: #{inception_2_forward.8} parent=5 // pred_region
      // Predicated region
      $region25: #{inception_2_forward.8} parent=23 // pred_check
        %p142 = pneg %p41
      $region26: #{inception_2_forward.8} parent=23 // pred_check_branch
        %144 = sbr.rel (%p142) target = $region28
      $region27: #{inception_2_forward.8} parent=23 // pred_region
        %p145 = scmp.lt.s32.totalorder %s16, 1
        %s146 = scalar_select %p145, %s16, 1
        %s147 = smul.addr %s146, 54
        %s148 = smul.addr %s147, 4
        %s149 = scalar_lea.vmem %s0, %s148
      $region28: #{inception_2_forward.8} parent=23 // pred_fallthru
        _
    $region24: #{inception_2_forward.8} parent=5 // pred_fallthru
      _
    %p150 = scmp.le.s32.totalorder 1, %s9
    %p151 = scmp.lt.s32.totalorder %s9, 5
    %p152 = pnand %p150, %p151
    %p153 = pneg %p152
    // Predicated region
    $region29: #{inception_2_forward.8} parent=5 // pred_check
      _
    $region30: #{inception_2_forward.8} parent=5 // pred_check_branch
      %155 = sbr.rel (%p152) target = $region32
    $region31: #{inception_2_forward.8} parent=5 // pred_region
      %s156 = ssub.s32 %s9, 1
      %p157 = scmp.lt.s32.totalorder %s18, 1
      %s158 = scalar_select %p157, %s18, 1
      %s159 = smul.addr %s158, 54
      %s160 = smul.addr %s159, 4
      %s161 = scalar_lea.vmem %s0, %s160
      %p162 = pneg %p47
      %p163 = pneg %p44
      %p164 = pneg %p68
      %p165 = pneg %p65
      %p166 = pneg %p89
      %p167 = pneg %p86
      %p168 = pneg %p117
      %p169 = pneg %p114
      %s170 = smul.u32 8, %s19
      %p171 = scmp.lt.s32.totalorder %s18, 1
      %s172 = scalar_select %p171, %s18, 1
      %p173 = scmp.lt.s32.totalorder %s170, 15
      %s174 = scalar_select %p173, %s170, 15
      %s175 = smul.addr %s174, 2
      %s176 = smul.addr %s172, 32
      %s177 = sadd.s32 %s175, %s176
      %s178 = smul.addr %s177, 8
      %s179 = scalar_lea.vmem %s3, %s178
      %p180 = scmp.lt.s32.totalorder %s18, 1
      %s181 = scalar_select %p180, %s18, 1
      %s182 = smul.addr %s181, 54
      %s183 = smul.addr %s182, 4
      %s184 = scalar_lea.vmem %s0, %s183
      %s185 = smul.u32 8, %s19
      %p186 = scmp.lt.s32.totalorder %s18, 1
      %s187 = scalar_select %p186, %s18, 1
      %p188 = scmp.lt.s32.totalorder %s185, 15
      %s189 = scalar_select %p188, %s185, 15
      %s190 = smul.addr %s189, 2
      %s191 = smul.addr %s187, 32
      %s192 = sadd.s32 %s190, %s191
      %s193 = smul.addr %s192, 8
      %s194 = scalar_lea.vmem %s3, %s193
      %s195 = smul.u32 8, %s19
      %s197 = smul.u32 %s19, 8
      %s198 = smul.u32 %s197, 3
      %s199 = smul.addr %s198, 4
      %s200 = scalar_lea.vmem %s184, %s199
      %v201 = vld [vmem:[%s200] sm:$0xf]
      %v202 = vld [vmem:[%s200 + $0x4] sm:$0xf]
      %v203 = vld [vmem:[%s200 + $0x8] sm:$0x1]
      %v204 = vld [vmem:[%s200 + $0xc] sm:$0xf]
      %v205 = vld [vmem:[%s200 + $0x10] sm:$0xf]
      %v206 = vld [vmem:[%s200 + $0x14] sm:$0x1]
      %v207 = vld [vmem:[%s200 + $0x18] sm:$0xf]
      %v208 = vld [vmem:[%s200 + $0x1c] sm:$0xf]
      %v209 = vld [vmem:[%s200 + $0x20] sm:$0x1]
      %v210 = vld [vmem:[%s200 + $0x24] sm:$0xf]
      %v211 = vld [vmem:[%s200 + $0x28] sm:$0xf]
      %v212 = vld [vmem:[%s200 + $0x2c] sm:$0x1]
      %v213 = vld [vmem:[%s200 + $0x30] sm:$0xf]
      %v214 = vld [vmem:[%s200 + $0x34] sm:$0xf]
      %v215 = vld [vmem:[%s200 + $0x38] sm:$0x1]
      %v216 = vld [vmem:[%s200 + $0x3c] sm:$0xf]
      %v217 = vld [vmem:[%s200 + $0x40] sm:$0xf]
      %v218 = vld [vmem:[%s200 + $0x44] sm:$0x1]
      %v219 = vld [vmem:[%s200 + $0x48] sm:$0xf]
      %v220 = vld [vmem:[%s200 + $0x4c] sm:$0xf]
      %v221 = vld [vmem:[%s200 + $0x50] sm:$0x1]
      %v222 = vld [vmem:[%s200 + $0x54] sm:$0xf]
      %v223 = vld [vmem:[%s200 + $0x58] sm:$0xf]
      %v224 = vld [vmem:[%s200 + $0x5c] sm:$0x1]
      %v225 = vld [vmem:[%s200 + $0x60] sm:$0xf]
      %v226 = vld [vmem:[%s200 + $0x64] sm:$0xf]
      %v227 = vld [vmem:[%s200 + $0x68] sm:$0x1]
      %v228 = vld [vmem:[%s200 + $0x6c] sm:$0xf]
      %v229 = vld [vmem:[%s200 + $0x70] sm:$0xf]
      %v230 = vld [vmem:[%s200 + $0x74] sm:$0x1]
      %v231 = vunpack.c.l.bf16 %v201
      %v232 = vunpack.c.l.bf16 %v202
      %v233 = vunpack.c.l.bf16 %v203
      %v234 = vunpack.c.l.bf16 %v204
      %v235 = vunpack.c.l.bf16 %v205
      %v236 = vunpack.c.l.bf16 %v206
      %v237 = vunpack.c.l.bf16 %v207
      %v238 = vunpack.c.l.bf16 %v208
      %v239 = vunpack.c.l.bf16 %v209
      %v240 = vunpack.c.l.bf16 %v210
      %v241 = vunpack.c.l.bf16 %v211
      %v242 = vunpack.c.l.bf16 %v212
      %v243 = vunpack.c.l.bf16 %v213
      %v244 = vunpack.c.l.bf16 %v214
      %v245 = vunpack.c.l.bf16 %v215
      %v246 = vunpack.c.l.bf16 %v216
      %v247 = vunpack.c.l.bf16 %v217
      %v248 = vunpack.c.l.bf16 %v218
      %v249 = vunpack.c.l.bf16 %v219
      %v250 = vunpack.c.l.bf16 %v220
      %v251 = vunpack.c.l.bf16 %v221
      %v252 = vunpack.c.l.bf16 %v222
      %v253 = vunpack.c.l.bf16 %v223
      %v254 = vunpack.c.l.bf16 %v224
      %v255 = vunpack.c.l.bf16 %v225
      %v256 = vunpack.c.l.bf16 %v226
      %v257 = vunpack.c.l.bf16 %v227
      %v258 = vunpack.c.l.bf16 %v228
      %v259 = vunpack.c.l.bf16 %v229
      %v260 = vunpack.c.l.bf16 %v230
      %vm285 = vcmask 1046528
      %v286 = vrot.slane %v231, 1
      %v287 = vrot.slane %v232, 1
      %v288 = vsel %vm285, %v286, %v287
      %v289 = vrot.slane %v233, 1
      %v290 = vsel %vm285, %v287, %v289
      %v291 = vrot.slane %v234, 1
      %v292 = vrot.slane %v235, 1
      %v293 = vsel %vm285, %v291, %v292
      %v294 = vrot.slane %v236, 1
      %v295 = vsel %vm285, %v292, %v294
      %v296 = vrot.slane %v237, 1
      %v297 = vrot.slane %v238, 1
      %v298 = vsel %vm285, %v296, %v297
      %v299 = vrot.slane %v239, 1
      %v300 = vsel %vm285, %v297, %v299
      %v301 = vrot.slane %v240, 1
      %v302 = vrot.slane %v241, 1
      %v303 = vsel %vm285, %v301, %v302
      %v304 = vrot.slane %v242, 1
      %v305 = vsel %vm285, %v302, %v304
      %v306 = vrot.slane %v243, 1
      %v307 = vrot.slane %v244, 1
      %v308 = vsel %vm285, %v306, %v307
      %v309 = vrot.slane %v245, 1
      %v310 = vsel %vm285, %v307, %v309
      %v311 = vrot.slane %v246, 1
      %v312 = vrot.slane %v247, 1
      %v313 = vsel %vm285, %v311, %v312
      %v314 = vrot.slane %v248, 1
      %v315 = vsel %vm285, %v312, %v314
      %v316 = vrot.slane %v249, 1
      %v317 = vrot.slane %v250, 1
      %v318 = vsel %vm285, %v316, %v317
      %v319 = vrot.slane %v251, 1
      %v320 = vsel %vm285, %v317, %v319
      %v321 = vrot.slane %v252, 1
      %v322 = vrot.slane %v253, 1
      %v323 = vsel %vm285, %v321, %v322
      %v324 = vrot.slane %v254, 1
      %v325 = vsel %vm285, %v322, %v324
      %vm326 = vcmask 1045504
      %v327 = vrot.slane %v231, 2
      %v328 = vrot.slane %v232, 2
      %v329 = vsel %vm326, %v327, %v328
      %v330 = vrot.slane %v233, 2
      %v331 = vsel %vm326, %v328, %v330
      %v332 = vrot.slane %v234, 2
      %v333 = vrot.slane %v235, 2
      %v334 = vsel %vm326, %v332, %v333
      %v335 = vrot.slane %v236, 2
      %v336 = vsel %vm326, %v333, %v335
      %v337 = vrot.slane %v237, 2
      %v338 = vrot.slane %v238, 2
      %v339 = vsel %vm326, %v337, %v338
      %v340 = vrot.slane %v239, 2
      %v341 = vsel %vm326, %v338, %v340
      %v342 = vrot.slane %v240, 2
      %v343 = vrot.slane %v241, 2
      %v344 = vsel %vm326, %v342, %v343
      %v345 = vrot.slane %v242, 2
      %v346 = vsel %vm326, %v343, %v345
      %v347 = vrot.slane %v243, 2
      %v348 = vrot.slane %v244, 2
      %v349 = vsel %vm326, %v347, %v348
      %v350 = vrot.slane %v245, 2
      %v351 = vsel %vm326, %v348, %v350
      %v352 = vrot.slane %v246, 2
      %v353 = vrot.slane %v247, 2
      %v354 = vsel %vm326, %v352, %v353
      %v355 = vrot.slane %v248, 2
      %v356 = vsel %vm326, %v353, %v355
      %v357 = vrot.slane %v249, 2
      %v358 = vrot.slane %v250, 2
      %v359 = vsel %vm326, %v357, %v358
      %v360 = vrot.slane %v251, 2
      %v361 = vsel %vm326, %v358, %v360
      %v362 = vrot.slane %v252, 2
      %v363 = vrot.slane %v253, 2
      %v364 = vsel %vm326, %v362, %v363
      %v365 = vrot.slane %v254, 2
      %v366 = vsel %vm326, %v363, %v365
      %v370 = vrot.slane %v255, 1
      %v371 = vrot.slane %v256, 1
      %v372 = vsel %vm285, %v370, %v371
      %v373 = vrot.slane %v257, 1
      %v374 = vsel %vm285, %v371, %v373
      %v375 = vrot.slane %v255, 2
      %v376 = vrot.slane %v256, 2
      %v377 = vsel %vm326, %v375, %v376
      %v378 = vrot.slane %v257, 2
      %v379 = vsel %vm326, %v376, %v378
      %v383 = vrot.slane %v258, 1
      %v384 = vrot.slane %v259, 1
      %v385 = vsel %vm285, %v383, %v384
      %v386 = vrot.slane %v260, 1
      %v387 = vsel %vm285, %v384, %v386
      %v388 = vrot.slane %v258, 2
      %v389 = vrot.slane %v259, 2
      %v390 = vsel %vm326, %v388, %v389
      %v391 = vrot.slane %v260, 2
      %v392 = vsel %vm326, %v389, %v391
      %393 = vrot.lane.b32.xlu0 %v288, 8
      %v394 = vpop.permute.xlu0 %393
      %395 = vrot.lane.b32.xlu0 %v290, 8
      %v396 = vpop.permute.xlu0 %395
      %397 = vrot.lane.b32.xlu0 %v293, 8
      %v398 = vpop.permute.xlu0 %397
      %399 = vrot.lane.b32.xlu0 %v295, 8
      %v400 = vpop.permute.xlu0 %399
      %401 = vrot.lane.b32.xlu0 %v298, 8
      %v402 = vpop.permute.xlu0 %401
      %403 = vrot.lane.b32.xlu0 %v300, 8
      %v404 = vpop.permute.xlu0 %403
      %405 = vrot.lane.b32.xlu0 %v303, 8
      %v406 = vpop.permute.xlu0 %405
      %407 = vrot.lane.b32.xlu0 %v305, 8
      %v408 = vpop.permute.xlu0 %407
      %409 = vrot.lane.b32.xlu0 %v308, 8
      %v410 = vpop.permute.xlu0 %409
      %411 = vrot.lane.b32.xlu0 %v310, 8
      %v412 = vpop.permute.xlu0 %411
      %413 = vrot.lane.b32.xlu0 %v313, 8
      %v414 = vpop.permute.xlu0 %413
      %415 = vrot.lane.b32.xlu0 %v315, 8
      %v416 = vpop.permute.xlu0 %415
      %417 = vrot.lane.b32.xlu0 %v318, 8
      %v418 = vpop.permute.xlu0 %417
      %419 = vrot.lane.b32.xlu0 %v320, 8
      %v420 = vpop.permute.xlu0 %419
      %421 = vrot.lane.b32.xlu0 %v323, 8
      %v422 = vpop.permute.xlu0 %421
      %423 = vrot.lane.b32.xlu0 %v325, 8
      %v424 = vpop.permute.xlu0 %423
      %441 = vrot.lane.b32.xlu0 %v329, 16
      %v442 = vpop.permute.xlu0 %441
      %443 = vrot.lane.b32.xlu0 %v331, 16
      %v444 = vpop.permute.xlu0 %443
      %445 = vrot.lane.b32.xlu0 %v334, 16
      %v446 = vpop.permute.xlu0 %445
      %447 = vrot.lane.b32.xlu0 %v336, 16
      %v448 = vpop.permute.xlu0 %447
      %449 = vrot.lane.b32.xlu0 %v339, 16
      %v450 = vpop.permute.xlu0 %449
      %451 = vrot.lane.b32.xlu0 %v341, 16
      %v452 = vpop.permute.xlu0 %451
      %453 = vrot.lane.b32.xlu0 %v344, 16
      %v454 = vpop.permute.xlu0 %453
      %455 = vrot.lane.b32.xlu0 %v346, 16
      %v456 = vpop.permute.xlu0 %455
      %457 = vrot.lane.b32.xlu0 %v349, 16
      %v458 = vpop.permute.xlu0 %457
      %459 = vrot.lane.b32.xlu0 %v351, 16
      %v460 = vpop.permute.xlu0 %459
      %461 = vrot.lane.b32.xlu0 %v354, 16
      %v462 = vpop.permute.xlu0 %461
      %463 = vrot.lane.b32.xlu0 %v356, 16
      %v464 = vpop.permute.xlu0 %463
      %465 = vrot.lane.b32.xlu0 %v359, 16
      %v466 = vpop.permute.xlu0 %465
      %467 = vrot.lane.b32.xlu0 %v361, 16
      %v468 = vpop.permute.xlu0 %467
      %469 = vrot.lane.b32.xlu0 %v364, 16
      %v470 = vpop.permute.xlu0 %469
      %471 = vrot.lane.b32.xlu0 %v366, 16
      %v472 = vpop.permute.xlu0 %471
      %489 = vrot.lane.b32.xlu0 %v234, 24
      %v490 = vpop.permute.xlu0 %489
      %491 = vrot.lane.b32.xlu0 %v235, 24
      %v492 = vpop.permute.xlu0 %491
      %493 = vrot.lane.b32.xlu0 %v237, 24
      %v494 = vpop.permute.xlu0 %493
      %495 = vrot.lane.b32.xlu0 %v238, 24
      %v496 = vpop.permute.xlu0 %495
      %497 = vrot.lane.b32.xlu0 %v240, 24
      %v498 = vpop.permute.xlu0 %497
      %499 = vrot.lane.b32.xlu0 %v241, 24
      %v500 = vpop.permute.xlu0 %499
      %501 = vrot.lane.b32.xlu0 %v243, 24
      %v502 = vpop.permute.xlu0 %501
      %503 = vrot.lane.b32.xlu0 %v244, 24
      %v504 = vpop.permute.xlu0 %503
      %505 = vrot.lane.b32.xlu0 %v246, 24
      %v506 = vpop.permute.xlu0 %505
      %507 = vrot.lane.b32.xlu0 %v247, 24
      %v508 = vpop.permute.xlu0 %507
      %509 = vrot.lane.b32.xlu0 %v249, 24
      %v510 = vpop.permute.xlu0 %509
      %511 = vrot.lane.b32.xlu0 %v250, 24
      %v512 = vpop.permute.xlu0 %511
      %513 = vrot.lane.b32.xlu0 %v252, 24
      %v514 = vpop.permute.xlu0 %513
      %515 = vrot.lane.b32.xlu0 %v253, 24
      %v516 = vpop.permute.xlu0 %515
      %517 = vrot.lane.b32.xlu0 %v255, 24
      %v518 = vpop.permute.xlu0 %517
      %519 = vrot.lane.b32.xlu0 %v256, 24
      %v520 = vpop.permute.xlu0 %519
      %537 = vrot.lane.b32.xlu0 %v293, 32
      %v538 = vpop.permute.xlu0 %537
      %539 = vrot.lane.b32.xlu0 %v295, 32
      %v540 = vpop.permute.xlu0 %539
      %541 = vrot.lane.b32.xlu0 %v298, 32
      %v542 = vpop.permute.xlu0 %541
      %543 = vrot.lane.b32.xlu0 %v300, 32
      %v544 = vpop.permute.xlu0 %543
      %545 = vrot.lane.b32.xlu0 %v303, 32
      %v546 = vpop.permute.xlu0 %545
      %547 = vrot.lane.b32.xlu0 %v305, 32
      %v548 = vpop.permute.xlu0 %547
      %549 = vrot.lane.b32.xlu0 %v308, 32
      %v550 = vpop.permute.xlu0 %549
      %551 = vrot.lane.b32.xlu0 %v310, 32
      %v552 = vpop.permute.xlu0 %551
      %553 = vrot.lane.b32.xlu0 %v313, 32
      %v554 = vpop.permute.xlu0 %553
      %555 = vrot.lane.b32.xlu0 %v315, 32
      %v556 = vpop.permute.xlu0 %555
      %557 = vrot.lane.b32.xlu0 %v318, 32
      %v558 = vpop.permute.xlu0 %557
      %559 = vrot.lane.b32.xlu0 %v320, 32
      %v560 = vpop.permute.xlu0 %559
      %561 = vrot.lane.b32.xlu0 %v323, 32
      %v562 = vpop.permute.xlu0 %561
      %563 = vrot.lane.b32.xlu0 %v325, 32
      %v564 = vpop.permute.xlu0 %563
      %565 = vrot.lane.b32.xlu0 %v372, 32
      %v566 = vpop.permute.xlu0 %565
      %567 = vrot.lane.b32.xlu0 %v374, 32
      %v568 = vpop.permute.xlu0 %567
      %585 = vrot.lane.b32.xlu0 %v334, 40
      %v586 = vpop.permute.xlu0 %585
      %587 = vrot.lane.b32.xlu0 %v336, 40
      %v588 = vpop.permute.xlu0 %587
      %589 = vrot.lane.b32.xlu0 %v339, 40
      %v590 = vpop.permute.xlu0 %589
      %591 = vrot.lane.b32.xlu0 %v341, 40
      %v592 = vpop.permute.xlu0 %591
      %593 = vrot.lane.b32.xlu0 %v344, 40
      %v594 = vpop.permute.xlu0 %593
      %595 = vrot.lane.b32.xlu0 %v346, 40
      %v596 = vpop.permute.xlu0 %595
      %597 = vrot.lane.b32.xlu0 %v349, 40
      %v598 = vpop.permute.xlu0 %597
      %599 = vrot.lane.b32.xlu0 %v351, 40
      %v600 = vpop.permute.xlu0 %599
      %601 = vrot.lane.b32.xlu0 %v354, 40
      %v602 = vpop.permute.xlu0 %601
      %603 = vrot.lane.b32.xlu0 %v356, 40
      %v604 = vpop.permute.xlu0 %603
      %605 = vrot.lane.b32.xlu0 %v359, 40
      %v606 = vpop.permute.xlu0 %605
      %607 = vrot.lane.b32.xlu0 %v361, 40
      %v608 = vpop.permute.xlu0 %607
      %609 = vrot.lane.b32.xlu0 %v364, 40
      %v610 = vpop.permute.xlu0 %609
      %611 = vrot.lane.b32.xlu0 %v366, 40
      %v612 = vpop.permute.xlu0 %611
      %613 = vrot.lane.b32.xlu0 %v377, 40
      %v614 = vpop.permute.xlu0 %613
      %615 = vrot.lane.b32.xlu0 %v379, 40
      %v616 = vpop.permute.xlu0 %615
      %633 = vrot.lane.b32.xlu0 %v237, 48
      %v634 = vpop.permute.xlu0 %633
      %635 = vrot.lane.b32.xlu0 %v238, 48
      %v636 = vpop.permute.xlu0 %635
      %637 = vrot.lane.b32.xlu0 %v240, 48
      %v638 = vpop.permute.xlu0 %637
      %639 = vrot.lane.b32.xlu0 %v241, 48
      %v640 = vpop.permute.xlu0 %639
      %641 = vrot.lane.b32.xlu0 %v243, 48
      %v642 = vpop.permute.xlu0 %641
      %643 = vrot.lane.b32.xlu0 %v244, 48
      %v644 = vpop.permute.xlu0 %643
      %645 = vrot.lane.b32.xlu0 %v246, 48
      %v646 = vpop.permute.xlu0 %645
      %647 = vrot.lane.b32.xlu0 %v247, 48
      %v648 = vpop.permute.xlu0 %647
      %649 = vrot.lane.b32.xlu0 %v249, 48
      %v650 = vpop.permute.xlu0 %649
      %651 = vrot.lane.b32.xlu0 %v250, 48
      %v652 = vpop.permute.xlu0 %651
      %653 = vrot.lane.b32.xlu0 %v252, 48
      %v654 = vpop.permute.xlu0 %653
      %655 = vrot.lane.b32.xlu0 %v253, 48
      %v656 = vpop.permute.xlu0 %655
      %657 = vrot.lane.b32.xlu0 %v255, 48
      %v658 = vpop.permute.xlu0 %657
      %659 = vrot.lane.b32.xlu0 %v256, 48
      %v660 = vpop.permute.xlu0 %659
      %661 = vrot.lane.b32.xlu0 %v258, 48
      %v662 = vpop.permute.xlu0 %661
      %663 = vrot.lane.b32.xlu0 %v259, 48
      %v664 = vpop.permute.xlu0 %663
      %681 = vrot.lane.b32.xlu0 %v298, 56
      %v682 = vpop.permute.xlu0 %681
      %683 = vrot.lane.b32.xlu0 %v300, 56
      %v684 = vpop.permute.xlu0 %683
      %685 = vrot.lane.b32.xlu0 %v303, 56
      %v686 = vpop.permute.xlu0 %685
      %687 = vrot.lane.b32.xlu0 %v305, 56
      %v688 = vpop.permute.xlu0 %687
      %689 = vrot.lane.b32.xlu0 %v308, 56
      %v690 = vpop.permute.xlu0 %689
      %691 = vrot.lane.b32.xlu0 %v310, 56
      %v692 = vpop.permute.xlu0 %691
      %693 = vrot.lane.b32.xlu0 %v313, 56
      %v694 = vpop.permute.xlu0 %693
      %695 = vrot.lane.b32.xlu0 %v315, 56
      %v696 = vpop.permute.xlu0 %695
      %697 = vrot.lane.b32.xlu0 %v318, 56
      %v698 = vpop.permute.xlu0 %697
      %699 = vrot.lane.b32.xlu0 %v320, 56
      %v700 = vpop.permute.xlu0 %699
      %701 = vrot.lane.b32.xlu0 %v323, 56
      %v702 = vpop.permute.xlu0 %701
      %703 = vrot.lane.b32.xlu0 %v325, 56
      %v704 = vpop.permute.xlu0 %703
      %705 = vrot.lane.b32.xlu0 %v372, 56
      %v706 = vpop.permute.xlu0 %705
      %707 = vrot.lane.b32.xlu0 %v374, 56
      %v708 = vpop.permute.xlu0 %707
      %709 = vrot.lane.b32.xlu0 %v385, 56
      %v710 = vpop.permute.xlu0 %709
      %711 = vrot.lane.b32.xlu0 %v387, 56
      %v712 = vpop.permute.xlu0 %711
      %729 = vrot.lane.b32.xlu0 %v339, 64
      %v730 = vpop.permute.xlu0 %729
      %731 = vrot.lane.b32.xlu0 %v341, 64
      %v732 = vpop.permute.xlu0 %731
      %733 = vrot.lane.b32.xlu0 %v344, 64
      %v734 = vpop.permute.xlu0 %733
      %735 = vrot.lane.b32.xlu0 %v346, 64
      %v736 = vpop.permute.xlu0 %735
      %737 = vrot.lane.b32.xlu0 %v349, 64
      %v738 = vpop.permute.xlu0 %737
      %739 = vrot.lane.b32.xlu0 %v351, 64
      %v740 = vpop.permute.xlu0 %739
      %741 = vrot.lane.b32.xlu0 %v354, 64
      %v742 = vpop.permute.xlu0 %741
      %743 = vrot.lane.b32.xlu0 %v356, 64
      %v744 = vpop.permute.xlu0 %743
      %745 = vrot.lane.b32.xlu0 %v359, 64
      %v746 = vpop.permute.xlu0 %745
      %747 = vrot.lane.b32.xlu0 %v361, 64
      %v748 = vpop.permute.xlu0 %747
      %749 = vrot.lane.b32.xlu0 %v364, 64
      %v750 = vpop.permute.xlu0 %749
      %751 = vrot.lane.b32.xlu0 %v366, 64
      %v752 = vpop.permute.xlu0 %751
      %753 = vrot.lane.b32.xlu0 %v377, 64
      %v754 = vpop.permute.xlu0 %753
      %755 = vrot.lane.b32.xlu0 %v379, 64
      %v756 = vpop.permute.xlu0 %755
      %757 = vrot.lane.b32.xlu0 %v390, 64
      %v758 = vpop.permute.xlu0 %757
      %759 = vrot.lane.b32.xlu0 %v392, 64
      %v760 = vpop.permute.xlu0 %759
      %vm777 = vcmask 64512
      %v778 = vsel %vm777, %v231, %v394
      %v779 = vsel %vm777, %v232, %v396
      %v780 = vsel %vm777, %v234, %v398
      %v781 = vsel %vm777, %v235, %v400
      %v782 = vsel %vm777, %v237, %v402
      %v783 = vsel %vm777, %v238, %v404
      %v784 = vsel %vm777, %v240, %v406
      %v785 = vsel %vm777, %v241, %v408
      %v786 = vsel %vm777, %v243, %v410
      %v787 = vsel %vm777, %v244, %v412
      %v788 = vsel %vm777, %v246, %v414
      %v789 = vsel %vm777, %v247, %v416
      %v790 = vsel %vm777, %v249, %v418
      %v791 = vsel %vm777, %v250, %v420
      %v792 = vsel %vm777, %v252, %v422
      %v793 = vsel %vm777, %v253, %v424
      %vm794 = vcmask 130048
      %v795 = vsel %vm794, %v778, %v442
      %v796 = vsel %vm794, %v779, %v444
      %v797 = vsel %vm794, %v780, %v446
      %v798 = vsel %vm794, %v781, %v448
      %v799 = vsel %vm794, %v782, %v450
      %v800 = vsel %vm794, %v783, %v452
      %v801 = vsel %vm794, %v784, %v454
      %v802 = vsel %vm794, %v785, %v456
      %v803 = vsel %vm794, %v786, %v458
      %v804 = vsel %vm794, %v787, %v460
      %v805 = vsel %vm794, %v788, %v462
      %v806 = vsel %vm794, %v789, %v464
      %v807 = vsel %vm794, %v790, %v466
      %v808 = vsel %vm794, %v791, %v468
      %v809 = vsel %vm794, %v792, %v470
      %v810 = vsel %vm794, %v793, %v472
      %vm811 = vcmask 195584
      %v812 = vsel %vm811, %v795, %v490
      %v813 = vsel %vm811, %v796, %v492
      %v814 = vsel %vm811, %v797, %v494
      %v815 = vsel %vm811, %v798, %v496
      %v816 = vsel %vm811, %v799, %v498
      %v817 = vsel %vm811, %v800, %v500
      %v818 = vsel %vm811, %v801, %v502
      %v819 = vsel %vm811, %v802, %v504
      %v820 = vsel %vm811, %v803, %v506
      %v821 = vsel %vm811, %v804, %v508
      %v822 = vsel %vm811, %v805, %v510
      %v823 = vsel %vm811, %v806, %v512
      %v824 = vsel %vm811, %v807, %v514
      %v825 = vsel %vm811, %v808, %v516
      %v826 = vsel %vm811, %v809, %v518
      %v827 = vsel %vm811, %v810, %v520
      %vm828 = vcmask 261120
      %v829 = vsel %vm828, %v812, %v538
      %v830 = vsel %vm828, %v813, %v540
      %v831 = vsel %vm828, %v814, %v542
      %v832 = vsel %vm828, %v815, %v544
      %v833 = vsel %vm828, %v816, %v546
      %v834 = vsel %vm828, %v817, %v548
      %v835 = vsel %vm828, %v818, %v550
      %v836 = vsel %vm828, %v819, %v552
      %v837 = vsel %vm828, %v820, %v554
      %v838 = vsel %vm828, %v821, %v556
      %v839 = vsel %vm828, %v822, %v558
      %v840 = vsel %vm828, %v823, %v560
      %v841 = vsel %vm828, %v824, %v562
      %v842 = vsel %vm828, %v825, %v564
      %v843 = vsel %vm828, %v826, %v566
      %v844 = vsel %vm828, %v827, %v568
      %vm845 = vcmask 326656
      %v846 = vsel %vm845, %v829, %v586
      %v847 = vsel %vm845, %v830, %v588
      %v848 = vsel %vm845, %v831, %v590
      %v849 = vsel %vm845, %v832, %v592
      %v850 = vsel %vm845, %v833, %v594
      %v851 = vsel %vm845, %v834, %v596
      %v852 = vsel %vm845, %v835, %v598
      %v853 = vsel %vm845, %v836, %v600
      %v854 = vsel %vm845, %v837, %v602
      %v855 = vsel %vm845, %v838, %v604
      %v856 = vsel %vm845, %v839, %v606
      %v857 = vsel %vm845, %v840, %v608
      %v858 = vsel %vm845, %v841, %v610
      %v859 = vsel %vm845, %v842, %v612
      %v860 = vsel %vm845, %v843, %v614
      %v861 = vsel %vm845, %v844, %v616
      %vm862 = vcmask 392192
      %v863 = vsel %vm862, %v846, %v634
      %v864 = vsel %vm862, %v847, %v636
      %v865 = vsel %vm862, %v848, %v638
      %v866 = vsel %vm862, %v849, %v640
      %v867 = vsel %vm862, %v850, %v642
      %v868 = vsel %vm862, %v851, %v644
      %v869 = vsel %vm862, %v852, %v646
      %v870 = vsel %vm862, %v853, %v648
      %v871 = vsel %vm862, %v854, %v650
      %v872 = vsel %vm862, %v855, %v652
      %v873 = vsel %vm862, %v856, %v654
      %v874 = vsel %vm862, %v857, %v656
      %v875 = vsel %vm862, %v858, %v658
      %v876 = vsel %vm862, %v859, %v660
      %v877 = vsel %vm862, %v860, %v662
      %v878 = vsel %vm862, %v861, %v664
      %vm879 = vcmask 457728
      %v880 = vsel %vm879, %v863, %v682
      %v881 = vsel %vm879, %v864, %v684
      %v882 = vsel %vm879, %v865, %v686
      %v883 = vsel %vm879, %v866, %v688
      %v884 = vsel %vm879, %v867, %v690
      %v885 = vsel %vm879, %v868, %v692
      %v886 = vsel %vm879, %v869, %v694
      %v887 = vsel %vm879, %v870, %v696
      %v888 = vsel %vm879, %v871, %v698
      %v889 = vsel %vm879, %v872, %v700
      %v890 = vsel %vm879, %v873, %v702
      %v891 = vsel %vm879, %v874, %v704
      %v892 = vsel %vm879, %v875, %v706
      %v893 = vsel %vm879, %v876, %v708
      %v894 = vsel %vm879, %v877, %v710
      %v895 = vsel %vm879, %v878, %v712
      %vm896 = vcmask 523264
      %v897 = vsel %vm896, %v880, %v730
      %v898 = vsel %vm896, %v881, %v732
      %v899 = vsel %vm896, %v882, %v734
      %v900 = vsel %vm896, %v883, %v736
      %v901 = vsel %vm896, %v884, %v738
      %v902 = vsel %vm896, %v885, %v740
      %v903 = vsel %vm896, %v886, %v742
      %v904 = vsel %vm896, %v887, %v744
      %v905 = vsel %vm896, %v888, %v746
      %v906 = vsel %vm896, %v889, %v748
      %v907 = vsel %vm896, %v890, %v750
      %v908 = vsel %vm896, %v891, %v752
      %v909 = vsel %vm896, %v892, %v754
      %v910 = vsel %vm896, %v893, %v756
      %v911 = vsel %vm896, %v894, %v758
      %v912 = vsel %vm896, %v895, %v760
      %v913 = vpack.c.bf16 %v898, %v897
      %v914 = vpack.c.bf16 %v900, %v899
      %v915 = vpack.c.bf16 %v902, %v901
      %v916 = vpack.c.bf16 %v904, %v903
      %v917 = vpack.c.bf16 %v906, %v905
      %v918 = vpack.c.bf16 %v908, %v907
      %v919 = vpack.c.bf16 %v910, %v909
      %v920 = vpack.c.bf16 %v912, %v911
      %v921 = vld [vmem:[%s1] sm:$0xf]
      %v922 = vld [vmem:[%s1 + $0x4] sm:$0xf]
      %v923 = vld [vmem:[%s1 + $0x8] sm:$0xf]
      %v924 = vld [vmem:[%s1 + $0xc] sm:$0xf]
      %v925 = vld [vmem:[%s1 + $0x10] sm:$0xf]
      %v926 = vld [vmem:[%s1 + $0x14] sm:$0xf]
      %v927 = vld [vmem:[%s1 + $0x18] sm:$0xf]
      %v928 = vld [vmem:[%s1 + $0x1c] sm:$0xf]
      %v929 = vld [vmem:[%s1 + $0x20] sm:$0xf]
      %v930 = vld [vmem:[%s2] sm:$0x1]
      %v932 = vperm.slane %v930, 0
      %v943 = vunpack.c.l.b16 %v921
      %v944 = vunpack.c.l.b16 %v922
      %v945 = vunpack.c.l.b16 %v923
      %v946 = vunpack.c.l.b16 %v924
      %v947 = vunpack.c.l.b16 %v925
      %v948 = vunpack.c.l.b16 %v926
      %v949 = vunpack.c.l.b16 %v927
      %v950 = vunpack.c.l.b16 %v928
      %v951 = vunpack.c.l.b16 %v929
      %v952 = vpack.c.b16 %v944, %v943
      %v953 = vpack.c.b16 %v946, %v945
      %v954 = vpack.c.b16 %v948, %v947
      %v955 = vpack.c.b16 %v950, %v949
      %v956 = vpack.c.b16 %v951, %v951
      %vm961 = vcmask 588800
      %v963 = vsel %vm961, %v913, 0
      %v966 = vsel %vm961, %v914, 0
      %v969 = vsel %vm961, %v915, 0
      %v972 = vsel %vm961, %v916, 0
      %v975 = vsel %vm961, %v917, 0
      %v978 = vsel %vm961, %v918, 0
      %v981 = vsel %vm961, %v919, 0
      %v984 = vsel %vm961, %v920, 0
      %vm986 = vcmask 1043456
      %v988 = vsel %vm986, %v956, 0
      %990 = vmatpush.bf16.msra.mxu0 0
      %991 = vmatpush.bf16.msra.mxu0 0
      %992 = vmatpush.bf16.msra.mxu0 0
      %993 = vmatpush.bf16.msra.mxu0 %v988
      %994 = vmatpush.bf16.msra.mxu0 %v955
      %995 = vmatpush.bf16.msra.mxu0 %v954
      %996 = vmatpush.bf16.msra.mxu0 %v953
      %997 = vmatpush.bf16.msra.mxu0 %v952
      %998 = vmatmul.bf16.gmra.mxu0 %v963
      %v999 = vpop.f32.mrf.mxu0
      %v1000 = vadd.f32 %v932, %v999
      %v1001 = vpop.f32.mrf.mxu0
      %v1002 = vadd.f32 %v932, %v1001
      %1003 = vmatmul.bf16.gmra.mxu0 %v966
      %v1004 = vpop.f32.mrf.mxu0
      %v1005 = vadd.f32 %v932, %v1004
      %v1006 = vpop.f32.mrf.mxu0
      %v1007 = vadd.f32 %v932, %v1006
      %1008 = vmatmul.bf16.gmra.mxu0 %v969
      %v1009 = vpop.f32.mrf.mxu0
      %v1010 = vadd.f32 %v932, %v1009
      %v1011 = vpop.f32.mrf.mxu0
      %v1012 = vadd.f32 %v932, %v1011
      %1013 = vmatmul.bf16.gmra.mxu0 %v972
      %v1014 = vpop.f32.mrf.mxu0
      %v1015 = vadd.f32 %v932, %v1014
      %v1016 = vpop.f32.mrf.mxu0
      %v1017 = vadd.f32 %v932, %v1016
      %1018 = vmatmul.bf16.gmra.mxu0 %v975
      %v1019 = vpop.f32.mrf.mxu0
      %v1020 = vadd.f32 %v932, %v1019
      %v1021 = vpop.f32.mrf.mxu0
      %v1022 = vadd.f32 %v932, %v1021
      %1023 = vmatmul.bf16.gmra.mxu0 %v978
      %v1024 = vpop.f32.mrf.mxu0
      %v1025 = vadd.f32 %v932, %v1024
      %v1026 = vpop.f32.mrf.mxu0
      %v1027 = vadd.f32 %v932, %v1026
      %1028 = vmatmul.bf16.gmra.mxu0 %v981
      %v1029 = vpop.f32.mrf.mxu0
      %v1030 = vadd.f32 %v932, %v1029
      %v1031 = vpop.f32.mrf.mxu0
      %v1032 = vadd.f32 %v932, %v1031
      %1033 = vmatmul.bf16.gmra.mxu0 %v984
      %v1034 = vpop.f32.mrf.mxu0
      %v1035 = vadd.f32 %v932, %v1034
      %v1036 = vpop.f32.mrf.mxu0
      %v1037 = vadd.f32 %v932, %v1036
      %1038 = vdwg.mxu0
      %v1039 = vmax.f32 %v1000, 0.0
      %v1040 = vmax.f32 %v1002, 0.0
      %v1041 = vmax.f32 %v1005, 0.0
      %v1042 = vmax.f32 %v1007, 0.0
      %v1043 = vmax.f32 %v1010, 0.0
      %v1044 = vmax.f32 %v1012, 0.0
      %v1045 = vmax.f32 %v1015, 0.0
      %v1046 = vmax.f32 %v1017, 0.0
      %v1047 = vmax.f32 %v1020, 0.0
      %v1048 = vmax.f32 %v1022, 0.0
      %v1049 = vmax.f32 %v1025, 0.0
      %v1050 = vmax.f32 %v1027, 0.0
      %v1051 = vmax.f32 %v1030, 0.0
      %v1052 = vmax.f32 %v1032, 0.0
      %v1053 = vmax.f32 %v1035, 0.0
      %v1054 = vmax.f32 %v1037, 0.0
      %1055 = vst.msk [vmem:[%s194] sm:$0xff] %vm777, %v1039
      %1056 = vst.msk [vmem:[%s194 + $0x8] sm:$0xff] %vm777, %v1040
      %1057 = vst.msk [vmem:[%s194 + $0x10] sm:$0xff] %vm777, %v1041
      %1058 = vst.msk [vmem:[%s194 + $0x18] sm:$0xff] %vm777, %v1042
      %1059 = vst.msk [vmem:[%s194 + $0x20] sm:$0xff] %vm777, %v1043
      %1060 = vst.msk [vmem:[%s194 + $0x28] sm:$0xff] %vm777, %v1044
      %1061 = vst.msk [vmem:[%s194 + $0x30] sm:$0xff] %vm777, %v1045
      %1062 = vst.msk [vmem:[%s194 + $0x38] sm:$0xff] %vm777, %v1046
      %1063 = vst.msk [vmem:[%s194 + $0x40] sm:$0xff] %vm777, %v1047
      %1064 = vst.msk [vmem:[%s194 + $0x48] sm:$0xff] %vm777, %v1048
      %1065 = vst.msk [vmem:[%s194 + $0x50] sm:$0xff] %vm777, %v1049
      %1066 = vst.msk [vmem:[%s194 + $0x58] sm:$0xff] %vm777, %v1050
      %1067 = vst.msk [vmem:[%s194 + $0x60] sm:$0xff] %vm777, %v1051
      %1068 = vst.msk [vmem:[%s194 + $0x68] sm:$0xff] %vm777, %v1052
      %1069 = vst.msk [vmem:[%s194 + $0x70] sm:$0xff] %vm777, %v1053
      %1070 = vst.msk [vmem:[%s194 + $0x78] sm:$0xff] %vm777, %v1054
      %s1071 = smul.u32 8, %s19
      %p1072 = scmp.lt.s32.totalorder %s18, 1
      %s1073 = scalar_select %p1072, %s18, 1
      %p1074 = scmp.lt.s32.totalorder %s1071, 15
      %s1075 = scalar_select %p1074, %s1071, 15
      %s1076 = smul.addr %s1075, 2
      %s1077 = smul.addr %s1073, 32
      %s1078 = sadd.s32 %s1076, %s1077
      %s1079 = smul.addr %s1078, 8
      %s1080 = scalar_lea.vmem %s3, %s1079
      // Predicated region
      $region33: #{inception_2_forward.8} parent=31 // pred_check
        %p1081 = pneg %p114
      $region34: #{inception_2_forward.8} parent=31 // pred_check_branch
        %1083 = sbr.rel (%p1081) target = $region36
      $region35: #{inception_2_forward.8} parent=31 // pred_region
        %s1084 = smul.u32 8, %s19
      $region36: #{inception_2_forward.8} parent=31 // pred_fallthru
        _
    $region32: #{inception_2_forward.8} parent=5 // pred_fallthru
      _
    %p1085 = scmp.le.s32.totalorder 2, %s9
    // Predicated region
    $region37: #{inception_2_forward.8} parent=5 // pred_check
      %p1086 = pneg %p1085
    $region38: #{inception_2_forward.8} parent=5 // pred_check_branch
      %1088 = sbr.rel (%p1086) target = $region40
    $region39: #{inception_2_forward.8} parent=5 // pred_region
      %s1089 = ssub.s32 %s9, 2
      // Predicated region
      $region41: #{inception_2_forward.8} parent=39 // pred_check
        %p1090 = pneg %p120
      $region42: #{inception_2_forward.8} parent=39 // pred_check_branch
        %1092 = sbr.rel (%p1090) target = $region44
      $region43: #{inception_2_forward.8} parent=39 // pred_region
        %s1093 = smul.u32 8, %s21
        %p1094 = scmp.lt.s32.totalorder %s20, 1
        %s1095 = scalar_select %p1094, %s20, 1
        %p1096 = scmp.lt.s32.totalorder %s1093, 15
        %s1097 = scalar_select %p1096, %s1093, 15
        %s1098 = smul.addr %s1097, 2
        %s1099 = smul.addr %s1095, 32
        %s1100 = sadd.s32 %s1098, %s1099
        %s1101 = smul.addr %s1100, 8
        %s1102 = scalar_lea.vmem %s3, %s1101
      $region44: #{inception_2_forward.8} parent=39 // pred_fallthru
        _
    $region40: #{inception_2_forward.8} parent=5 // pred_fallthru
      _
  $region6: #{inception_2_forward.8} parent=0 // loop_footer
    %s13 = sadd.s32 1, %s9
  $region7: #{inception_2_forward.8} parent=0 // loop_footer_branch
    %8 = sbr.rel target = $region3
  $region8: #{inception_2_forward.8} parent=0 // loop_exit
    _

</llo_original>
